<compile_context>
chip_gen: v7x
topology: tpu7x:2x2x1
jax: 0.10.0
libtpu: 0.0.40
codegen_flags: <defaults>
</compile_context>

<pallas_src>
import numpy as np
import jax
import jax.numpy as jnp
from jax import lax
from jax.experimental import pallas as pl
from jax.experimental.pallas import tpu as pltpu


# ---------------------------------------------------------------------------
# Fused kernel (one batch sample per grid step)
# ---------------------------------------------------------------------------

def _vision_kernel(x_ref, t1_ref, b1_ref, t2_ref, b2_ref, wf_ref, bf_ref,
                   s24_ref, s8_ref, o_ref):
    f32 = jnp.float32
    bf16 = jnp.bfloat16
    x = x_ref[0]                                            # (28, 28) f32

    # ---- conv1 (5x5, 1->20) + bias + ReLU + 2x2/2 max-pool -> y1 (12, 12*20) ----
    # A_dj[i, jp*20+c] = conv1_out[i, 2*jp+dj, c] via block-Toeplitz matmuls.
    pooled1 = None
    for dj in range(2):
        a = jnp.zeros((24, 240), f32)
        for kh in range(5):
            a = a + jnp.dot(x[kh:kh + 24, :].astype(bf16), t1_ref[dj, kh],
                            preferred_element_type=f32)
        # Height-direction pool: exact 0/1 row-selection matmuls (rows 2*ip+di).
        p = jnp.maximum(jnp.dot(s24_ref[0], a, preferred_element_type=f32),
                        jnp.dot(s24_ref[1], a, preferred_element_type=f32))
        pooled1 = p if pooled1 is None else jnp.maximum(pooled1, p)
    # Bias add + ReLU commute with the max over the pool window.
    y1 = jnp.maximum(pooled1 + b1_ref[...], 0.0)            # (12, 240) f32

    # ---- conv2 (5x5, 20->50) + bias + ReLU + pool -> y2 (4, 4*50) ----
    pooled2 = None
    for dj in range(2):
        b = jnp.zeros((8, 200), f32)
        for kh in range(5):
            b = b + jnp.dot(y1[kh:kh + 8, :].astype(bf16), t2_ref[dj, kh],
                            preferred_element_type=f32)
        p = jnp.maximum(jnp.dot(s8_ref[0], b, preferred_element_type=f32),
                        jnp.dot(s8_ref[1], b, preferred_element_type=f32))
        pooled2 = p if pooled2 is None else jnp.maximum(pooled2, p)
    y2 = jnp.maximum(pooled2 + b2_ref[...], 0.0)            # (4, 200) f32

    # ---- fc1 (800 -> 500) + ReLU ----
    # Contract over (h2, w2*50+c2) against the fc weight regrouped per pooled row
    # (exactly matches PyTorch's NCHW flatten order), so no in-kernel flatten.
    acc = jnp.zeros((1, 500), f32)
    for h in range(4):
        acc = acc + jnp.dot(y2[h:h + 1, :].astype(bf16), wf_ref[h],
                            preferred_element_type=f32)
    o_ref[0] = jnp.maximum(acc + bf_ref[...], 0.0)          # (1, 500)


def _resident(shape):
    """Full-array block with a constant index map: DMA'd once, stays in VMEM."""
    zeros = (0,) * len(shape)
    return pl.BlockSpec(shape, lambda i: zeros)


@jax.jit
def vision_forward(x_nchw, kparams):
    t1, b1t, t2, b2t, wf4, bft, s24, s8 = kparams
    n = x_nchw.shape[0]
    x = x_nchw.astype(jnp.float32).reshape(n, 28, 28)       # squeeze cin=1
    out = pl.pallas_call(
        _vision_kernel,
        out_shape=jax.ShapeDtypeStruct((n, 1, 500), jnp.float32),
        grid=(n,),
        in_specs=[
            pl.BlockSpec((1, 28, 28), lambda i: (i, 0, 0)),
            _resident(t1.shape), _resident(b1t.shape),
            _resident(t2.shape), _resident(b2t.shape),
            _resident(wf4.shape), _resident(bft.shape),
            _resident(s24.shape), _resident(s8.shape),
        ],
        out_specs=pl.BlockSpec((1, 1, 500), lambda i: (i, 0, 0)),
        compiler_params=pltpu.CompilerParams(
            dimension_semantics=("parallel",)),
    )(x, t1, b1t, t2, b2t, wf4, bft, s24, s8)
    return out.reshape(n, 500)


# ---------------------------------------------------------------------------
# Parameters (PyTorch layouts) + ONE-TIME conversion to kernel layouts
# ---------------------------------------------------------------------------

def init_torch_params(key):
    ks = jax.random.split(key, 6)

    def u(k, shape, fan_in):
        bound = 1.0 / (fan_in ** 0.5)
        return jax.random.uniform(k, shape, jnp.float32, -bound, bound)

    w1 = u(ks[0], (20, 1, 5, 5), 1 * 25)
    b1 = u(ks[1], (20,), 1 * 25)
    w2 = u(ks[2], (50, 20, 5, 5), 20 * 25)
    b2 = u(ks[3], (50,), 20 * 25)
    wf = u(ks[4], (500, 800), 800)
    bf = u(ks[5], (500,), 800)
    return w1, b1, w2, b2, wf, bf


def to_kernel_params(torch_params, matmul_dtype=jnp.bfloat16):
    """Init-time layout prep: block-Toeplitz conv weights (kw + width-pool offset
    absorbed), fc weight regrouped per pooled row, tiled biases, 0/1 pool-selection
    matrices."""
    w1, b1, w2, b2, wf, bf = (np.asarray(p, np.float32) for p in torch_params)

    # conv1: T1[dj, kh, w_in, jp*20 + c] = w1[c, 0, kh, w_in - (2*jp + dj)]
    t1 = np.zeros((2, 5, 28, 12, 20), np.float32)
    for dj in range(2):
        for kh in range(5):
            for jp in range(12):
                for kw in range(5):
                    t1[dj, kh, 2 * jp + dj + kw, jp, :] = w1[:, 0, kh, kw]
    t1 = t1.reshape(2, 5, 28, 240)

    # conv2: T2[dj, kh, j1*20 + c1, jp*50 + c2] = w2[c2, c1, kh, j1 - (2*jp + dj)]
    t2 = np.zeros((2, 5, 12, 20, 4, 50), np.float32)
    for dj in range(2):
        for kh in range(5):
            for jp in range(4):
                for kw in range(5):
                    t2[dj, kh, 2 * jp + dj + kw, :, jp, :] = w2[:, :, kh, kw].T
    t2 = t2.reshape(2, 5, 240, 200)

    # fc: WF[h2, w2*50 + c2, o] = wf[o, c2*16 + h2*4 + w2]  (PyTorch NCHW flatten)
    wf_r = wf.reshape(500, 50, 4, 4)                        # (o, c2, h2, w2)
    wf4 = np.zeros((4, 4, 50, 500), np.float32)
    for h2 in range(4):
        wf4[h2] = np.transpose(wf_r[:, :, h2, :], (2, 1, 0))  # (w2, c2, o)
    wf4 = wf4.reshape(4, 200, 500)

    # 0/1 row-selection matrices for the height-direction 2x2/2 pool (exact in f32).
    s24 = np.zeros((2, 12, 24), np.float32)
    s24[0, np.arange(12), 2 * np.arange(12)] = 1.0
    s24[1, np.arange(12), 2 * np.arange(12) + 1] = 1.0
    s8 = np.zeros((2, 4, 8), np.float32)
    s8[0, np.arange(4), 2 * np.arange(4)] = 1.0
    s8[1, np.arange(4), 2 * np.arange(4) + 1] = 1.0

    return (jnp.asarray(t1, matmul_dtype),
            jnp.asarray(np.tile(b1, 12)[None, :]),          # (1, 240) f32
            jnp.asarray(t2, matmul_dtype),
            jnp.asarray(np.tile(b2, 4)[None, :]),           # (1, 200) f32
            jnp.asarray(wf4, matmul_dtype),
            jnp.asarray(bf[None, :]),                       # (1, 500) f32
            jnp.asarray(s24), jnp.asarray(s8))


# ---------------------------------------------------------------------------
# Pure-JAX f32 reference mirroring the PyTorch module
# ---------------------------------------------------------------------------

def vision_reference(x_nchw, torch_params):
    w1, b1, w2, b2, wf, bf = torch_params
    dn = ('NCHW', 'OIHW', 'NCHW')
    hi = lax.Precision.HIGHEST

    y = lax.conv_general_dilated(x_nchw, w1, (1, 1), 'VALID',
                                 dimension_numbers=dn, precision=hi)
    y = jnp.maximum(y + b1[None, :, None, None], 0.0)
    n, c, h, w = y.shape
    y = y.reshape(n, c, h // 2, 2, w // 2, 2).max(axis=(3, 5))

    y = lax.conv_general_dilated(y, w2, (1, 1), 'VALID',
                                 dimension_numbers=dn, precision=hi)
    y = jnp.maximum(y + b2[None, :, None, None], 0.0)
    n, c, h, w = y.shape
    y = y.reshape(n, c, h // 2, 2, w // 2, 2).max(axis=(3, 5))

    y = y.reshape(n, -1)
    return jnp.maximum(jnp.dot(y, wf.T, precision=hi) + bf, 0.0)


if __name__ == "__main__":
    key = jax.random.PRNGKey(0)
    k_params, k_x = jax.random.split(key)

    batch = 2
    # Module implies 28x28 single-channel input (conv5->pool2->conv5->pool2 -> 4x4x50).
    x = jax.random.normal(k_x, (batch, 1, 28, 28), jnp.float32)

    torch_params = init_torch_params(k_params)
    kparams = to_kernel_params(torch_params)       # one-time layout prep

    out = jax.block_until_ready(vision_forward(x, kparams))
    ref = vision_reference(x, torch_params)

    assert out.shape == (batch, 500), out.shape
    max_err = float(jnp.max(jnp.abs(out - ref)))
    # bf16 matmul operands (f32 accumulate) -> loosened tolerance vs f32 reference.
    assert jnp.allclose(out, ref, atol=2e-2, rtol=2e-2), max_err

    print("KERNEL_OK")
</pallas_src>

<mosaic_0001>
module attributes {stable_mosaic.version = 11 : i64} {
  func.func @_vision_kernel(%arg0: i32, %arg1: memref<1x28x28xf32, #tpu.memory_space<vmem>>, %arg2: memref<2x5x28x240xbf16, #tpu.memory_space<vmem>>, %arg3: memref<1x240xf32, #tpu.memory_space<vmem>>, %arg4: memref<2x5x240x200xbf16, #tpu.memory_space<vmem>>, %arg5: memref<1x200xf32, #tpu.memory_space<vmem>>, %arg6: memref<4x200x500xbf16, #tpu.memory_space<vmem>>, %arg7: memref<1x500xf32, #tpu.memory_space<vmem>>, %arg8: memref<2x12x24xf32, #tpu.memory_space<vmem>>, %arg9: memref<2x4x8xf32, #tpu.memory_space<vmem>>, %arg10: memref<1x1x500xf32, #tpu.memory_space<vmem>>) attributes {dimension_semantics = [#tpu.dimension_semantics<parallel>], iteration_bounds = array<i64: 2>, scalar_prefetch = 0 : i64, scratch_operands = 0 : i64, tpu.core_type = #tpu.core_type<tc>, window_params = [{transform_indices = @transform_0, window_bounds = array<i64: 1, 28, 28>}, {pipeline_mode = #tpu.pipeline_mode<synchronous>, transform_indices = @transform_1, window_bounds = array<i64: 2, 5, 28, 240>}, {pipeline_mode = #tpu.pipeline_mode<synchronous>, transform_indices = @transform_2, window_bounds = array<i64: 1, 240>}, {pipeline_mode = #tpu.pipeline_mode<synchronous>, transform_indices = @transform_3, window_bounds = array<i64: 2, 5, 240, 200>}, {pipeline_mode = #tpu.pipeline_mode<synchronous>, transform_indices = @transform_4, window_bounds = array<i64: 1, 200>}, {pipeline_mode = #tpu.pipeline_mode<synchronous>, transform_indices = @transform_5, window_bounds = array<i64: 4, 200, 500>}, {pipeline_mode = #tpu.pipeline_mode<synchronous>, transform_indices = @transform_6, window_bounds = array<i64: 1, 500>}, {pipeline_mode = #tpu.pipeline_mode<synchronous>, transform_indices = @transform_7, window_bounds = array<i64: 2, 12, 24>}, {pipeline_mode = #tpu.pipeline_mode<synchronous>, transform_indices = @transform_8, window_bounds = array<i64: 2, 4, 8>}, {transform_indices = @transform_9, window_bounds = array<i64: 1, 1, 500>}]} {
    %c0 = arith.constant 0 : index
    %c0_0 = arith.constant 0 : index
    %c0_1 = arith.constant 0 : index
    %0 = vector.load %arg1[%c0, %c0_0, %c0_1] : memref<1x28x28xf32, #tpu.memory_space<vmem>>, vector<1x28x28xf32>
    %1 = vector.shape_cast %0 : vector<1x28x28xf32> to vector<28x28xf32>
    %cst = arith.constant 0.000000e+00 : f32
    %2 = vector.broadcast %cst : f32 to vector<24x240xf32>
    %3 = vector.extract_strided_slice %1 {offsets = [0, 0], sizes = [24, 28], strides = [1, 1]} : vector<28x28xf32> to vector<24x28xf32>
    %4 = arith.truncf %3 : vector<24x28xf32> to vector<24x28xbf16>
    %c0_2 = arith.constant 0 : index
    %c0_3 = arith.constant 0 : index
    %c0_4 = arith.constant 0 : index
    %c0_5 = arith.constant 0 : index
    %5 = vector.load %arg2[%c0_2, %c0_3, %c0_4, %c0_5] : memref<2x5x28x240xbf16, #tpu.memory_space<vmem>>, vector<1x1x28x240xbf16>
    %6 = vector.shape_cast %5 : vector<1x1x28x240xbf16> to vector<28x240xbf16>
    %cst_6 = arith.constant dense<0.000000e+00> : vector<24x240xf32>
    %7 = tpu.matmul %4, %6, %cst_6 {dimension_numbers = #tpu.dot_dimension_numbers<[1], [0], [0], [1], [0, 0, 1, 1], [], []>} : vector<24x28xbf16>, vector<28x240xbf16>, vector<24x240xf32> -> vector<24x240xf32>
    %8 = arith.addf %2, %7 : vector<24x240xf32>
    %9 = vector.extract_strided_slice %1 {offsets = [1, 0], sizes = [24, 28], strides = [1, 1]} : vector<28x28xf32> to vector<24x28xf32>
    %10 = arith.truncf %9 : vector<24x28xf32> to vector<24x28xbf16>
    %c0_7 = arith.constant 0 : index
    %c1 = arith.constant 1 : index
    %c0_8 = arith.constant 0 : index
    %c0_9 = arith.constant 0 : index
    %11 = vector.load %arg2[%c0_7, %c1, %c0_8, %c0_9] : memref<2x5x28x240xbf16, #tpu.memory_space<vmem>>, vector<1x1x28x240xbf16>
    %12 = vector.shape_cast %11 : vector<1x1x28x240xbf16> to vector<28x240xbf16>
    %cst_10 = arith.constant dense<0.000000e+00> : vector<24x240xf32>
    %13 = tpu.matmul %10, %12, %cst_10 {dimension_numbers = #tpu.dot_dimension_numbers<[1], [0], [0], [1], [0, 0, 1, 1], [], []>} : vector<24x28xbf16>, vector<28x240xbf16>, vector<24x240xf32> -> vector<24x240xf32>
    %14 = arith.addf %8, %13 : vector<24x240xf32>
    %15 = vector.extract_strided_slice %1 {offsets = [2, 0], sizes = [24, 28], strides = [1, 1]} : vector<28x28xf32> to vector<24x28xf32>
    %16 = arith.truncf %15 : vector<24x28xf32> to vector<24x28xbf16>
    %c0_11 = arith.constant 0 : index
    %c2 = arith.constant 2 : index
    %c0_12 = arith.constant 0 : index
    %c0_13 = arith.constant 0 : index
    %17 = vector.load %arg2[%c0_11, %c2, %c0_12, %c0_13] : memref<2x5x28x240xbf16, #tpu.memory_space<vmem>>, vector<1x1x28x240xbf16>
    %18 = vector.shape_cast %17 : vector<1x1x28x240xbf16> to vector<28x240xbf16>
    %cst_14 = arith.constant dense<0.000000e+00> : vector<24x240xf32>
    %19 = tpu.matmul %16, %18, %cst_14 {dimension_numbers = #tpu.dot_dimension_numbers<[1], [0], [0], [1], [0, 0, 1, 1], [], []>} : vector<24x28xbf16>, vector<28x240xbf16>, vector<24x240xf32> -> vector<24x240xf32>
    %20 = arith.addf %14, %19 : vector<24x240xf32>
    %21 = vector.extract_strided_slice %1 {offsets = [3, 0], sizes = [24, 28], strides = [1, 1]} : vector<28x28xf32> to vector<24x28xf32>
    %22 = arith.truncf %21 : vector<24x28xf32> to vector<24x28xbf16>
    %c0_15 = arith.constant 0 : index
    %c3 = arith.constant 3 : index
    %c0_16 = arith.constant 0 : index
    %c0_17 = arith.constant 0 : index
    %23 = vector.load %arg2[%c0_15, %c3, %c0_16, %c0_17] : memref<2x5x28x240xbf16, #tpu.memory_space<vmem>>, vector<1x1x28x240xbf16>
    %24 = vector.shape_cast %23 : vector<1x1x28x240xbf16> to vector<28x240xbf16>
    %cst_18 = arith.constant dense<0.000000e+00> : vector<24x240xf32>
    %25 = tpu.matmul %22, %24, %cst_18 {dimension_numbers = #tpu.dot_dimension_numbers<[1], [0], [0], [1], [0, 0, 1, 1], [], []>} : vector<24x28xbf16>, vector<28x240xbf16>, vector<24x240xf32> -> vector<24x240xf32>
    %26 = arith.addf %20, %25 : vector<24x240xf32>
    %27 = vector.extract_strided_slice %1 {offsets = [4, 0], sizes = [24, 28], strides = [1, 1]} : vector<28x28xf32> to vector<24x28xf32>
    %28 = arith.truncf %27 : vector<24x28xf32> to vector<24x28xbf16>
    %c0_19 = arith.constant 0 : index
    %c4 = arith.constant 4 : index
    %c0_20 = arith.constant 0 : index
    %c0_21 = arith.constant 0 : index
    %29 = vector.load %arg2[%c0_19, %c4, %c0_20, %c0_21] : memref<2x5x28x240xbf16, #tpu.memory_space<vmem>>, vector<1x1x28x240xbf16>
    %30 = vector.shape_cast %29 : vector<1x1x28x240xbf16> to vector<28x240xbf16>
    %cst_22 = arith.constant dense<0.000000e+00> : vector<24x240xf32>
    %31 = tpu.matmul %28, %30, %cst_22 {dimension_numbers = #tpu.dot_dimension_numbers<[1], [0], [0], [1], [0, 0, 1, 1], [], []>} : vector<24x28xbf16>, vector<28x240xbf16>, vector<24x240xf32> -> vector<24x240xf32>
    %32 = arith.addf %26, %31 : vector<24x240xf32>
    %c0_23 = arith.constant 0 : index
    %c0_24 = arith.constant 0 : index
    %c0_25 = arith.constant 0 : index
    %33 = vector.load %arg8[%c0_23, %c0_24, %c0_25] : memref<2x12x24xf32, #tpu.memory_space<vmem>>, vector<1x12x24xf32>
    %34 = vector.shape_cast %33 : vector<1x12x24xf32> to vector<12x24xf32>
    %cst_26 = arith.constant dense<0.000000e+00> : vector<12x240xf32>
    %35 = tpu.matmul %34, %32, %cst_26 {dimension_numbers = #tpu.dot_dimension_numbers<[1], [0], [0], [1], [0, 0, 1, 1], [], []>} : vector<12x24xf32>, vector<24x240xf32>, vector<12x240xf32> -> vector<12x240xf32>
    %c1_27 = arith.constant 1 : index
    %c0_28 = arith.constant 0 : index
    %c0_29 = arith.constant 0 : index
    %36 = vector.load %arg8[%c1_27, %c0_28, %c0_29] : memref<2x12x24xf32, #tpu.memory_space<vmem>>, vector<1x12x24xf32>
    %37 = vector.shape_cast %36 : vector<1x12x24xf32> to vector<12x24xf32>
    %cst_30 = arith.constant dense<0.000000e+00> : vector<12x240xf32>
    %38 = tpu.matmul %37, %32, %cst_30 {dimension_numbers = #tpu.dot_dimension_numbers<[1], [0], [0], [1], [0, 0, 1, 1], [], []>} : vector<12x24xf32>, vector<24x240xf32>, vector<12x240xf32> -> vector<12x240xf32>
    %39 = arith.maximumf %35, %38 : vector<12x240xf32>
    %cst_31 = arith.constant 0.000000e+00 : f32
    %40 = vector.broadcast %cst_31 : f32 to vector<24x240xf32>
    %41 = vector.extract_strided_slice %1 {offsets = [0, 0], sizes = [24, 28], strides = [1, 1]} : vector<28x28xf32> to vector<24x28xf32>
    %42 = arith.truncf %41 : vector<24x28xf32> to vector<24x28xbf16>
    %c1_32 = arith.constant 1 : index
    %c0_33 = arith.constant 0 : index
    %c0_34 = arith.constant 0 : index
    %c0_35 = arith.constant 0 : index
    %43 = vector.load %arg2[%c1_32, %c0_33, %c0_34, %c0_35] : memref<2x5x28x240xbf16, #tpu.memory_space<vmem>>, vector<1x1x28x240xbf16>
    %44 = vector.shape_cast %43 : vector<1x1x28x240xbf16> to vector<28x240xbf16>
    %cst_36 = arith.constant dense<0.000000e+00> : vector<24x240xf32>
    %45 = tpu.matmul %42, %44, %cst_36 {dimension_numbers = #tpu.dot_dimension_numbers<[1], [0], [0], [1], [0, 0, 1, 1], [], []>} : vector<24x28xbf16>, vector<28x240xbf16>, vector<24x240xf32> -> vector<24x240xf32>
    %46 = arith.addf %40, %45 : vector<24x240xf32>
    %47 = vector.extract_strided_slice %1 {offsets = [1, 0], sizes = [24, 28], strides = [1, 1]} : vector<28x28xf32> to vector<24x28xf32>
    %48 = arith.truncf %47 : vector<24x28xf32> to vector<24x28xbf16>
    %c1_37 = arith.constant 1 : index
    %c1_38 = arith.constant 1 : index
    %c0_39 = arith.constant 0 : index
    %c0_40 = arith.constant 0 : index
    %49 = vector.load %arg2[%c1_37, %c1_38, %c0_39, %c0_40] : memref<2x5x28x240xbf16, #tpu.memory_space<vmem>>, vector<1x1x28x240xbf16>
    %50 = vector.shape_cast %49 : vector<1x1x28x240xbf16> to vector<28x240xbf16>
    %cst_41 = arith.constant dense<0.000000e+00> : vector<24x240xf32>
    %51 = tpu.matmul %48, %50, %cst_41 {dimension_numbers = #tpu.dot_dimension_numbers<[1], [0], [0], [1], [0, 0, 1, 1], [], []>} : vector<24x28xbf16>, vector<28x240xbf16>, vector<24x240xf32> -> vector<24x240xf32>
    %52 = arith.addf %46, %51 : vector<24x240xf32>
    %53 = vector.extract_strided_slice %1 {offsets = [2, 0], sizes = [24, 28], strides = [1, 1]} : vector<28x28xf32> to vector<24x28xf32>
    %54 = arith.truncf %53 : vector<24x28xf32> to vector<24x28xbf16>
    %c1_42 = arith.constant 1 : index
    %c2_43 = arith.constant 2 : index
    %c0_44 = arith.constant 0 : index
    %c0_45 = arith.constant 0 : index
    %55 = vector.load %arg2[%c1_42, %c2_43, %c0_44, %c0_45] : memref<2x5x28x240xbf16, #tpu.memory_space<vmem>>, vector<1x1x28x240xbf16>
    %56 = vector.shape_cast %55 : vector<1x1x28x240xbf16> to vector<28x240xbf16>
    %cst_46 = arith.constant dense<0.000000e+00> : vector<24x240xf32>
    %57 = tpu.matmul %54, %56, %cst_46 {dimension_numbers = #tpu.dot_dimension_numbers<[1], [0], [0], [1], [0, 0, 1, 1], [], []>} : vector<24x28xbf16>, vector<28x240xbf16>, vector<24x240xf32> -> vector<24x240xf32>
    %58 = arith.addf %52, %57 : vector<24x240xf32>
    %59 = vector.extract_strided_slice %1 {offsets = [3, 0], sizes = [24, 28], strides = [1, 1]} : vector<28x28xf32> to vector<24x28xf32>
    %60 = arith.truncf %59 : vector<24x28xf32> to vector<24x28xbf16>
    %c1_47 = arith.constant 1 : index
    %c3_48 = arith.constant 3 : index
    %c0_49 = arith.constant 0 : index
    %c0_50 = arith.constant 0 : index
    %61 = vector.load %arg2[%c1_47, %c3_48, %c0_49, %c0_50] : memref<2x5x28x240xbf16, #tpu.memory_space<vmem>>, vector<1x1x28x240xbf16>
    %62 = vector.shape_cast %61 : vector<1x1x28x240xbf16> to vector<28x240xbf16>
    %cst_51 = arith.constant dense<0.000000e+00> : vector<24x240xf32>
    %63 = tpu.matmul %60, %62, %cst_51 {dimension_numbers = #tpu.dot_dimension_numbers<[1], [0], [0], [1], [0, 0, 1, 1], [], []>} : vector<24x28xbf16>, vector<28x240xbf16>, vector<24x240xf32> -> vector<24x240xf32>
    %64 = arith.addf %58, %63 : vector<24x240xf32>
    %65 = vector.extract_strided_slice %1 {offsets = [4, 0], sizes = [24, 28], strides = [1, 1]} : vector<28x28xf32> to vector<24x28xf32>
    %66 = arith.truncf %65 : vector<24x28xf32> to vector<24x28xbf16>
    %c1_52 = arith.constant 1 : index
    %c4_53 = arith.constant 4 : index
    %c0_54 = arith.constant 0 : index
    %c0_55 = arith.constant 0 : index
    %67 = vector.load %arg2[%c1_52, %c4_53, %c0_54, %c0_55] : memref<2x5x28x240xbf16, #tpu.memory_space<vmem>>, vector<1x1x28x240xbf16>
    %68 = vector.shape_cast %67 : vector<1x1x28x240xbf16> to vector<28x240xbf16>
    %cst_56 = arith.constant dense<0.000000e+00> : vector<24x240xf32>
    %69 = tpu.matmul %66, %68, %cst_56 {dimension_numbers = #tpu.dot_dimension_numbers<[1], [0], [0], [1], [0, 0, 1, 1], [], []>} : vector<24x28xbf16>, vector<28x240xbf16>, vector<24x240xf32> -> vector<24x240xf32>
    %70 = arith.addf %64, %69 : vector<24x240xf32>
    %c0_57 = arith.constant 0 : index
    %c0_58 = arith.constant 0 : index
    %c0_59 = arith.constant 0 : index
    %71 = vector.load %arg8[%c0_57, %c0_58, %c0_59] : memref<2x12x24xf32, #tpu.memory_space<vmem>>, vector<1x12x24xf32>
    %72 = vector.shape_cast %71 : vector<1x12x24xf32> to vector<12x24xf32>
    %cst_60 = arith.constant dense<0.000000e+00> : vector<12x240xf32>
    %73 = tpu.matmul %72, %70, %cst_60 {dimension_numbers = #tpu.dot_dimension_numbers<[1], [0], [0], [1], [0, 0, 1, 1], [], []>} : vector<12x24xf32>, vector<24x240xf32>, vector<12x240xf32> -> vector<12x240xf32>
    %c1_61 = arith.constant 1 : index
    %c0_62 = arith.constant 0 : index
    %c0_63 = arith.constant 0 : index
    %74 = vector.load %arg8[%c1_61, %c0_62, %c0_63] : memref<2x12x24xf32, #tpu.memory_space<vmem>>, vector<1x12x24xf32>
    %75 = vector.shape_cast %74 : vector<1x12x24xf32> to vector<12x24xf32>
    %cst_64 = arith.constant dense<0.000000e+00> : vector<12x240xf32>
    %76 = tpu.matmul %75, %70, %cst_64 {dimension_numbers = #tpu.dot_dimension_numbers<[1], [0], [0], [1], [0, 0, 1, 1], [], []>} : vector<12x24xf32>, vector<24x240xf32>, vector<12x240xf32> -> vector<12x240xf32>
    %77 = arith.maximumf %73, %76 : vector<12x240xf32>
    %78 = arith.maximumf %39, %77 : vector<12x240xf32>
    %c0_65 = arith.constant 0 : index
    %c0_66 = arith.constant 0 : index
    %79 = vector.load %arg3[%c0_65, %c0_66] : memref<1x240xf32, #tpu.memory_space<vmem>>, vector<1x240xf32>
    %80 = vector.broadcast %79 : vector<1x240xf32> to vector<12x240xf32>
    %81 = arith.addf %78, %80 : vector<12x240xf32>
    %cst_67 = arith.constant 0.000000e+00 : f32
    %82 = vector.broadcast %cst_67 : f32 to vector<12x240xf32>
    %83 = arith.maximumf %81, %82 : vector<12x240xf32>
    %cst_68 = arith.constant 0.000000e+00 : f32
    %84 = vector.broadcast %cst_68 : f32 to vector<8x200xf32>
    %85 = vector.extract_strided_slice %83 {offsets = [0, 0], sizes = [8, 240], strides = [1, 1]} : vector<12x240xf32> to vector<8x240xf32>
    %86 = arith.truncf %85 : vector<8x240xf32> to vector<8x240xbf16>
    %c0_69 = arith.constant 0 : index
    %c0_70 = arith.constant 0 : index
    %c0_71 = arith.constant 0 : index
    %c0_72 = arith.constant 0 : index
    %87 = vector.load %arg4[%c0_69, %c0_70, %c0_71, %c0_72] : memref<2x5x240x200xbf16, #tpu.memory_space<vmem>>, vector<1x1x240x200xbf16>
    %88 = vector.shape_cast %87 : vector<1x1x240x200xbf16> to vector<240x200xbf16>
    %cst_73 = arith.constant dense<0.000000e+00> : vector<8x200xf32>
    %89 = tpu.matmul %86, %88, %cst_73 {dimension_numbers = #tpu.dot_dimension_numbers<[1], [0], [0], [1], [0, 0, 1, 1], [], []>} : vector<8x240xbf16>, vector<240x200xbf16>, vector<8x200xf32> -> vector<8x200xf32>
    %90 = arith.addf %84, %89 : vector<8x200xf32>
    %91 = vector.extract_strided_slice %83 {offsets = [1, 0], sizes = [8, 240], strides = [1, 1]} : vector<12x240xf32> to vector<8x240xf32>
    %92 = arith.truncf %91 : vector<8x240xf32> to vector<8x240xbf16>
    %c0_74 = arith.constant 0 : index
    %c1_75 = arith.constant 1 : index
    %c0_76 = arith.constant 0 : index
    %c0_77 = arith.constant 0 : index
    %93 = vector.load %arg4[%c0_74, %c1_75, %c0_76, %c0_77] : memref<2x5x240x200xbf16, #tpu.memory_space<vmem>>, vector<1x1x240x200xbf16>
    %94 = vector.shape_cast %93 : vector<1x1x240x200xbf16> to vector<240x200xbf16>
    %cst_78 = arith.constant dense<0.000000e+00> : vector<8x200xf32>
    %95 = tpu.matmul %92, %94, %cst_78 {dimension_numbers = #tpu.dot_dimension_numbers<[1], [0], [0], [1], [0, 0, 1, 1], [], []>} : vector<8x240xbf16>, vector<240x200xbf16>, vector<8x200xf32> -> vector<8x200xf32>
    %96 = arith.addf %90, %95 : vector<8x200xf32>
    %97 = vector.extract_strided_slice %83 {offsets = [2, 0], sizes = [8, 240], strides = [1, 1]} : vector<12x240xf32> to vector<8x240xf32>
    %98 = arith.truncf %97 : vector<8x240xf32> to vector<8x240xbf16>
    %c0_79 = arith.constant 0 : index
    %c2_80 = arith.constant 2 : index
    %c0_81 = arith.constant 0 : index
    %c0_82 = arith.constant 0 : index
    %99 = vector.load %arg4[%c0_79, %c2_80, %c0_81, %c0_82] : memref<2x5x240x200xbf16, #tpu.memory_space<vmem>>, vector<1x1x240x200xbf16>
    %100 = vector.shape_cast %99 : vector<1x1x240x200xbf16> to vector<240x200xbf16>
    %cst_83 = arith.constant dense<0.000000e+00> : vector<8x200xf32>
    %101 = tpu.matmul %98, %100, %cst_83 {dimension_numbers = #tpu.dot_dimension_numbers<[1], [0], [0], [1], [0, 0, 1, 1], [], []>} : vector<8x240xbf16>, vector<240x200xbf16>, vector<8x200xf32> -> vector<8x200xf32>
    %102 = arith.addf %96, %101 : vector<8x200xf32>
    %103 = vector.extract_strided_slice %83 {offsets = [3, 0], sizes = [8, 240], strides = [1, 1]} : vector<12x240xf32> to vector<8x240xf32>
    %104 = arith.truncf %103 : vector<8x240xf32> to vector<8x240xbf16>
    %c0_84 = arith.constant 0 : index
    %c3_85 = arith.constant 3 : index
    %c0_86 = arith.constant 0 : index
    %c0_87 = arith.constant 0 : index
    %105 = vector.load %arg4[%c0_84, %c3_85, %c0_86, %c0_87] : memref<2x5x240x200xbf16, #tpu.memory_space<vmem>>, vector<1x1x240x200xbf16>
    %106 = vector.shape_cast %105 : vector<1x1x240x200xbf16> to vector<240x200xbf16>
    %cst_88 = arith.constant dense<0.000000e+00> : vector<8x200xf32>
    %107 = tpu.matmul %104, %106, %cst_88 {dimension_numbers = #tpu.dot_dimension_numbers<[1], [0], [0], [1], [0, 0, 1, 1], [], []>} : vector<8x240xbf16>, vector<240x200xbf16>, vector<8x200xf32> -> vector<8x200xf32>
    %108 = arith.addf %102, %107 : vector<8x200xf32>
    %109 = vector.extract_strided_slice %83 {offsets = [4, 0], sizes = [8, 240], strides = [1, 1]} : vector<12x240xf32> to vector<8x240xf32>
    %110 = arith.truncf %109 : vector<8x240xf32> to vector<8x240xbf16>
    %c0_89 = arith.constant 0 : index
    %c4_90 = arith.constant 4 : index
    %c0_91 = arith.constant 0 : index
    %c0_92 = arith.constant 0 : index
    %111 = vector.load %arg4[%c0_89, %c4_90, %c0_91, %c0_92] : memref<2x5x240x200xbf16, #tpu.memory_space<vmem>>, vector<1x1x240x200xbf16>
    %112 = vector.shape_cast %111 : vector<1x1x240x200xbf16> to vector<240x200xbf16>
    %cst_93 = arith.constant dense<0.000000e+00> : vector<8x200xf32>
    %113 = tpu.matmul %110, %112, %cst_93 {dimension_numbers = #tpu.dot_dimension_numbers<[1], [0], [0], [1], [0, 0, 1, 1], [], []>} : vector<8x240xbf16>, vector<240x200xbf16>, vector<8x200xf32> -> vector<8x200xf32>
    %114 = arith.addf %108, %113 : vector<8x200xf32>
    %c0_94 = arith.constant 0 : index
    %c0_95 = arith.constant 0 : index
    %c0_96 = arith.constant 0 : index
    %115 = vector.load %arg9[%c0_94, %c0_95, %c0_96] : memref<2x4x8xf32, #tpu.memory_space<vmem>>, vector<1x4x8xf32>
    %116 = vector.shape_cast %115 : vector<1x4x8xf32> to vector<4x8xf32>
    %cst_97 = arith.constant dense<0.000000e+00> : vector<4x200xf32>
    %117 = tpu.matmul %116, %114, %cst_97 {dimension_numbers = #tpu.dot_dimension_numbers<[1], [0], [0], [1], [0, 0, 1, 1], [], []>} : vector<4x8xf32>, vector<8x200xf32>, vector<4x200xf32> -> vector<4x200xf32>
    %c1_98 = arith.constant 1 : index
    %c0_99 = arith.constant 0 : index
    %c0_100 = arith.constant 0 : index
    %118 = vector.load %arg9[%c1_98, %c0_99, %c0_100] : memref<2x4x8xf32, #tpu.memory_space<vmem>>, vector<1x4x8xf32>
    %119 = vector.shape_cast %118 : vector<1x4x8xf32> to vector<4x8xf32>
    %cst_101 = arith.constant dense<0.000000e+00> : vector<4x200xf32>
    %120 = tpu.matmul %119, %114, %cst_101 {dimension_numbers = #tpu.dot_dimension_numbers<[1], [0], [0], [1], [0, 0, 1, 1], [], []>} : vector<4x8xf32>, vector<8x200xf32>, vector<4x200xf32> -> vector<4x200xf32>
    %121 = arith.maximumf %117, %120 : vector<4x200xf32>
    %cst_102 = arith.constant 0.000000e+00 : f32
    %122 = vector.broadcast %cst_102 : f32 to vector<8x200xf32>
    %123 = vector.extract_strided_slice %83 {offsets = [0, 0], sizes = [8, 240], strides = [1, 1]} : vector<12x240xf32> to vector<8x240xf32>
    %124 = arith.truncf %123 : vector<8x240xf32> to vector<8x240xbf16>
    %c1_103 = arith.constant 1 : index
    %c0_104 = arith.constant 0 : index
    %c0_105 = arith.constant 0 : index
    %c0_106 = arith.constant 0 : index
    %125 = vector.load %arg4[%c1_103, %c0_104, %c0_105, %c0_106] : memref<2x5x240x200xbf16, #tpu.memory_space<vmem>>, vector<1x1x240x200xbf16>
    %126 = vector.shape_cast %125 : vector<1x1x240x200xbf16> to vector<240x200xbf16>
    %cst_107 = arith.constant dense<0.000000e+00> : vector<8x200xf32>
    %127 = tpu.matmul %124, %126, %cst_107 {dimension_numbers = #tpu.dot_dimension_numbers<[1], [0], [0], [1], [0, 0, 1, 1], [], []>} : vector<8x240xbf16>, vector<240x200xbf16>, vector<8x200xf32> -> vector<8x200xf32>
    %128 = arith.addf %122, %127 : vector<8x200xf32>
    %129 = vector.extract_strided_slice %83 {offsets = [1, 0], sizes = [8, 240], strides = [1, 1]} : vector<12x240xf32> to vector<8x240xf32>
    %130 = arith.truncf %129 : vector<8x240xf32> to vector<8x240xbf16>
    %c1_108 = arith.constant 1 : index
    %c1_109 = arith.constant 1 : index
    %c0_110 = arith.constant 0 : index
    %c0_111 = arith.constant 0 : index
    %131 = vector.load %arg4[%c1_108, %c1_109, %c0_110, %c0_111] : memref<2x5x240x200xbf16, #tpu.memory_space<vmem>>, vector<1x1x240x200xbf16>
    %132 = vector.shape_cast %131 : vector<1x1x240x200xbf16> to vector<240x200xbf16>
    %cst_112 = arith.constant dense<0.000000e+00> : vector<8x200xf32>
    %133 = tpu.matmul %130, %132, %cst_112 {dimension_numbers = #tpu.dot_dimension_numbers<[1], [0], [0], [1], [0, 0, 1, 1], [], []>} : vector<8x240xbf16>, vector<240x200xbf16>, vector<8x200xf32> -> vector<8x200xf32>
    %134 = arith.addf %128, %133 : vector<8x200xf32>
    %135 = vector.extract_strided_slice %83 {offsets = [2, 0], sizes = [8, 240], strides = [1, 1]} : vector<12x240xf32> to vector<8x240xf32>
    %136 = arith.truncf %135 : vector<8x240xf32> to vector<8x240xbf16>
    %c1_113 = arith.constant 1 : index
    %c2_114 = arith.constant 2 : index
    %c0_115 = arith.constant 0 : index
    %c0_116 = arith.constant 0 : index
    %137 = vector.load %arg4[%c1_113, %c2_114, %c0_115, %c0_116] : memref<2x5x240x200xbf16, #tpu.memory_space<vmem>>, vector<1x1x240x200xbf16>
    %138 = vector.shape_cast %137 : vector<1x1x240x200xbf16> to vector<240x200xbf16>
    %cst_117 = arith.constant dense<0.000000e+00> : vector<8x200xf32>
    %139 = tpu.matmul %136, %138, %cst_117 {dimension_numbers = #tpu.dot_dimension_numbers<[1], [0], [0], [1], [0, 0, 1, 1], [], []>} : vector<8x240xbf16>, vector<240x200xbf16>, vector<8x200xf32> -> vector<8x200xf32>
    %140 = arith.addf %134, %139 : vector<8x200xf32>
    %141 = vector.extract_strided_slice %83 {offsets = [3, 0], sizes = [8, 240], strides = [1, 1]} : vector<12x240xf32> to vector<8x240xf32>
    %142 = arith.truncf %141 : vector<8x240xf32> to vector<8x240xbf16>
    %c1_118 = arith.constant 1 : index
    %c3_119 = arith.constant 3 : index
    %c0_120 = arith.constant 0 : index
    %c0_121 = arith.constant 0 : index
    %143 = vector.load %arg4[%c1_118, %c3_119, %c0_120, %c0_121] : memref<2x5x240x200xbf16, #tpu.memory_space<vmem>>, vector<1x1x240x200xbf16>
    %144 = vector.shape_cast %143 : vector<1x1x240x200xbf16> to vector<240x200xbf16>
    %cst_122 = arith.constant dense<0.000000e+00> : vector<8x200xf32>
    %145 = tpu.matmul %142, %144, %cst_122 {dimension_numbers = #tpu.dot_dimension_numbers<[1], [0], [0], [1], [0, 0, 1, 1], [], []>} : vector<8x240xbf16>, vector<240x200xbf16>, vector<8x200xf32> -> vector<8x200xf32>
    %146 = arith.addf %140, %145 : vector<8x200xf32>
    %147 = vector.extract_strided_slice %83 {offsets = [4, 0], sizes = [8, 240], strides = [1, 1]} : vector<12x240xf32> to vector<8x240xf32>
    %148 = arith.truncf %147 : vector<8x240xf32> to vector<8x240xbf16>
    %c1_123 = arith.constant 1 : index
    %c4_124 = arith.constant 4 : index
    %c0_125 = arith.constant 0 : index
    %c0_126 = arith.constant 0 : index
    %149 = vector.load %arg4[%c1_123, %c4_124, %c0_125, %c0_126] : memref<2x5x240x200xbf16, #tpu.memory_space<vmem>>, vector<1x1x240x200xbf16>
    %150 = vector.shape_cast %149 : vector<1x1x240x200xbf16> to vector<240x200xbf16>
    %cst_127 = arith.constant dense<0.000000e+00> : vector<8x200xf32>
    %151 = tpu.matmul %148, %150, %cst_127 {dimension_numbers = #tpu.dot_dimension_numbers<[1], [0], [0], [1], [0, 0, 1, 1], [], []>} : vector<8x240xbf16>, vector<240x200xbf16>, vector<8x200xf32> -> vector<8x200xf32>
    %152 = arith.addf %146, %151 : vector<8x200xf32>
    %c0_128 = arith.constant 0 : index
    %c0_129 = arith.constant 0 : index
    %c0_130 = arith.constant 0 : index
    %153 = vector.load %arg9[%c0_128, %c0_129, %c0_130] : memref<2x4x8xf32, #tpu.memory_space<vmem>>, vector<1x4x8xf32>
    %154 = vector.shape_cast %153 : vector<1x4x8xf32> to vector<4x8xf32>
    %cst_131 = arith.constant dense<0.000000e+00> : vector<4x200xf32>
    %155 = tpu.matmul %154, %152, %cst_131 {dimension_numbers = #tpu.dot_dimension_numbers<[1], [0], [0], [1], [0, 0, 1, 1], [], []>} : vector<4x8xf32>, vector<8x200xf32>, vector<4x200xf32> -> vector<4x200xf32>
    %c1_132 = arith.constant 1 : index
    %c0_133 = arith.constant 0 : index
    %c0_134 = arith.constant 0 : index
    %156 = vector.load %arg9[%c1_132, %c0_133, %c0_134] : memref<2x4x8xf32, #tpu.memory_space<vmem>>, vector<1x4x8xf32>
    %157 = vector.shape_cast %156 : vector<1x4x8xf32> to vector<4x8xf32>
    %cst_135 = arith.constant dense<0.000000e+00> : vector<4x200xf32>
    %158 = tpu.matmul %157, %152, %cst_135 {dimension_numbers = #tpu.dot_dimension_numbers<[1], [0], [0], [1], [0, 0, 1, 1], [], []>} : vector<4x8xf32>, vector<8x200xf32>, vector<4x200xf32> -> vector<4x200xf32>
    %159 = arith.maximumf %155, %158 : vector<4x200xf32>
    %160 = arith.maximumf %121, %159 : vector<4x200xf32>
    %c0_136 = arith.constant 0 : index
    %c0_137 = arith.constant 0 : index
    %161 = vector.load %arg5[%c0_136, %c0_137] : memref<1x200xf32, #tpu.memory_space<vmem>>, vector<1x200xf32>
    %162 = vector.broadcast %161 : vector<1x200xf32> to vector<4x200xf32>
    %163 = arith.addf %160, %162 : vector<4x200xf32>
    %cst_138 = arith.constant 0.000000e+00 : f32
    %164 = vector.broadcast %cst_138 : f32 to vector<4x200xf32>
    %165 = arith.maximumf %163, %164 : vector<4x200xf32>
    %cst_139 = arith.constant 0.000000e+00 : f32
    %166 = vector.broadcast %cst_139 : f32 to vector<1x500xf32>
    %167 = vector.extract_strided_slice %165 {offsets = [0, 0], sizes = [1, 200], strides = [1, 1]} : vector<4x200xf32> to vector<1x200xf32>
    %168 = arith.truncf %167 : vector<1x200xf32> to vector<1x200xbf16>
    %c0_140 = arith.constant 0 : index
    %c0_141 = arith.constant 0 : index
    %c0_142 = arith.constant 0 : index
    %169 = vector.load %arg6[%c0_140, %c0_141, %c0_142] : memref<4x200x500xbf16, #tpu.memory_space<vmem>>, vector<1x200x500xbf16>
    %170 = vector.shape_cast %169 : vector<1x200x500xbf16> to vector<200x500xbf16>
    %cst_143 = arith.constant dense<0.000000e+00> : vector<1x500xf32>
    %171 = tpu.matmul %168, %170, %cst_143 {dimension_numbers = #tpu.dot_dimension_numbers<[1], [0], [0], [1], [0, 0, 1, 1], [], []>} : vector<1x200xbf16>, vector<200x500xbf16>, vector<1x500xf32> -> vector<1x500xf32>
    %172 = arith.addf %166, %171 : vector<1x500xf32>
    %173 = vector.extract_strided_slice %165 {offsets = [1, 0], sizes = [1, 200], strides = [1, 1]} : vector<4x200xf32> to vector<1x200xf32>
    %174 = arith.truncf %173 : vector<1x200xf32> to vector<1x200xbf16>
    %c1_144 = arith.constant 1 : index
    %c0_145 = arith.constant 0 : index
    %c0_146 = arith.constant 0 : index
    %175 = vector.load %arg6[%c1_144, %c0_145, %c0_146] : memref<4x200x500xbf16, #tpu.memory_space<vmem>>, vector<1x200x500xbf16>
    %176 = vector.shape_cast %175 : vector<1x200x500xbf16> to vector<200x500xbf16>
    %cst_147 = arith.constant dense<0.000000e+00> : vector<1x500xf32>
    %177 = tpu.matmul %174, %176, %cst_147 {dimension_numbers = #tpu.dot_dimension_numbers<[1], [0], [0], [1], [0, 0, 1, 1], [], []>} : vector<1x200xbf16>, vector<200x500xbf16>, vector<1x500xf32> -> vector<1x500xf32>
    %178 = arith.addf %172, %177 : vector<1x500xf32>
    %179 = vector.extract_strided_slice %165 {offsets = [2, 0], sizes = [1, 200], strides = [1, 1]} : vector<4x200xf32> to vector<1x200xf32>
    %180 = arith.truncf %179 : vector<1x200xf32> to vector<1x200xbf16>
    %c2_148 = arith.constant 2 : index
    %c0_149 = arith.constant 0 : index
    %c0_150 = arith.constant 0 : index
    %181 = vector.load %arg6[%c2_148, %c0_149, %c0_150] : memref<4x200x500xbf16, #tpu.memory_space<vmem>>, vector<1x200x500xbf16>
    %182 = vector.shape_cast %181 : vector<1x200x500xbf16> to vector<200x500xbf16>
    %cst_151 = arith.constant dense<0.000000e+00> : vector<1x500xf32>
    %183 = tpu.matmul %180, %182, %cst_151 {dimension_numbers = #tpu.dot_dimension_numbers<[1], [0], [0], [1], [0, 0, 1, 1], [], []>} : vector<1x200xbf16>, vector<200x500xbf16>, vector<1x500xf32> -> vector<1x500xf32>
    %184 = arith.addf %178, %183 : vector<1x500xf32>
    %185 = vector.extract_strided_slice %165 {offsets = [3, 0], sizes = [1, 200], strides = [1, 1]} : vector<4x200xf32> to vector<1x200xf32>
    %186 = arith.truncf %185 : vector<1x200xf32> to vector<1x200xbf16>
    %c3_152 = arith.constant 3 : index
    %c0_153 = arith.constant 0 : index
    %c0_154 = arith.constant 0 : index
    %187 = vector.load %arg6[%c3_152, %c0_153, %c0_154] : memref<4x200x500xbf16, #tpu.memory_space<vmem>>, vector<1x200x500xbf16>
    %188 = vector.shape_cast %187 : vector<1x200x500xbf16> to vector<200x500xbf16>
    %cst_155 = arith.constant dense<0.000000e+00> : vector<1x500xf32>
    %189 = tpu.matmul %186, %188, %cst_155 {dimension_numbers = #tpu.dot_dimension_numbers<[1], [0], [0], [1], [0, 0, 1, 1], [], []>} : vector<1x200xbf16>, vector<200x500xbf16>, vector<1x500xf32> -> vector<1x500xf32>
    %190 = arith.addf %184, %189 : vector<1x500xf32>
    %c0_156 = arith.constant 0 : index
    %c0_157 = arith.constant 0 : index
    %191 = vector.load %arg7[%c0_156, %c0_157] : memref<1x500xf32, #tpu.memory_space<vmem>>, vector<1x500xf32>
    %192 = arith.addf %190, %191 : vector<1x500xf32>
    %cst_158 = arith.constant 0.000000e+00 : f32
    %193 = vector.broadcast %cst_158 : f32 to vector<1x500xf32>
    %194 = arith.maximumf %192, %193 : vector<1x500xf32>
    %c0_159 = arith.constant 0 : index
    %c0_160 = arith.constant 0 : index
    %c0_161 = arith.constant 0 : index
    %195 = vector.load %arg10[%c0_159, %c0_160, %c0_161] : memref<1x1x500xf32, #tpu.memory_space<vmem>>, vector<1x1x500xf32>
    %196 = vector.shape_cast %195 : vector<1x1x500xf32> to vector<1x500xf32>
    %197 = vector.shape_cast %194 : vector<1x500xf32> to vector<1x1x500xf32>
    tpu.vector_store %arg10[%c0_159, %c0_160, %c0_161], %197 {strides = array<i32>} : memref<1x1x500xf32, #tpu.memory_space<vmem>>, vector<1x1x500xf32>,
    return
  }
  func.func @transform_0(%arg0: i32) -> (i32, i32, i32) {
    %c0_i32 = arith.constant 0 : i32
    %c0_i32_0 = arith.constant 0 : i32
    %c0_i32_1 = arith.constant 0 : i32
    return %arg0, %c0_i32, %c0_i32_0 : i32, i32, i32
  }
  func.func @transform_1(%arg0: i32) -> (i32, i32, i32, i32) {
    %c0_i32 = arith.constant 0 : i32
    %c0_i32_0 = arith.constant 0 : i32
    %c0_i32_1 = arith.constant 0 : i32
    %c0_i32_2 = arith.constant 0 : i32
    %c0_i32_3 = arith.constant 0 : i32
    return %c0_i32, %c0_i32_0, %c0_i32_1, %c0_i32_2 : i32, i32, i32, i32
  }
  func.func @transform_2(%arg0: i32) -> (i32, i32) {
    %c0_i32 = arith.constant 0 : i32
    %c0_i32_0 = arith.constant 0 : i32
    %c0_i32_1 = arith.constant 0 : i32
    return %c0_i32, %c0_i32_0 : i32, i32
  }
  func.func @transform_3(%arg0: i32) -> (i32, i32, i32, i32) {
    %c0_i32 = arith.constant 0 : i32
    %c0_i32_0 = arith.constant 0 : i32
    %c0_i32_1 = arith.constant 0 : i32
    %c0_i32_2 = arith.constant 0 : i32
    %c0_i32_3 = arith.constant 0 : i32
    return %c0_i32, %c0_i32_0, %c0_i32_1, %c0_i32_2 : i32, i32, i32, i32
  }
  func.func @transform_4(%arg0: i32) -> (i32, i32) {
    %c0_i32 = arith.constant 0 : i32
    %c0_i32_0 = arith.constant 0 : i32
    %c0_i32_1 = arith.constant 0 : i32
    return %c0_i32, %c0_i32_0 : i32, i32
  }
  func.func @transform_5(%arg0: i32) -> (i32, i32, i32) {
    %c0_i32 = arith.constant 0 : i32
    %c0_i32_0 = arith.constant 0 : i32
    %c0_i32_1 = arith.constant 0 : i32
    %c0_i32_2 = arith.constant 0 : i32
    return %c0_i32, %c0_i32_0, %c0_i32_1 : i32, i32, i32
  }
  func.func @transform_6(%arg0: i32) -> (i32, i32) {
    %c0_i32 = arith.constant 0 : i32
    %c0_i32_0 = arith.constant 0 : i32
    %c0_i32_1 = arith.constant 0 : i32
    return %c0_i32, %c0_i32_0 : i32, i32
  }
  func.func @transform_7(%arg0: i32) -> (i32, i32, i32) {
    %c0_i32 = arith.constant 0 : i32
    %c0_i32_0 = arith.constant 0 : i32
    %c0_i32_1 = arith.constant 0 : i32
    %c0_i32_2 = arith.constant 0 : i32
    return %c0_i32, %c0_i32_0, %c0_i32_1 : i32, i32, i32
  }
  func.func @transform_8(%arg0: i32) -> (i32, i32, i32) {
    %c0_i32 = arith.constant 0 : i32
    %c0_i32_0 = arith.constant 0 : i32
    %c0_i32_1 = arith.constant 0 : i32
    %c0_i32_2 = arith.constant 0 : i32
    return %c0_i32, %c0_i32_0, %c0_i32_1 : i32, i32, i32
  }
  func.func @transform_9(%arg0: i32) -> (i32, i32, i32) {
    %c0_i32 = arith.constant 0 : i32
    %c0_i32_0 = arith.constant 0 : i32
    %c0_i32_1 = arith.constant 0 : i32
    return %arg0, %c0_i32, %c0_i32_0 : i32, i32, i32
  }
}

</mosaic_0001>

<llo_original>
// kernel: vision_forward.1
$region0: #{vision_forward.1}
  #allocation0 [shape = 'u32[]', space=smem, size = 0x4, offset = 0x4, fixed_abs, tag = 'smem constant byte address 0x4 - core index']
  #allocation1 [shape = 'u32[144,128]{1,0:T(1,128)}', space=vmem, size = 0x12000, scoped, tag = 'internal scratch']
  %s0 = inlined_call_operand.vmem [shape: f32[2,28,28], index: 0, kind: input, shape index: {}]
  %s1 = inlined_call_operand.vmem [shape: bf16[2,5,28,240], index: 1, kind: input, shape index: {}]
  %s2 = inlined_call_operand.vmem [shape: f32[1,240], index: 2, kind: input, shape index: {}]
  %s3 = inlined_call_operand.vmem [shape: bf16[2,5,240,200], index: 3, kind: input, shape index: {}]
  %s4 = inlined_call_operand.vmem [shape: f32[1,200], index: 4, kind: input, shape index: {}]
  %s5 = inlined_call_operand.vmem [shape: bf16[4,200,500], index: 5, kind: input, shape index: {}]
  %s6 = inlined_call_operand.vmem [shape: f32[1,500], index: 6, kind: input, shape index: {}]
  %s7 = inlined_call_operand.vmem [shape: f32[2,12,24], index: 7, kind: input, shape index: {}]
  %s8 = inlined_call_operand.vmem [shape: f32[2,4,8], index: 8, kind: input, shape index: {}]
  %s9 = inlined_call_operand.vmem [shape: f32[2,1,500], index: 9, kind: output, shape index: {}]
  %s10 = sld [smem:[#allocation0]]
  $region69: #{vision_forward.1} parent=0
    _
  %s12 = ssub.s32 1, %s10
  %s13 = scalar_select 0, %s12, %s10
  loop: start=0, step=1, limit=4
  $region2: #{vision_forward.1} parent=0 // loop_pre_header
    _
  $region3: #{vision_forward.1} parent=0 // loop_header
    %s15 = sphi 0, %s19
    %p16 = scmp.ge.s32.totalorder %s15, 4
    %s25 = sphi 0, %s27
    %s28 = sphi 0, %s25
    %s29 = sphi 0, %s28
    %s45 = sphi 0, %s29
    %s49 = sphi 0, %s49
    %s51 = sphi 0, %s49
    %s52 = sphi 0, %s51
    %s66 = sphi 0, %s52
    %s70 = sphi 0, %s70
    %s72 = sphi 0, %s70
    %s73 = sphi 0, %s72
    %s87 = sphi 0, %s73
    %s91 = sphi 0, %s91
    %s93 = sphi 0, %s91
    %s94 = sphi 0, %s93
    %s108 = sphi 0, %s94
    %s112 = sphi 0, %s112
    %s114 = sphi 0, %s112
    %s115 = sphi 0, %s114
    %s129 = sphi 0, %s115
    %s133 = sphi 0, %s133
    %s135 = sphi 0, %s133
    %s136 = sphi 0, %s135
    %s150 = sphi 0, %s136
    %s154 = sphi 0, %s154
    %s156 = sphi 0, %s154
    %s157 = sphi 0, %s156
    %s171 = sphi 0, %s157
    %s175 = sphi 0, %s175
    %s177 = sphi 0, %s175
    %s178 = sphi 0, %s177
    %s192 = sphi 0, %s178
    %s196 = sphi 0, %s196
    %s198 = sphi 0, %s196
    %s199 = sphi 0, %s198
    %s213 = sphi 0, %s199
    %s219 = sphi 0, %s221
    %s222 = sphi 0, %s219
    %s223 = sphi 0, %s222
    %s239 = sphi 0, %s223
  $region4: #{vision_forward.1} parent=0 // loop_header_branch
    %18 = sbr.rel (%p16) target = $region8
  $region5: #{vision_forward.1} parent=0 // loop_body
    %s20 = ssub.s32 %s15, 1
    %s21 = ssub.s32 %s15, 2
    %s22 = sadd.s32 %s15, 1
    %s23 = ssub.s32 %s15, %s22
    %p24 = scmp.eq.s32.totalorder %s23, 0
    %s26 = sadd.s32 %s25, 1
    %s27 = scalar_select %p24, %s25, %s26
    %p30 = pneg %p24
    %p31 = scmp.eq.s32.totalorder %s15, 1
    %p32 = por %p30, %p31
    %p33 = scmp.ne.s32.totalorder %s25, %s28
    %p34 = scmp.eq.s32.totalorder %s15, 0
    %p35 = por %p33, %p34
    %p36 = scmp.ne.s32.totalorder %s25, %s28
    %p37 = scmp.eq.s32.totalorder %s20, 1
    %p38 = por %p36, %p37
    %p39 = scmp.ne.s32.totalorder %s28, %s29
    %p40 = scmp.eq.s32.totalorder %s20, 0
    %p41 = por %p39, %p40
    %p42 = scmp.ne.s32.totalorder %s28, %s29
    %p43 = scmp.eq.s32.totalorder %s21, 1
    %p44 = por %p42, %p43
    %p46 = scmp.ne.s32.totalorder %s29, %s45
    %p47 = scmp.eq.s32.totalorder %s21, 0
    %p48 = por %p46, %p47
    %s50 = sadd.s32 %s49, 1
    %p53 = scmp.eq.s32.totalorder %s15, 1
    %p54 = scmp.ne.s32.totalorder %s49, %s51
    %p55 = scmp.eq.s32.totalorder %s15, 0
    %p56 = por %p54, %p55
    %p57 = scmp.ne.s32.totalorder %s49, %s51
    %p58 = scmp.eq.s32.totalorder %s20, 1
    %p59 = por %p57, %p58
    %p60 = scmp.ne.s32.totalorder %s51, %s52
    %p61 = scmp.eq.s32.totalorder %s20, 0
    %p62 = por %p60, %p61
    %p63 = scmp.ne.s32.totalorder %s51, %s52
    %p64 = scmp.eq.s32.totalorder %s21, 1
    %p65 = por %p63, %p64
    %p67 = scmp.ne.s32.totalorder %s52, %s66
    %p68 = scmp.eq.s32.totalorder %s21, 0
    %p69 = por %p67, %p68
    %s71 = sadd.s32 %s70, 1
    %p74 = scmp.eq.s32.totalorder %s15, 1
    %p75 = scmp.ne.s32.totalorder %s70, %s72
    %p76 = scmp.eq.s32.totalorder %s15, 0
    %p77 = por %p75, %p76
    %p78 = scmp.ne.s32.totalorder %s70, %s72
    %p79 = scmp.eq.s32.totalorder %s20, 1
    %p80 = por %p78, %p79
    %p81 = scmp.ne.s32.totalorder %s72, %s73
    %p82 = scmp.eq.s32.totalorder %s20, 0
    %p83 = por %p81, %p82
    %p84 = scmp.ne.s32.totalorder %s72, %s73
    %p85 = scmp.eq.s32.totalorder %s21, 1
    %p86 = por %p84, %p85
    %p88 = scmp.ne.s32.totalorder %s73, %s87
    %p89 = scmp.eq.s32.totalorder %s21, 0
    %p90 = por %p88, %p89
    %s92 = sadd.s32 %s91, 1
    %p95 = scmp.eq.s32.totalorder %s15, 1
    %p96 = scmp.ne.s32.totalorder %s91, %s93
    %p97 = scmp.eq.s32.totalorder %s15, 0
    %p98 = por %p96, %p97
    %p99 = scmp.ne.s32.totalorder %s91, %s93
    %p100 = scmp.eq.s32.totalorder %s20, 1
    %p101 = por %p99, %p100
    %p102 = scmp.ne.s32.totalorder %s93, %s94
    %p103 = scmp.eq.s32.totalorder %s20, 0
    %p104 = por %p102, %p103
    %p105 = scmp.ne.s32.totalorder %s93, %s94
    %p106 = scmp.eq.s32.totalorder %s21, 1
    %p107 = por %p105, %p106
    %p109 = scmp.ne.s32.totalorder %s94, %s108
    %p110 = scmp.eq.s32.totalorder %s21, 0
    %p111 = por %p109, %p110
    %s113 = sadd.s32 %s112, 1
    %p116 = scmp.eq.s32.totalorder %s15, 1
    %p117 = scmp.ne.s32.totalorder %s112, %s114
    %p118 = scmp.eq.s32.totalorder %s15, 0
    %p119 = por %p117, %p118
    %p120 = scmp.ne.s32.totalorder %s112, %s114
    %p121 = scmp.eq.s32.totalorder %s20, 1
    %p122 = por %p120, %p121
    %p123 = scmp.ne.s32.totalorder %s114, %s115
    %p124 = scmp.eq.s32.totalorder %s20, 0
    %p125 = por %p123, %p124
    %p126 = scmp.ne.s32.totalorder %s114, %s115
    %p127 = scmp.eq.s32.totalorder %s21, 1
    %p128 = por %p126, %p127
    %p130 = scmp.ne.s32.totalorder %s115, %s129
    %p131 = scmp.eq.s32.totalorder %s21, 0
    %p132 = por %p130, %p131
    %s134 = sadd.s32 %s133, 1
    %p137 = scmp.eq.s32.totalorder %s15, 1
    %p138 = scmp.ne.s32.totalorder %s133, %s135
    %p139 = scmp.eq.s32.totalorder %s15, 0
    %p140 = por %p138, %p139
    %p141 = scmp.ne.s32.totalorder %s133, %s135
    %p142 = scmp.eq.s32.totalorder %s20, 1
    %p143 = por %p141, %p142
    %p144 = scmp.ne.s32.totalorder %s135, %s136
    %p145 = scmp.eq.s32.totalorder %s20, 0
    %p146 = por %p144, %p145
    %p147 = scmp.ne.s32.totalorder %s135, %s136
    %p148 = scmp.eq.s32.totalorder %s21, 1
    %p149 = por %p147, %p148
    %p151 = scmp.ne.s32.totalorder %s136, %s150
    %p152 = scmp.eq.s32.totalorder %s21, 0
    %p153 = por %p151, %p152
    %s155 = sadd.s32 %s154, 1
    %p158 = scmp.eq.s32.totalorder %s15, 1
    %p159 = scmp.ne.s32.totalorder %s154, %s156
    %p160 = scmp.eq.s32.totalorder %s15, 0
    %p161 = por %p159, %p160
    %p162 = scmp.ne.s32.totalorder %s154, %s156
    %p163 = scmp.eq.s32.totalorder %s20, 1
    %p164 = por %p162, %p163
    %p165 = scmp.ne.s32.totalorder %s156, %s157
    %p166 = scmp.eq.s32.totalorder %s20, 0
    %p167 = por %p165, %p166
    %p168 = scmp.ne.s32.totalorder %s156, %s157
    %p169 = scmp.eq.s32.totalorder %s21, 1
    %p170 = por %p168, %p169
    %p172 = scmp.ne.s32.totalorder %s157, %s171
    %p173 = scmp.eq.s32.totalorder %s21, 0
    %p174 = por %p172, %p173
    %s176 = sadd.s32 %s175, 1
    %p179 = scmp.eq.s32.totalorder %s15, 1
    %p180 = scmp.ne.s32.totalorder %s175, %s177
    %p181 = scmp.eq.s32.totalorder %s15, 0
    %p182 = por %p180, %p181
    %p183 = scmp.ne.s32.totalorder %s175, %s177
    %p184 = scmp.eq.s32.totalorder %s20, 1
    %p185 = por %p183, %p184
    %p186 = scmp.ne.s32.totalorder %s177, %s178
    %p187 = scmp.eq.s32.totalorder %s20, 0
    %p188 = por %p186, %p187
    %p189 = scmp.ne.s32.totalorder %s177, %s178
    %p190 = scmp.eq.s32.totalorder %s21, 1
    %p191 = por %p189, %p190
    %p193 = scmp.ne.s32.totalorder %s178, %s192
    %p194 = scmp.eq.s32.totalorder %s21, 0
    %p195 = por %p193, %p194
    %s197 = sadd.s32 %s196, 1
    %p200 = scmp.eq.s32.totalorder %s15, 1
    %p201 = scmp.ne.s32.totalorder %s196, %s198
    %p202 = scmp.eq.s32.totalorder %s15, 0
    %p203 = por %p201, %p202
    %p204 = scmp.ne.s32.totalorder %s196, %s198
    %p205 = scmp.eq.s32.totalorder %s20, 1
    %p206 = por %p204, %p205
    %p207 = scmp.ne.s32.totalorder %s198, %s199
    %p208 = scmp.eq.s32.totalorder %s20, 0
    %p209 = por %p207, %p208
    %p210 = scmp.ne.s32.totalorder %s198, %s199
    %p211 = scmp.eq.s32.totalorder %s21, 1
    %p212 = por %p210, %p211
    %p214 = scmp.ne.s32.totalorder %s199, %s213
    %p215 = scmp.eq.s32.totalorder %s21, 0
    %p216 = por %p214, %p215
    %s217 = ssub.s32 %s15, %s22
    %p218 = scmp.eq.s32.totalorder %s217, 0
    %s220 = sadd.s32 %s219, 1
    %s221 = scalar_select %p218, %s219, %s220
    %p224 = pneg %p218
    %p225 = scmp.eq.s32.totalorder %s15, 1
    %p226 = por %p224, %p225
    %p227 = scmp.ne.s32.totalorder %s219, %s222
    %p228 = scmp.eq.s32.totalorder %s15, 0
    %p229 = por %p227, %p228
    %p230 = scmp.ne.s32.totalorder %s219, %s222
    %p231 = scmp.eq.s32.totalorder %s20, 1
    %p232 = por %p230, %p231
    %p233 = scmp.ne.s32.totalorder %s222, %s223
    %p234 = scmp.eq.s32.totalorder %s20, 0
    %p235 = por %p233, %p234
    %p236 = scmp.ne.s32.totalorder %s222, %s223
    %p237 = scmp.eq.s32.totalorder %s21, 1
    %p238 = por %p236, %p237
    %p240 = scmp.ne.s32.totalorder %s223, %s239
    %p241 = scmp.eq.s32.totalorder %s21, 0
    %p242 = por %p240, %p241
    %p243 = scmp.le.s32.totalorder 1, %s15
    %p244 = scmp.lt.s32.totalorder %s15, 3
    %p245 = pnand %p243, %p244
    %p246 = pneg %p245
    // Predicated region
    $region9: #{vision_forward.1} parent=5 // pred_check
      _
    $region10: #{vision_forward.1} parent=5 // pred_check_branch
      %248 = sbr.rel (%p245) target = $region12
    $region11: #{vision_forward.1} parent=5 // pred_region
      %s249 = ssub.s32 %s15, 1
      // Predicated region
      $region13: #{vision_forward.1} parent=11 // pred_check
        %p250 = pneg %p62
      $region14: #{vision_forward.1} parent=11 // pred_check_branch
        %252 = sbr.rel (%p250) target = $region16
      $region15: #{vision_forward.1} parent=11 // pred_region
        _
      $region16: #{vision_forward.1} parent=11 // pred_fallthru
        _
      // Predicated region
      $region17: #{vision_forward.1} parent=11 // pred_check
        %p253 = pneg %p83
      $region18: #{vision_forward.1} parent=11 // pred_check_branch
        %255 = sbr.rel (%p253) target = $region20
      $region19: #{vision_forward.1} parent=11 // pred_region
        _
      $region20: #{vision_forward.1} parent=11 // pred_fallthru
        _
      // Predicated region
      $region21: #{vision_forward.1} parent=11 // pred_check
        %p256 = pneg %p104
      $region22: #{vision_forward.1} parent=11 // pred_check_branch
        %258 = sbr.rel (%p256) target = $region24
      $region23: #{vision_forward.1} parent=11 // pred_region
        _
      $region24: #{vision_forward.1} parent=11 // pred_fallthru
        _
      // Predicated region
      $region25: #{vision_forward.1} parent=11 // pred_check
        %p259 = pneg %p125
      $region26: #{vision_forward.1} parent=11 // pred_check_branch
        %261 = sbr.rel (%p259) target = $region28
      $region27: #{vision_forward.1} parent=11 // pred_region
        _
      $region28: #{vision_forward.1} parent=11 // pred_fallthru
        _
      // Predicated region
      $region29: #{vision_forward.1} parent=11 // pred_check
        %p262 = pneg %p146
      $region30: #{vision_forward.1} parent=11 // pred_check_branch
        %264 = sbr.rel (%p262) target = $region32
      $region31: #{vision_forward.1} parent=11 // pred_region
        _
      $region32: #{vision_forward.1} parent=11 // pred_fallthru
        _
      // Predicated region
      $region33: #{vision_forward.1} parent=11 // pred_check
        %p265 = pneg %p167
      $region34: #{vision_forward.1} parent=11 // pred_check_branch
        %267 = sbr.rel (%p265) target = $region36
      $region35: #{vision_forward.1} parent=11 // pred_region
        _
      $region36: #{vision_forward.1} parent=11 // pred_fallthru
        _
      // Predicated region
      $region37: #{vision_forward.1} parent=11 // pred_check
        %p268 = pneg %p188
      $region38: #{vision_forward.1} parent=11 // pred_check_branch
        %270 = sbr.rel (%p268) target = $region40
      $region39: #{vision_forward.1} parent=11 // pred_region
        _
      $region40: #{vision_forward.1} parent=11 // pred_fallthru
        _
      // Predicated region
      $region41: #{vision_forward.1} parent=11 // pred_check
        %p271 = pneg %p209
      $region42: #{vision_forward.1} parent=11 // pred_check_branch
        %273 = sbr.rel (%p271) target = $region44
      $region43: #{vision_forward.1} parent=11 // pred_region
        _
      $region44: #{vision_forward.1} parent=11 // pred_fallthru
        _
    $region12: #{vision_forward.1} parent=5 // pred_fallthru
      _
    %p274 = scmp.lt.s32.totalorder %s15, 2
    // Predicated region
    $region45: #{vision_forward.1} parent=5 // pred_check
      %p275 = pneg %p274
    $region46: #{vision_forward.1} parent=5 // pred_check_branch
      %277 = sbr.rel (%p275) target = $region48
    $region47: #{vision_forward.1} parent=5 // pred_region
      // Predicated region
      $region49: #{vision_forward.1} parent=47 // pred_check
        %p278 = pneg %p35
      $region50: #{vision_forward.1} parent=47 // pred_check_branch
        %280 = sbr.rel (%p278) target = $region52
      $region51: #{vision_forward.1} parent=47 // pred_region
        %p281 = scmp.lt.s32.totalorder %s15, 1
        %s282 = scalar_select %p281, %s15, 1
        %s283 = smul.addr %s282, 4
        %s284 = smul.addr %s283, 8
        %s285 = scalar_lea.vmem %s0, %s284
      $region52: #{vision_forward.1} parent=47 // pred_fallthru
        _
    $region48: #{vision_forward.1} parent=5 // pred_fallthru
      _
    %p286 = scmp.le.s32.totalorder 1, %s15
    %p287 = scmp.lt.s32.totalorder %s15, 3
    %p288 = pnand %p286, %p287
    %p289 = pneg %p288
    // Predicated region
    $region53: #{vision_forward.1} parent=5 // pred_check
      _
    $region54: #{vision_forward.1} parent=5 // pred_check_branch
      %291 = sbr.rel (%p288) target = $region56
    $region55: #{vision_forward.1} parent=5 // pred_region
      %s292 = ssub.s32 %s15, 1
      %p293 = scmp.lt.s32.totalorder %s20, 1
      %s294 = scalar_select %p293, %s20, 1
      %s295 = smul.addr %s294, 4
      %s296 = smul.addr %s295, 8
      %s297 = scalar_lea.vmem %s0, %s296
      %p298 = pneg %p41
      %p299 = pneg %p38
      %p300 = pneg %p62
      %p301 = pneg %p59
      %p302 = pneg %p83
      %p303 = pneg %p80
      %p304 = pneg %p104
      %p305 = pneg %p101
      %p306 = pneg %p125
      %p307 = pneg %p122
      %p308 = pneg %p146
      %p309 = pneg %p143
      %p310 = pneg %p167
      %p311 = pneg %p164
      %p312 = pneg %p188
      %p313 = pneg %p185
      %p314 = pneg %p209
      %p315 = pneg %p206
      %p316 = pneg %p235
      %p317 = pneg %p232
      %p318 = scmp.lt.s32.totalorder %s20, 1
      %s319 = scalar_select %p318, %s20, 1
      %s320 = smul.addr %s319, 4
      %s321 = scalar_lea.vmem %s9, %s320
      %p322 = scmp.lt.s32.totalorder %s20, 1
      %s323 = scalar_select %p322, %s20, 1
      %s324 = smul.addr %s323, 4
      %s325 = smul.addr %s324, 8
      %s326 = scalar_lea.vmem %s0, %s325
      %p327 = scmp.lt.s32.totalorder %s20, 1
      %s328 = scalar_select %p327, %s20, 1
      %s329 = smul.addr %s328, 4
      %s330 = scalar_lea.vmem %s9, %s329
      %v332 = vld [vmem:[%s326] sm:$0xff]
      %v333 = vld [vmem:[%s326 + $0x8] sm:$0xff]
      %v334 = vld [vmem:[%s326 + $0x10] sm:$0xff]
      %v335 = vld [vmem:[%s326 + $0x18] sm:$0xf]
      %v336 = vpack.c.bf16 %v333, %v332
      %v337 = vpack.c.bf16 %v334, %v334
      %v338 = vld [vmem:[%s1] sm:$0xff]
      %v339 = vld [vmem:[%s1 + $0x8] sm:$0xff]
      %v340 = vld [vmem:[%s1 + $0x10] sm:$0xff]
      %v341 = vld [vmem:[%s1 + $0x18] sm:$0x33]
      %v342 = vpack.c.bf16 %v335, %v334
      %s343 = scalar_lea.vmem %s1, 32
      %v344 = vld [vmem:[%s343] sm:$0xff]
      %v345 = vld [vmem:[%s343 + $0x8] sm:$0xff]
      %v346 = vld [vmem:[%s343 + $0x10] sm:$0xff]
      %v347 = vld [vmem:[%s343 + $0x18] sm:$0x33]
      %vm348 = vsmask.f32 7424
      %v350 = vshrl.u32 %v336, 16
      %v352 = vshll.u32 %v336, 16
      %v354 = vrot.slane %v352, 1
      %v355 = vor.u32 %v350, %v354
      %v357 = vshll.u32 %v342, 16
      %v359 = vrot.slane %v357, 1
      %v360 = vsel %vm348, %v355, %v359
      %v361 = vshrl.u32 %v342, 16
      %v363 = vor.u32 %v361, %v359
      %v368 = vunpack.c.l.b16 %v344
      %v369 = vunpack.c.h.b16 %v344
      %v370 = vunpack.c.l.b16 %v345
      %v371 = vunpack.c.h.b16 %v345
      %v372 = vunpack.c.l.b16 %v346
      %v373 = vunpack.c.h.b16 %v346
      %v374 = vunpack.c.l.b16 %v347
      %v375 = vunpack.c.h.b16 %v347
      %v376 = vpack.c.b16 %v370, %v368
      %v377 = vpack.c.b16 %v371, %v369
      %v378 = vpack.c.b16 %v374, %v372
      %v379 = vpack.c.b16 %v375, %v373
      %vm382 = vcmask 228352
      %v384 = vsel %vm382, %v360, 0
      %v387 = vsel %vm382, %v363, 0
      %vm389 = vcmask 1045504
      %v391 = vsel %vm389, %v378, 0
      %v394 = vsel %vm389, %v379, 0
      %396 = vmatprep.subr.bf16.mxu0 %v377
      %397 = vmatpush1.bf16.msra.mxu0 %v376
      %398 = vmatprep.subr.bf16.mxu0 %v394
      %399 = vmatpush1.bf16.msra.mxu0 %v391
      %400 = vmatprep.subr.bf16.mxu0 0
      %401 = vmatpush1.bf16.msra.mxu0 0
      %402 = vmatprep.subr.bf16.mxu0 0
      %403 = vmatpush1.bf16.msra.mxu0 0
      %404 = vmatprep.subr.bf16.mxu0 0
      %405 = vmatpush1.bf16.msra.mxu0 0
      %406 = vmatprep.subr.bf16.mxu0 0
      %407 = vmatpush1.bf16.msra.mxu0 0
      %408 = vmatprep.subr.bf16.mxu0 0
      %409 = vmatpush1.bf16.msra.mxu0 0
      %410 = vmatprep.subr.bf16.mxu0 0
      %411 = vmatpush1.bf16.msra.mxu0 0
      %412 = vmatprep.subr.bf16.mxu0 0
      %413 = vmatpush1.bf16.msra.mxu0 0
      %414 = vmatprep.subr.bf16.mxu0 0
      %415 = vmatpush1.bf16.msra.mxu0 0
      %416 = vmatprep.subr.bf16.mxu0 0
      %417 = vmatpush1.bf16.msra.mxu0 0
      %418 = vmatprep.subr.bf16.mxu0 0
      %419 = vmatpush1.bf16.msra.mxu0 0
      %420 = vmatprep.subr.bf16.mxu0 0
      %421 = vmatpush1.bf16.msra.mxu0 0
      %422 = vmatprep.subr.bf16.mxu0 0
      %423 = vmatpush1.bf16.msra.mxu0 0
      %424 = vmatprep.subr.bf16.mxu0 0
      %425 = vmatpush1.bf16.msra.mxu0 0
      %426 = vmatprep.subr.bf16.mxu0 0
      %427 = vmatpush1.bf16.msra.mxu0 0
      %428 = vmatprep.mubr.bf16.mxu0 0
      %429 = vmatmul.mubr.bf16.gmra.mrb[0].mxu0 %v384
      %v430 = vpop.f32.mrb[0].mxu0
      %v431 = vadd.f32 0.0, %v430
      %v432 = vpop.f32.mrb[0].mxu0
      %v433 = vadd.f32 0.0, %v432
      %v434 = vpop.f32.mrb[0].mxu0
      %v435 = vadd.f32 0.0, %v434
      %v436 = vpop.f32.mrb[0].mxu0
      %v437 = vadd.f32 0.0, %v436
      %438 = vmatprep.mubr.bf16.mxu0 0
      %439 = vmatmul.mubr.bf16.gmra.mrb[0].mxu0 %v387
      %v440 = vpop.f32.mrb[0].mxu0
      %v441 = vadd.f32 0.0, %v440
      %v442 = vpop.f32.mrb[0].mxu0
      %v443 = vadd.f32 0.0, %v442
      %v444 = vpop.f32.mrb[0].mxu0
      %v445 = vpop.f32.mrb[0].mxu0
      %446 = vdwg.mxu0
      %v451 = vunpack.c.l.b16 %v338
      %v452 = vunpack.c.h.b16 %v338
      %v453 = vunpack.c.l.b16 %v339
      %v454 = vunpack.c.h.b16 %v339
      %v455 = vunpack.c.l.b16 %v340
      %v456 = vunpack.c.h.b16 %v340
      %v457 = vunpack.c.l.b16 %v341
      %v458 = vunpack.c.h.b16 %v341
      %v459 = vpack.c.b16 %v453, %v451
      %v460 = vpack.c.b16 %v454, %v452
      %v461 = vpack.c.b16 %v457, %v455
      %v462 = vpack.c.b16 %v458, %v456
      %v465 = vsel %vm382, %v336, 0
      %v468 = vsel %vm382, %v337, 0
      %v471 = vsel %vm389, %v461, 0
      %v474 = vsel %vm389, %v462, 0
      %476 = vmatprep.subr.bf16.mxu0 %v460
      %477 = vmatpush1.bf16.msra.mxu0 %v459
      %478 = vmatprep.subr.bf16.mxu0 %v474
      %479 = vmatpush1.bf16.msra.mxu0 %v471
      %480 = vmatprep.subr.bf16.mxu0 0
      %481 = vmatpush1.bf16.msra.mxu0 0
      %482 = vmatprep.subr.bf16.mxu0 0
      %483 = vmatpush1.bf16.msra.mxu0 0
      %484 = vmatprep.subr.bf16.mxu0 0
      %485 = vmatpush1.bf16.msra.mxu0 0
      %486 = vmatprep.subr.bf16.mxu0 0
      %487 = vmatpush1.bf16.msra.mxu0 0
      %488 = vmatprep.subr.bf16.mxu0 0
      %489 = vmatpush1.bf16.msra.mxu0 0
      %490 = vmatprep.subr.bf16.mxu0 0
      %491 = vmatpush1.bf16.msra.mxu0 0
      %492 = vmatprep.subr.bf16.mxu0 0
      %493 = vmatpush1.bf16.msra.mxu0 0
      %494 = vmatprep.subr.bf16.mxu0 0
      %495 = vmatpush1.bf16.msra.mxu0 0
      %496 = vmatprep.subr.bf16.mxu0 0
      %497 = vmatpush1.bf16.msra.mxu0 0
      %498 = vmatprep.subr.bf16.mxu0 0
      %499 = vmatpush1.bf16.msra.mxu0 0
      %500 = vmatprep.subr.bf16.mxu0 0
      %501 = vmatpush1.bf16.msra.mxu0 0
      %502 = vmatprep.subr.bf16.mxu0 0
      %503 = vmatpush1.bf16.msra.mxu0 0
      %504 = vmatprep.subr.bf16.mxu0 0
      %505 = vmatpush1.bf16.msra.mxu0 0
      %506 = vmatprep.subr.bf16.mxu0 0
      %507 = vmatpush1.bf16.msra.mxu0 0
      %508 = vmatprep.mubr.bf16.mxu0 0
      %509 = vmatmul.mubr.bf16.gmra.mrb[0].mxu0 %v465
      %v510 = vpop.f32.mrb[0].mxu0
      %v511 = vadd.f32 %v431, %v510
      %v512 = vpop.f32.mrb[0].mxu0
      %v513 = vadd.f32 %v433, %v512
      %v514 = vpop.f32.mrb[0].mxu0
      %v515 = vadd.f32 %v435, %v514
      %v516 = vpop.f32.mrb[0].mxu0
      %v517 = vadd.f32 %v437, %v516
      %518 = vmatprep.mubr.bf16.mxu0 0
      %519 = vmatmul.mubr.bf16.gmra.mrb[0].mxu0 %v468
      %v520 = vpop.f32.mrb[0].mxu0
      %v521 = vadd.f32 %v441, %v520
      %v522 = vpop.f32.mrb[0].mxu0
      %v523 = vadd.f32 %v443, %v522
      %v524 = vpop.f32.mrb[0].mxu0
      %v525 = vpop.f32.mrb[0].mxu0
      %526 = vdwg.mxu0
      %s527 = scalar_lea.vmem %s1, 64
      %v528 = vld [vmem:[%s527] sm:$0xff]
      %v529 = vld [vmem:[%s527 + $0x8] sm:$0xff]
      %v530 = vld [vmem:[%s527 + $0x10] sm:$0xff]
      %v531 = vld [vmem:[%s527 + $0x18] sm:$0x33]
      %vm534 = vcmask 1046528
      %v535 = vrot.slane %v336, 1
      %v536 = vrot.slane %v342, 1
      %v537 = vsel %vm534, %v535, %v536
      %v542 = vunpack.c.l.b16 %v528
      %v543 = vunpack.c.h.b16 %v528
      %v544 = vunpack.c.l.b16 %v529
      %v545 = vunpack.c.h.b16 %v529
      %v546 = vunpack.c.l.b16 %v530
      %v547 = vunpack.c.h.b16 %v530
      %v548 = vunpack.c.l.b16 %v531
      %v549 = vunpack.c.h.b16 %v531
      %v550 = vpack.c.b16 %v544, %v542
      %v551 = vpack.c.b16 %v545, %v543
      %v552 = vpack.c.b16 %v548, %v546
      %v553 = vpack.c.b16 %v549, %v547
      %v557 = vsel %vm382, %v537, 0
      %v560 = vsel %vm382, %v536, 0
      %v563 = vsel %vm389, %v552, 0
      %v566 = vsel %vm389, %v553, 0
      %568 = vmatprep.subr.bf16.mxu0 %v551
      %569 = vmatpush1.bf16.msra.mxu0 %v550
      %570 = vmatprep.subr.bf16.mxu0 %v566
      %571 = vmatpush1.bf16.msra.mxu0 %v563
      %572 = vmatprep.subr.bf16.mxu0 0
      %573 = vmatpush1.bf16.msra.mxu0 0
      %574 = vmatprep.subr.bf16.mxu0 0
      %575 = vmatpush1.bf16.msra.mxu0 0
      %576 = vmatprep.subr.bf16.mxu0 0
      %577 = vmatpush1.bf16.msra.mxu0 0
      %578 = vmatprep.subr.bf16.mxu0 0
      %579 = vmatpush1.bf16.msra.mxu0 0
      %580 = vmatprep.subr.bf16.mxu0 0
      %581 = vmatpush1.bf16.msra.mxu0 0
      %582 = vmatprep.subr.bf16.mxu0 0
      %583 = vmatpush1.bf16.msra.mxu0 0
      %584 = vmatprep.subr.bf16.mxu0 0
      %585 = vmatpush1.bf16.msra.mxu0 0
      %586 = vmatprep.subr.bf16.mxu0 0
      %587 = vmatpush1.bf16.msra.mxu0 0
      %588 = vmatprep.subr.bf16.mxu0 0
      %589 = vmatpush1.bf16.msra.mxu0 0
      %590 = vmatprep.subr.bf16.mxu0 0
      %591 = vmatpush1.bf16.msra.mxu0 0
      %592 = vmatprep.subr.bf16.mxu0 0
      %593 = vmatpush1.bf16.msra.mxu0 0
      %594 = vmatprep.subr.bf16.mxu0 0
      %595 = vmatpush1.bf16.msra.mxu0 0
      %596 = vmatprep.subr.bf16.mxu0 0
      %597 = vmatpush1.bf16.msra.mxu0 0
      %598 = vmatprep.subr.bf16.mxu0 0
      %599 = vmatpush1.bf16.msra.mxu0 0
      %600 = vmatprep.mubr.bf16.mxu0 0
      %601 = vmatmul.mubr.bf16.gmra.mrb[0].mxu0 %v557
      %v602 = vpop.f32.mrb[0].mxu0
      %v603 = vadd.f32 0.0, %v602
      %v604 = vpop.f32.mrb[0].mxu0
      %v605 = vadd.f32 0.0, %v604
      %v606 = vpop.f32.mrb[0].mxu0
      %v607 = vadd.f32 0.0, %v606
      %v608 = vpop.f32.mrb[0].mxu0
      %v609 = vadd.f32 0.0, %v608
      %610 = vmatprep.mubr.bf16.mxu0 0
      %611 = vmatmul.mubr.bf16.gmra.mrb[0].mxu0 %v560
      %v612 = vpop.f32.mrb[0].mxu0
      %v613 = vadd.f32 0.0, %v612
      %v614 = vpop.f32.mrb[0].mxu0
      %v615 = vadd.f32 0.0, %v614
      %v616 = vpop.f32.mrb[0].mxu0
      %v617 = vpop.f32.mrb[0].mxu0
      %618 = vdwg.mxu0
      %v619 = vadd.f32 %v511, %v603
      %v620 = vadd.f32 %v513, %v605
      %v621 = vadd.f32 %v515, %v607
      %v622 = vadd.f32 %v517, %v609
      %v623 = vadd.f32 %v521, %v613
      %v624 = vadd.f32 %v523, %v615
      %s625 = scalar_lea.vmem %s1, 96
      %v626 = vld [vmem:[%s625] sm:$0xff]
      %v627 = vld [vmem:[%s625 + $0x8] sm:$0xff]
      %v628 = vld [vmem:[%s625 + $0x10] sm:$0xff]
      %v629 = vld [vmem:[%s625 + $0x18] sm:$0x33]
      %vm630 = vsmask.f32 6400
      %v631 = vrot.slane %v350, 1
      %v632 = vrot.slane %v352, 2
      %v633 = vor.u32 %v631, %v632
      %v634 = vrot.slane %v361, 1
      %v635 = vrot.slane %v357, 2
      %v636 = vor.u32 %v634, %v635
      %v637 = vsel %vm630, %v633, %v636
      %v642 = vunpack.c.l.b16 %v626
      %v643 = vunpack.c.h.b16 %v626
      %v644 = vunpack.c.l.b16 %v627
      %v645 = vunpack.c.h.b16 %v627
      %v646 = vunpack.c.l.b16 %v628
      %v647 = vunpack.c.h.b16 %v628
      %v648 = vunpack.c.l.b16 %v629
      %v649 = vunpack.c.h.b16 %v629
      %v650 = vpack.c.b16 %v644, %v642
      %v651 = vpack.c.b16 %v645, %v643
      %v652 = vpack.c.b16 %v648, %v646
      %v653 = vpack.c.b16 %v649, %v647
      %v657 = vsel %vm382, %v637, 0
      %v660 = vsel %vm382, %v636, 0
      %v663 = vsel %vm389, %v652, 0
      %v666 = vsel %vm389, %v653, 0
      %668 = vmatprep.subr.bf16.mxu0 %v651
      %669 = vmatpush1.bf16.msra.mxu0 %v650
      %670 = vmatprep.subr.bf16.mxu0 %v666
      %671 = vmatpush1.bf16.msra.mxu0 %v663
      %672 = vmatprep.subr.bf16.mxu0 0
      %673 = vmatpush1.bf16.msra.mxu0 0
      %674 = vmatprep.subr.bf16.mxu0 0
      %675 = vmatpush1.bf16.msra.mxu0 0
      %676 = vmatprep.subr.bf16.mxu0 0
      %677 = vmatpush1.bf16.msra.mxu0 0
      %678 = vmatprep.subr.bf16.mxu0 0
      %679 = vmatpush1.bf16.msra.mxu0 0
      %680 = vmatprep.subr.bf16.mxu0 0
      %681 = vmatpush1.bf16.msra.mxu0 0
      %682 = vmatprep.subr.bf16.mxu0 0
      %683 = vmatpush1.bf16.msra.mxu0 0
      %684 = vmatprep.subr.bf16.mxu0 0
      %685 = vmatpush1.bf16.msra.mxu0 0
      %686 = vmatprep.subr.bf16.mxu0 0
      %687 = vmatpush1.bf16.msra.mxu0 0
      %688 = vmatprep.subr.bf16.mxu0 0
      %689 = vmatpush1.bf16.msra.mxu0 0
      %690 = vmatprep.subr.bf16.mxu0 0
      %691 = vmatpush1.bf16.msra.mxu0 0
      %692 = vmatprep.subr.bf16.mxu0 0
      %693 = vmatpush1.bf16.msra.mxu0 0
      %694 = vmatprep.subr.bf16.mxu0 0
      %695 = vmatpush1.bf16.msra.mxu0 0
      %696 = vmatprep.subr.bf16.mxu0 0
      %697 = vmatpush1.bf16.msra.mxu0 0
      %698 = vmatprep.subr.bf16.mxu0 0
      %699 = vmatpush1.bf16.msra.mxu0 0
      %700 = vmatprep.mubr.bf16.mxu0 0
      %701 = vmatmul.mubr.bf16.gmra.mrb[0].mxu0 %v657
      %v702 = vpop.f32.mrb[0].mxu0
      %v703 = vadd.f32 0.0, %v702
      %v704 = vpop.f32.mrb[0].mxu0
      %v705 = vadd.f32 0.0, %v704
      %v706 = vpop.f32.mrb[0].mxu0
      %v707 = vadd.f32 0.0, %v706
      %v708 = vpop.f32.mrb[0].mxu0
      %v709 = vadd.f32 0.0, %v708
      %710 = vmatprep.mubr.bf16.mxu0 0
      %711 = vmatmul.mubr.bf16.gmra.mrb[0].mxu0 %v660
      %v712 = vpop.f32.mrb[0].mxu0
      %v713 = vadd.f32 0.0, %v712
      %v714 = vpop.f32.mrb[0].mxu0
      %v715 = vadd.f32 0.0, %v714
      %v716 = vpop.f32.mrb[0].mxu0
      %v717 = vpop.f32.mrb[0].mxu0
      %718 = vdwg.mxu0
      %v719 = vadd.f32 %v619, %v703
      %v720 = vadd.f32 %v620, %v705
      %v721 = vadd.f32 %v621, %v707
      %v722 = vadd.f32 %v622, %v709
      %v723 = vadd.f32 %v623, %v713
      %v724 = vadd.f32 %v624, %v715
      %s725 = scalar_lea.vmem %s1, 128
      %v726 = vld [vmem:[%s725] sm:$0xff]
      %v727 = vld [vmem:[%s725 + $0x8] sm:$0xff]
      %v728 = vld [vmem:[%s725 + $0x10] sm:$0xff]
      %v729 = vld [vmem:[%s725 + $0x18] sm:$0x33]
      %vm730 = vcmask 1045504
      %v731 = vrot.slane %v336, 2
      %v732 = vrot.slane %v342, 2
      %v733 = vsel %vm730, %v731, %v732
      %v738 = vunpack.c.l.b16 %v726
      %v739 = vunpack.c.h.b16 %v726
      %v740 = vunpack.c.l.b16 %v727
      %v741 = vunpack.c.h.b16 %v727
      %v742 = vunpack.c.l.b16 %v728
      %v743 = vunpack.c.h.b16 %v728
      %v744 = vunpack.c.l.b16 %v729
      %v745 = vunpack.c.h.b16 %v729
      %v746 = vpack.c.b16 %v740, %v738
      %v747 = vpack.c.b16 %v741, %v739
      %v748 = vpack.c.b16 %v744, %v742
      %v749 = vpack.c.b16 %v745, %v743
      %v753 = vsel %vm382, %v733, 0
      %v756 = vsel %vm382, %v732, 0
      %v759 = vsel %vm389, %v748, 0
      %v762 = vsel %vm389, %v749, 0
      %764 = vmatprep.subr.bf16.mxu0 %v747
      %765 = vmatpush1.bf16.msra.mxu0 %v746
      %766 = vmatprep.subr.bf16.mxu0 %v762
      %767 = vmatpush1.bf16.msra.mxu0 %v759
      %768 = vmatprep.subr.bf16.mxu0 0
      %769 = vmatpush1.bf16.msra.mxu0 0
      %770 = vmatprep.subr.bf16.mxu0 0
      %771 = vmatpush1.bf16.msra.mxu0 0
      %772 = vmatprep.subr.bf16.mxu0 0
      %773 = vmatpush1.bf16.msra.mxu0 0
      %774 = vmatprep.subr.bf16.mxu0 0
      %775 = vmatpush1.bf16.msra.mxu0 0
      %776 = vmatprep.subr.bf16.mxu0 0
      %777 = vmatpush1.bf16.msra.mxu0 0
      %778 = vmatprep.subr.bf16.mxu0 0
      %779 = vmatpush1.bf16.msra.mxu0 0
      %780 = vmatprep.subr.bf16.mxu0 0
      %781 = vmatpush1.bf16.msra.mxu0 0
      %782 = vmatprep.subr.bf16.mxu0 0
      %783 = vmatpush1.bf16.msra.mxu0 0
      %784 = vmatprep.subr.bf16.mxu0 0
      %785 = vmatpush1.bf16.msra.mxu0 0
      %786 = vmatprep.subr.bf16.mxu0 0
      %787 = vmatpush1.bf16.msra.mxu0 0
      %788 = vmatprep.subr.bf16.mxu0 0
      %789 = vmatpush1.bf16.msra.mxu0 0
      %790 = vmatprep.subr.bf16.mxu0 0
      %791 = vmatpush1.bf16.msra.mxu0 0
      %792 = vmatprep.subr.bf16.mxu0 0
      %793 = vmatpush1.bf16.msra.mxu0 0
      %794 = vmatprep.subr.bf16.mxu0 0
      %795 = vmatpush1.bf16.msra.mxu0 0
      %796 = vmatprep.mubr.bf16.mxu0 0
      %797 = vmatmul.mubr.bf16.gmra.mrb[0].mxu0 %v753
      %v798 = vpop.f32.mrb[0].mxu0
      %v799 = vadd.f32 0.0, %v798
      %v800 = vpop.f32.mrb[0].mxu0
      %v801 = vadd.f32 0.0, %v800
      %v802 = vpop.f32.mrb[0].mxu0
      %v803 = vadd.f32 0.0, %v802
      %v804 = vpop.f32.mrb[0].mxu0
      %v805 = vadd.f32 0.0, %v804
      %806 = vmatprep.mubr.bf16.mxu0 0
      %807 = vmatmul.mubr.bf16.gmra.mrb[0].mxu0 %v756
      %v808 = vpop.f32.mrb[0].mxu0
      %v809 = vadd.f32 0.0, %v808
      %v810 = vpop.f32.mrb[0].mxu0
      %v811 = vadd.f32 0.0, %v810
      %v812 = vpop.f32.mrb[0].mxu0
      %v813 = vpop.f32.mrb[0].mxu0
      %814 = vdwg.mxu0
      %v815 = vadd.f32 %v719, %v799
      %v816 = vadd.f32 %v720, %v801
      %v817 = vadd.f32 %v721, %v803
      %v818 = vadd.f32 %v722, %v805
      %v819 = vadd.f32 %v723, %v809
      %v820 = vadd.f32 %v724, %v811
      %v821 = vld [vmem:[%s7] sm:$0xff]
      %v822 = vld [vmem:[%s7 + $0x8] sm:$0xf]
      %vm823 = vcmask 195584
      %v825 = vsel %vm823, %v821, 0
      %v828 = vsel %vm823, %v822, 0
      %830 = vmatprep.subr.mxu0 %v816
      %831 = vmatpush1.msra.mxu0 %v815
      %832 = vmatprep.subr.mxu0 %v818
      %833 = vmatpush1.msra.mxu0 %v817
      %834 = vmatprep.subr.mxu0 %v820
      %835 = vmatpush1.msra.mxu0 %v819
      %836 = vmatprep.subr.mxu0 0.0
      %837 = vmatpush1.msra.mxu0 0.0
      %838 = vmatprep.subr.mxu0 0.0
      %839 = vmatpush1.msra.mxu0 0.0
      %840 = vmatprep.subr.mxu0 0.0
      %841 = vmatpush1.msra.mxu0 0.0
      %842 = vmatprep.subr.mxu0 0.0
      %843 = vmatpush1.msra.mxu0 0.0
      %844 = vmatprep.subr.mxu0 0.0
      %845 = vmatpush1.msra.mxu0 0.0
      %846 = vmatprep.subr.mxu0 0.0
      %847 = vmatpush1.msra.mxu0 0.0
      %848 = vmatprep.subr.mxu0 0.0
      %849 = vmatpush1.msra.mxu0 0.0
      %850 = vmatprep.subr.mxu0 0.0
      %851 = vmatpush1.msra.mxu0 0.0
      %852 = vmatprep.subr.mxu0 0.0
      %853 = vmatpush1.msra.mxu0 0.0
      %854 = vmatprep.subr.mxu0 0.0
      %855 = vmatpush1.msra.mxu0 0.0
      %856 = vmatprep.subr.mxu0 0.0
      %857 = vmatpush1.msra.mxu0 0.0
      %858 = vmatprep.subr.mxu0 0.0
      %859 = vmatpush1.msra.mxu0 0.0
      %860 = vmatprep.subr.mxu0 0.0
      %861 = vmatpush1.msra.mxu0 0.0
      %862 = vmatprep.subr.mxu0 0.0
      %863 = vmatpush1.msra.mxu0 0.0
      %864 = vmatprep.subr.mxu0 0.0
      %865 = vmatpush1.msra.mxu0 0.0
      %866 = vmatprep.subr.mxu0 0.0
      %867 = vmatpush1.msra.mxu0 0.0
      %868 = vmatprep.subr.mxu0 0.0
      %869 = vmatpush1.msra.mxu0 0.0
      %870 = vmatprep.subr.mxu0 0.0
      %871 = vmatpush1.msra.mxu0 0.0
      %872 = vmatprep.subr.mxu0 0.0
      %873 = vmatpush1.msra.mxu0 0.0
      %874 = vmatprep.subr.mxu0 0.0
      %875 = vmatpush1.msra.mxu0 0.0
      %876 = vmatprep.subr.mxu0 0.0
      %877 = vmatpush1.msra.mxu0 0.0
      %878 = vmatprep.subr.mxu0 0.0
      %879 = vmatpush1.msra.mxu0 0.0
      %880 = vmatprep.subr.mxu0 0.0
      %881 = vmatpush1.msra.mxu0 0.0
      %882 = vmatprep.subr.mxu0 0.0
      %883 = vmatpush1.msra.mxu0 0.0
      %884 = vmatprep.subr.mxu0 0.0
      %885 = vmatpush1.msra.mxu0 0.0
      %886 = vmatprep.subr.mxu0 0.0
      %887 = vmatpush1.msra.mxu0 0.0
      %888 = vmatprep.subr.mxu0 0.0
      %889 = vmatpush1.msra.mxu0 0.0
      %890 = vmatprep.subr.mxu0 0.0
      %891 = vmatpush1.msra.mxu0 0.0
      %892 = vmatprep.subr.mxu0 0.0
      %893 = vmatpush1.msra.mxu0 0.0
      %894 = vmatprep.mubr.f32.mxu0 0.0
      %895 = vmatmul.mubr.f32.gmra.mrb[0].mxu0 %v825
      %v896 = vpop.f32.mrb[0].mxu0
      %v897 = vadd.f32 0.0, %v896
      %v898 = vpop.f32.mrb[0].mxu0
      %v899 = vadd.f32 0.0, %v898
      %900 = vmatprep.mubr.f32.mxu0 0.0
      %901 = vmatmul.mubr.f32.gmra.mrb[0].mxu0 %v828
      %v902 = vpop.f32.mrb[0].mxu0
      %v903 = vadd.f32 0.0, %v902
      %v904 = vpop.f32.mrb[0].mxu0
      %v905 = vadd.f32 0.0, %v904
      %906 = vdwg.mxu0
      %s907 = scalar_lea.vmem %s7, 16
      %v908 = vld [vmem:[%s907] sm:$0xff]
      %v909 = vld [vmem:[%s907 + $0x8] sm:$0xf]
      %v911 = vsel %vm823, %v908, 0
      %v914 = vsel %vm823, %v909, 0
      %916 = vmatprep.subr.mxu0 %v816
      %917 = vmatpush1.msra.mxu0 %v815
      %918 = vmatprep.subr.mxu0 %v818
      %919 = vmatpush1.msra.mxu0 %v817
      %920 = vmatprep.subr.mxu0 %v820
      %921 = vmatpush1.msra.mxu0 %v819
      %922 = vmatprep.subr.mxu0 0.0
      %923 = vmatpush1.msra.mxu0 0.0
      %924 = vmatprep.subr.mxu0 0.0
      %925 = vmatpush1.msra.mxu0 0.0
      %926 = vmatprep.subr.mxu0 0.0
      %927 = vmatpush1.msra.mxu0 0.0
      %928 = vmatprep.subr.mxu0 0.0
      %929 = vmatpush1.msra.mxu0 0.0
      %930 = vmatprep.subr.mxu0 0.0
      %931 = vmatpush1.msra.mxu0 0.0
      %932 = vmatprep.subr.mxu0 0.0
      %933 = vmatpush1.msra.mxu0 0.0
      %934 = vmatprep.subr.mxu0 0.0
      %935 = vmatpush1.msra.mxu0 0.0
      %936 = vmatprep.subr.mxu0 0.0
      %937 = vmatpush1.msra.mxu0 0.0
      %938 = vmatprep.subr.mxu0 0.0
      %939 = vmatpush1.msra.mxu0 0.0
      %940 = vmatprep.subr.mxu0 0.0
      %941 = vmatpush1.msra.mxu0 0.0
      %942 = vmatprep.subr.mxu0 0.0
      %943 = vmatpush1.msra.mxu0 0.0
      %944 = vmatprep.subr.mxu0 0.0
      %945 = vmatpush1.msra.mxu0 0.0
      %946 = vmatprep.subr.mxu0 0.0
      %947 = vmatpush1.msra.mxu0 0.0
      %948 = vmatprep.subr.mxu0 0.0
      %949 = vmatpush1.msra.mxu0 0.0
      %950 = vmatprep.subr.mxu0 0.0
      %951 = vmatpush1.msra.mxu0 0.0
      %952 = vmatprep.subr.mxu0 0.0
      %953 = vmatpush1.msra.mxu0 0.0
      %954 = vmatprep.subr.mxu0 0.0
      %955 = vmatpush1.msra.mxu0 0.0
      %956 = vmatprep.subr.mxu0 0.0
      %957 = vmatpush1.msra.mxu0 0.0
      %958 = vmatprep.subr.mxu0 0.0
      %959 = vmatpush1.msra.mxu0 0.0
      %960 = vmatprep.subr.mxu0 0.0
      %961 = vmatpush1.msra.mxu0 0.0
      %962 = vmatprep.subr.mxu0 0.0
      %963 = vmatpush1.msra.mxu0 0.0
      %964 = vmatprep.subr.mxu0 0.0
      %965 = vmatpush1.msra.mxu0 0.0
      %966 = vmatprep.subr.mxu0 0.0
      %967 = vmatpush1.msra.mxu0 0.0
      %968 = vmatprep.subr.mxu0 0.0
      %969 = vmatpush1.msra.mxu0 0.0
      %970 = vmatprep.subr.mxu0 0.0
      %971 = vmatpush1.msra.mxu0 0.0
      %972 = vmatprep.subr.mxu0 0.0
      %973 = vmatpush1.msra.mxu0 0.0
      %974 = vmatprep.subr.mxu0 0.0
      %975 = vmatpush1.msra.mxu0 0.0
      %976 = vmatprep.subr.mxu0 0.0
      %977 = vmatpush1.msra.mxu0 0.0
      %978 = vmatprep.subr.mxu0 0.0
      %979 = vmatpush1.msra.mxu0 0.0
      %980 = vmatprep.mubr.f32.mxu0 0.0
      %981 = vmatmul.mubr.f32.gmra.mrb[0].mxu0 %v911
      %v982 = vpop.f32.mrb[0].mxu0
      %v983 = vadd.f32 0.0, %v982
      %v984 = vpop.f32.mrb[0].mxu0
      %v985 = vadd.f32 0.0, %v984
      %986 = vmatprep.mubr.f32.mxu0 0.0
      %987 = vmatmul.mubr.f32.gmra.mrb[0].mxu0 %v914
      %v988 = vpop.f32.mrb[0].mxu0
      %v989 = vadd.f32 0.0, %v988
      %v990 = vpop.f32.mrb[0].mxu0
      %v991 = vadd.f32 0.0, %v990
      %992 = vdwg.mxu0
      %v993 = vmax.f32 %v897, %v983
      %v994 = vmax.f32 %v899, %v985
      %v995 = vmax.f32 %v903, %v989
      %v996 = vmax.f32 %v905, %v991
      %s997 = scalar_lea.vmem %s1, 160
      %v998 = vld [vmem:[%s997] sm:$0xff]
      %v999 = vld [vmem:[%s997 + $0x8] sm:$0xff]
      %v1000 = vld [vmem:[%s997 + $0x10] sm:$0xff]
      %v1001 = vld [vmem:[%s997 + $0x18] sm:$0x33]
      %s1002 = scalar_lea.vmem %s1, 192
      %v1003 = vld [vmem:[%s1002] sm:$0xff]
      %v1004 = vld [vmem:[%s1002 + $0x8] sm:$0xff]
      %v1005 = vld [vmem:[%s1002 + $0x10] sm:$0xff]
      %v1006 = vld [vmem:[%s1002 + $0x18] sm:$0x33]
      %v1011 = vunpack.c.l.b16 %v1003
      %v1012 = vunpack.c.h.b16 %v1003
      %v1013 = vunpack.c.l.b16 %v1004
      %v1014 = vunpack.c.h.b16 %v1004
      %v1015 = vunpack.c.l.b16 %v1005
      %v1016 = vunpack.c.h.b16 %v1005
      %v1017 = vunpack.c.l.b16 %v1006
      %v1018 = vunpack.c.h.b16 %v1006
      %v1019 = vpack.c.b16 %v1013, %v1011
      %v1020 = vpack.c.b16 %v1014, %v1012
      %v1021 = vpack.c.b16 %v1017, %v1015
      %v1022 = vpack.c.b16 %v1018, %v1016
      %v1026 = vsel %vm389, %v1021, 0
      %v1029 = vsel %vm389, %v1022, 0
      %1031 = vmatprep.subr.bf16.mxu0 %v1020
      %1032 = vmatpush1.bf16.msra.mxu0 %v1019
      %1033 = vmatprep.subr.bf16.mxu0 %v1029
      %1034 = vmatpush1.bf16.msra.mxu0 %v1026
      %1035 = vmatprep.subr.bf16.mxu0 0
      %1036 = vmatpush1.bf16.msra.mxu0 0
      %1037 = vmatprep.subr.bf16.mxu0 0
      %1038 = vmatpush1.bf16.msra.mxu0 0
      %1039 = vmatprep.subr.bf16.mxu0 0
      %1040 = vmatpush1.bf16.msra.mxu0 0
      %1041 = vmatprep.subr.bf16.mxu0 0
      %1042 = vmatpush1.bf16.msra.mxu0 0
      %1043 = vmatprep.subr.bf16.mxu0 0
      %1044 = vmatpush1.bf16.msra.mxu0 0
      %1045 = vmatprep.subr.bf16.mxu0 0
      %1046 = vmatpush1.bf16.msra.mxu0 0
      %1047 = vmatprep.subr.bf16.mxu0 0
      %1048 = vmatpush1.bf16.msra.mxu0 0
      %1049 = vmatprep.subr.bf16.mxu0 0
      %1050 = vmatpush1.bf16.msra.mxu0 0
      %1051 = vmatprep.subr.bf16.mxu0 0
      %1052 = vmatpush1.bf16.msra.mxu0 0
      %1053 = vmatprep.subr.bf16.mxu0 0
      %1054 = vmatpush1.bf16.msra.mxu0 0
      %1055 = vmatprep.subr.bf16.mxu0 0
      %1056 = vmatpush1.bf16.msra.mxu0 0
      %1057 = vmatprep.subr.bf16.mxu0 0
      %1058 = vmatpush1.bf16.msra.mxu0 0
      %1059 = vmatprep.subr.bf16.mxu0 0
      %1060 = vmatpush1.bf16.msra.mxu0 0
      %1061 = vmatprep.subr.bf16.mxu0 0
      %1062 = vmatpush1.bf16.msra.mxu0 0
      %1063 = vmatprep.mubr.bf16.mxu0 0
      %1064 = vmatmul.mubr.bf16.gmra.mrb[0].mxu0 %v384
      %v1065 = vpop.f32.mrb[0].mxu0
      %v1066 = vadd.f32 0.0, %v1065
      %v1067 = vpop.f32.mrb[0].mxu0
      %v1068 = vadd.f32 0.0, %v1067
      %v1069 = vpop.f32.mrb[0].mxu0
      %v1070 = vadd.f32 0.0, %v1069
      %v1071 = vpop.f32.mrb[0].mxu0
      %v1072 = vadd.f32 0.0, %v1071
      %1073 = vmatprep.mubr.bf16.mxu0 0
      %1074 = vmatmul.mubr.bf16.gmra.mrb[0].mxu0 %v387
      %v1075 = vpop.f32.mrb[0].mxu0
      %v1076 = vadd.f32 0.0, %v1075
      %v1077 = vpop.f32.mrb[0].mxu0
      %v1078 = vadd.f32 0.0, %v1077
      %v1079 = vpop.f32.mrb[0].mxu0
      %v1080 = vpop.f32.mrb[0].mxu0
      %1081 = vdwg.mxu0
      %v1086 = vunpack.c.l.b16 %v998
      %v1087 = vunpack.c.h.b16 %v998
      %v1088 = vunpack.c.l.b16 %v999
      %v1089 = vunpack.c.h.b16 %v999
      %v1090 = vunpack.c.l.b16 %v1000
      %v1091 = vunpack.c.h.b16 %v1000
      %v1092 = vunpack.c.l.b16 %v1001
      %v1093 = vunpack.c.h.b16 %v1001
      %v1094 = vpack.c.b16 %v1088, %v1086
      %v1095 = vpack.c.b16 %v1089, %v1087
      %v1096 = vpack.c.b16 %v1092, %v1090
      %v1097 = vpack.c.b16 %v1093, %v1091
      %v1101 = vsel %vm389, %v1096, 0
      %v1104 = vsel %vm389, %v1097, 0
      %1106 = vmatprep.subr.bf16.mxu0 %v1095
      %1107 = vmatpush1.bf16.msra.mxu0 %v1094
      %1108 = vmatprep.subr.bf16.mxu0 %v1104
      %1109 = vmatpush1.bf16.msra.mxu0 %v1101
      %1110 = vmatprep.subr.bf16.mxu0 0
      %1111 = vmatpush1.bf16.msra.mxu0 0
      %1112 = vmatprep.subr.bf16.mxu0 0
      %1113 = vmatpush1.bf16.msra.mxu0 0
      %1114 = vmatprep.subr.bf16.mxu0 0
      %1115 = vmatpush1.bf16.msra.mxu0 0
      %1116 = vmatprep.subr.bf16.mxu0 0
      %1117 = vmatpush1.bf16.msra.mxu0 0
      %1118 = vmatprep.subr.bf16.mxu0 0
      %1119 = vmatpush1.bf16.msra.mxu0 0
      %1120 = vmatprep.subr.bf16.mxu0 0
      %1121 = vmatpush1.bf16.msra.mxu0 0
      %1122 = vmatprep.subr.bf16.mxu0 0
      %1123 = vmatpush1.bf16.msra.mxu0 0
      %1124 = vmatprep.subr.bf16.mxu0 0
      %1125 = vmatpush1.bf16.msra.mxu0 0
      %1126 = vmatprep.subr.bf16.mxu0 0
      %1127 = vmatpush1.bf16.msra.mxu0 0
      %1128 = vmatprep.subr.bf16.mxu0 0
      %1129 = vmatpush1.bf16.msra.mxu0 0
      %1130 = vmatprep.subr.bf16.mxu0 0
      %1131 = vmatpush1.bf16.msra.mxu0 0
      %1132 = vmatprep.subr.bf16.mxu0 0
      %1133 = vmatpush1.bf16.msra.mxu0 0
      %1134 = vmatprep.subr.bf16.mxu0 0
      %1135 = vmatpush1.bf16.msra.mxu0 0
      %1136 = vmatprep.subr.bf16.mxu0 0
      %1137 = vmatpush1.bf16.msra.mxu0 0
      %1138 = vmatprep.mubr.bf16.mxu0 0
      %1139 = vmatmul.mubr.bf16.gmra.mrb[0].mxu0 %v465
      %v1140 = vpop.f32.mrb[0].mxu0
      %v1141 = vadd.f32 %v1066, %v1140
      %v1142 = vpop.f32.mrb[0].mxu0
      %v1143 = vadd.f32 %v1068, %v1142
      %v1144 = vpop.f32.mrb[0].mxu0
      %v1145 = vadd.f32 %v1070, %v1144
      %v1146 = vpop.f32.mrb[0].mxu0
      %v1147 = vadd.f32 %v1072, %v1146
      %1148 = vmatprep.mubr.bf16.mxu0 0
      %1149 = vmatmul.mubr.bf16.gmra.mrb[0].mxu0 %v468
      %v1150 = vpop.f32.mrb[0].mxu0
      %v1151 = vadd.f32 %v1076, %v1150
      %v1152 = vpop.f32.mrb[0].mxu0
      %v1153 = vadd.f32 %v1078, %v1152
      %v1154 = vpop.f32.mrb[0].mxu0
      %v1155 = vpop.f32.mrb[0].mxu0
      %1156 = vdwg.mxu0
      %s1157 = scalar_lea.vmem %s1, 224
      %v1158 = vld [vmem:[%s1157] sm:$0xff]
      %v1159 = vld [vmem:[%s1157 + $0x8] sm:$0xff]
      %v1160 = vld [vmem:[%s1157 + $0x10] sm:$0xff]
      %v1161 = vld [vmem:[%s1157 + $0x18] sm:$0x33]
      %v1166 = vunpack.c.l.b16 %v1158
      %v1167 = vunpack.c.h.b16 %v1158
      %v1168 = vunpack.c.l.b16 %v1159
      %v1169 = vunpack.c.h.b16 %v1159
      %v1170 = vunpack.c.l.b16 %v1160
      %v1171 = vunpack.c.h.b16 %v1160
      %v1172 = vunpack.c.l.b16 %v1161
      %v1173 = vunpack.c.h.b16 %v1161
      %v1174 = vpack.c.b16 %v1168, %v1166
      %v1175 = vpack.c.b16 %v1169, %v1167
      %v1176 = vpack.c.b16 %v1172, %v1170
      %v1177 = vpack.c.b16 %v1173, %v1171
      %v1181 = vsel %vm389, %v1176, 0
      %v1184 = vsel %vm389, %v1177, 0
      %1186 = vmatprep.subr.bf16.mxu0 %v1175
      %1187 = vmatpush1.bf16.msra.mxu0 %v1174
      %1188 = vmatprep.subr.bf16.mxu0 %v1184
      %1189 = vmatpush1.bf16.msra.mxu0 %v1181
      %1190 = vmatprep.subr.bf16.mxu0 0
      %1191 = vmatpush1.bf16.msra.mxu0 0
      %1192 = vmatprep.subr.bf16.mxu0 0
      %1193 = vmatpush1.bf16.msra.mxu0 0
      %1194 = vmatprep.subr.bf16.mxu0 0
      %1195 = vmatpush1.bf16.msra.mxu0 0
      %1196 = vmatprep.subr.bf16.mxu0 0
      %1197 = vmatpush1.bf16.msra.mxu0 0
      %1198 = vmatprep.subr.bf16.mxu0 0
      %1199 = vmatpush1.bf16.msra.mxu0 0
      %1200 = vmatprep.subr.bf16.mxu0 0
      %1201 = vmatpush1.bf16.msra.mxu0 0
      %1202 = vmatprep.subr.bf16.mxu0 0
      %1203 = vmatpush1.bf16.msra.mxu0 0
      %1204 = vmatprep.subr.bf16.mxu0 0
      %1205 = vmatpush1.bf16.msra.mxu0 0
      %1206 = vmatprep.subr.bf16.mxu0 0
      %1207 = vmatpush1.bf16.msra.mxu0 0
      %1208 = vmatprep.subr.bf16.mxu0 0
      %1209 = vmatpush1.bf16.msra.mxu0 0
      %1210 = vmatprep.subr.bf16.mxu0 0
      %1211 = vmatpush1.bf16.msra.mxu0 0
      %1212 = vmatprep.subr.bf16.mxu0 0
      %1213 = vmatpush1.bf16.msra.mxu0 0
      %1214 = vmatprep.subr.bf16.mxu0 0
      %1215 = vmatpush1.bf16.msra.mxu0 0
      %1216 = vmatprep.subr.bf16.mxu0 0
      %1217 = vmatpush1.bf16.msra.mxu0 0
      %1218 = vmatprep.mubr.bf16.mxu0 0
      %1219 = vmatmul.mubr.bf16.gmra.mrb[0].mxu0 %v557
      %v1220 = vpop.f32.mrb[0].mxu0
      %v1221 = vadd.f32 0.0, %v1220
      %v1222 = vpop.f32.mrb[0].mxu0
      %v1223 = vadd.f32 0.0, %v1222
      %v1224 = vpop.f32.mrb[0].mxu0
      %v1225 = vadd.f32 0.0, %v1224
      %v1226 = vpop.f32.mrb[0].mxu0
      %v1227 = vadd.f32 0.0, %v1226
      %1228 = vmatprep.mubr.bf16.mxu0 0
      %1229 = vmatmul.mubr.bf16.gmra.mrb[0].mxu0 %v560
      %v1230 = vpop.f32.mrb[0].mxu0
      %v1231 = vadd.f32 0.0, %v1230
      %v1232 = vpop.f32.mrb[0].mxu0
      %v1233 = vadd.f32 0.0, %v1232
      %v1234 = vpop.f32.mrb[0].mxu0
      %v1235 = vpop.f32.mrb[0].mxu0
      %1236 = vdwg.mxu0
      %v1237 = vadd.f32 %v1141, %v1221
      %v1238 = vadd.f32 %v1143, %v1223
      %v1239 = vadd.f32 %v1145, %v1225
      %v1240 = vadd.f32 %v1147, %v1227
      %v1241 = vadd.f32 %v1151, %v1231
      %v1242 = vadd.f32 %v1153, %v1233
      %s1243 = scalar_lea.vmem %s1, 256
      %v1244 = vld [vmem:[%s1243] sm:$0xff]
      %v1245 = vld [vmem:[%s1243 + $0x8] sm:$0xff]
      %v1246 = vld [vmem:[%s1243 + $0x10] sm:$0xff]
      %v1247 = vld [vmem:[%s1243 + $0x18] sm:$0x33]
      %v1252 = vunpack.c.l.b16 %v1244
      %v1253 = vunpack.c.h.b16 %v1244
      %v1254 = vunpack.c.l.b16 %v1245
      %v1255 = vunpack.c.h.b16 %v1245
      %v1256 = vunpack.c.l.b16 %v1246
      %v1257 = vunpack.c.h.b16 %v1246
      %v1258 = vunpack.c.l.b16 %v1247
      %v1259 = vunpack.c.h.b16 %v1247
      %v1260 = vpack.c.b16 %v1254, %v1252
      %v1261 = vpack.c.b16 %v1255, %v1253
      %v1262 = vpack.c.b16 %v1258, %v1256
      %v1263 = vpack.c.b16 %v1259, %v1257
      %v1267 = vsel %vm389, %v1262, 0
      %v1270 = vsel %vm389, %v1263, 0
      %1272 = vmatprep.subr.bf16.mxu0 %v1261
      %1273 = vmatpush1.bf16.msra.mxu0 %v1260
      %1274 = vmatprep.subr.bf16.mxu0 %v1270
      %1275 = vmatpush1.bf16.msra.mxu0 %v1267
      %1276 = vmatprep.subr.bf16.mxu0 0
      %1277 = vmatpush1.bf16.msra.mxu0 0
      %1278 = vmatprep.subr.bf16.mxu0 0
      %1279 = vmatpush1.bf16.msra.mxu0 0
      %1280 = vmatprep.subr.bf16.mxu0 0
      %1281 = vmatpush1.bf16.msra.mxu0 0
      %1282 = vmatprep.subr.bf16.mxu0 0
      %1283 = vmatpush1.bf16.msra.mxu0 0
      %1284 = vmatprep.subr.bf16.mxu0 0
      %1285 = vmatpush1.bf16.msra.mxu0 0
      %1286 = vmatprep.subr.bf16.mxu0 0
      %1287 = vmatpush1.bf16.msra.mxu0 0
      %1288 = vmatprep.subr.bf16.mxu0 0
      %1289 = vmatpush1.bf16.msra.mxu0 0
      %1290 = vmatprep.subr.bf16.mxu0 0
      %1291 = vmatpush1.bf16.msra.mxu0 0
      %1292 = vmatprep.subr.bf16.mxu0 0
      %1293 = vmatpush1.bf16.msra.mxu0 0
      %1294 = vmatprep.subr.bf16.mxu0 0
      %1295 = vmatpush1.bf16.msra.mxu0 0
      %1296 = vmatprep.subr.bf16.mxu0 0
      %1297 = vmatpush1.bf16.msra.mxu0 0
      %1298 = vmatprep.subr.bf16.mxu0 0
      %1299 = vmatpush1.bf16.msra.mxu0 0
      %1300 = vmatprep.subr.bf16.mxu0 0
      %1301 = vmatpush1.bf16.msra.mxu0 0
      %1302 = vmatprep.subr.bf16.mxu0 0
      %1303 = vmatpush1.bf16.msra.mxu0 0
      %1304 = vmatprep.mubr.bf16.mxu0 0
      %1305 = vmatmul.mubr.bf16.gmra.mrb[0].mxu0 %v657
      %v1306 = vpop.f32.mrb[0].mxu0
      %v1307 = vadd.f32 0.0, %v1306
      %v1308 = vpop.f32.mrb[0].mxu0
      %v1309 = vadd.f32 0.0, %v1308
      %v1310 = vpop.f32.mrb[0].mxu0
      %v1311 = vadd.f32 0.0, %v1310
      %v1312 = vpop.f32.mrb[0].mxu0
      %v1313 = vadd.f32 0.0, %v1312
      %1314 = vmatprep.mubr.bf16.mxu0 0
      %1315 = vmatmul.mubr.bf16.gmra.mrb[0].mxu0 %v660
      %v1316 = vpop.f32.mrb[0].mxu0
      %v1317 = vadd.f32 0.0, %v1316
      %v1318 = vpop.f32.mrb[0].mxu0
      %v1319 = vadd.f32 0.0, %v1318
      %v1320 = vpop.f32.mrb[0].mxu0
      %v1321 = vpop.f32.mrb[0].mxu0
      %1322 = vdwg.mxu0
      %v1323 = vadd.f32 %v1237, %v1307
      %v1324 = vadd.f32 %v1238, %v1309
      %v1325 = vadd.f32 %v1239, %v1311
      %v1326 = vadd.f32 %v1240, %v1313
      %v1327 = vadd.f32 %v1241, %v1317
      %v1328 = vadd.f32 %v1242, %v1319
      %s1329 = scalar_lea.vmem %s1, 288
      %v1330 = vld [vmem:[%s1329] sm:$0xff]
      %v1331 = vld [vmem:[%s1329 + $0x8] sm:$0xff]
      %v1332 = vld [vmem:[%s1329 + $0x10] sm:$0xff]
      %v1333 = vld [vmem:[%s1329 + $0x18] sm:$0x33]
      %v1338 = vunpack.c.l.b16 %v1330
      %v1339 = vunpack.c.h.b16 %v1330
      %v1340 = vunpack.c.l.b16 %v1331
      %v1341 = vunpack.c.h.b16 %v1331
      %v1342 = vunpack.c.l.b16 %v1332
      %v1343 = vunpack.c.h.b16 %v1332
      %v1344 = vunpack.c.l.b16 %v1333
      %v1345 = vunpack.c.h.b16 %v1333
      %v1346 = vpack.c.b16 %v1340, %v1338
      %v1347 = vpack.c.b16 %v1341, %v1339
      %v1348 = vpack.c.b16 %v1344, %v1342
      %v1349 = vpack.c.b16 %v1345, %v1343
      %v1353 = vsel %vm389, %v1348, 0
      %v1356 = vsel %vm389, %v1349, 0
      %1358 = vmatprep.subr.bf16.mxu0 %v1347
      %1359 = vmatpush1.bf16.msra.mxu0 %v1346
      %1360 = vmatprep.subr.bf16.mxu0 %v1356
      %1361 = vmatpush1.bf16.msra.mxu0 %v1353
      %1362 = vmatprep.subr.bf16.mxu0 0
      %1363 = vmatpush1.bf16.msra.mxu0 0
      %1364 = vmatprep.subr.bf16.mxu0 0
      %1365 = vmatpush1.bf16.msra.mxu0 0
      %1366 = vmatprep.subr.bf16.mxu0 0
      %1367 = vmatpush1.bf16.msra.mxu0 0
      %1368 = vmatprep.subr.bf16.mxu0 0
      %1369 = vmatpush1.bf16.msra.mxu0 0
      %1370 = vmatprep.subr.bf16.mxu0 0
      %1371 = vmatpush1.bf16.msra.mxu0 0
      %1372 = vmatprep.subr.bf16.mxu0 0
      %1373 = vmatpush1.bf16.msra.mxu0 0
      %1374 = vmatprep.subr.bf16.mxu0 0
      %1375 = vmatpush1.bf16.msra.mxu0 0
      %1376 = vmatprep.subr.bf16.mxu0 0
      %1377 = vmatpush1.bf16.msra.mxu0 0
      %1378 = vmatprep.subr.bf16.mxu0 0
      %1379 = vmatpush1.bf16.msra.mxu0 0
      %1380 = vmatprep.subr.bf16.mxu0 0
      %1381 = vmatpush1.bf16.msra.mxu0 0
      %1382 = vmatprep.subr.bf16.mxu0 0
      %1383 = vmatpush1.bf16.msra.mxu0 0
      %1384 = vmatprep.subr.bf16.mxu0 0
      %1385 = vmatpush1.bf16.msra.mxu0 0
      %1386 = vmatprep.subr.bf16.mxu0 0
      %1387 = vmatpush1.bf16.msra.mxu0 0
      %1388 = vmatprep.subr.bf16.mxu0 0
      %1389 = vmatpush1.bf16.msra.mxu0 0
      %1390 = vmatprep.mubr.bf16.mxu0 0
      %1391 = vmatmul.mubr.bf16.gmra.mrb[0].mxu0 %v753
      %v1392 = vpop.f32.mrb[0].mxu0
      %v1393 = vadd.f32 0.0, %v1392
      %v1394 = vpop.f32.mrb[0].mxu0
      %v1395 = vadd.f32 0.0, %v1394
      %v1396 = vpop.f32.mrb[0].mxu0
      %v1397 = vadd.f32 0.0, %v1396
      %v1398 = vpop.f32.mrb[0].mxu0
      %v1399 = vadd.f32 0.0, %v1398
      %1400 = vmatprep.mubr.bf16.mxu0 0
      %1401 = vmatmul.mubr.bf16.gmra.mrb[0].mxu0 %v756
      %v1402 = vpop.f32.mrb[0].mxu0
      %v1403 = vadd.f32 0.0, %v1402
      %v1404 = vpop.f32.mrb[0].mxu0
      %v1405 = vadd.f32 0.0, %v1404
      %v1406 = vpop.f32.mrb[0].mxu0
      %v1407 = vpop.f32.mrb[0].mxu0
      %1408 = vdwg.mxu0
      %v1409 = vadd.f32 %v1323, %v1393
      %v1410 = vadd.f32 %v1324, %v1395
      %v1411 = vadd.f32 %v1325, %v1397
      %v1412 = vadd.f32 %v1326, %v1399
      %v1413 = vadd.f32 %v1327, %v1403
      %v1414 = vadd.f32 %v1328, %v1405
      %1415 = vmatprep.subr.mxu0 %v1410
      %1416 = vmatpush1.msra.mxu0 %v1409
      %1417 = vmatprep.subr.mxu0 %v1412
      %1418 = vmatpush1.msra.mxu0 %v1411
      %1419 = vmatprep.subr.mxu0 %v1414
      %1420 = vmatpush1.msra.mxu0 %v1413
      %1421 = vmatprep.subr.mxu0 0.0
      %1422 = vmatpush1.msra.mxu0 0.0
      %1423 = vmatprep.subr.mxu0 0.0
      %1424 = vmatpush1.msra.mxu0 0.0
      %1425 = vmatprep.subr.mxu0 0.0
      %1426 = vmatpush1.msra.mxu0 0.0
      %1427 = vmatprep.subr.mxu0 0.0
      %1428 = vmatpush1.msra.mxu0 0.0
      %1429 = vmatprep.subr.mxu0 0.0
      %1430 = vmatpush1.msra.mxu0 0.0
      %1431 = vmatprep.subr.mxu0 0.0
      %1432 = vmatpush1.msra.mxu0 0.0
      %1433 = vmatprep.subr.mxu0 0.0
      %1434 = vmatpush1.msra.mxu0 0.0
      %1435 = vmatprep.subr.mxu0 0.0
      %1436 = vmatpush1.msra.mxu0 0.0
      %1437 = vmatprep.subr.mxu0 0.0
      %1438 = vmatpush1.msra.mxu0 0.0
      %1439 = vmatprep.subr.mxu0 0.0
      %1440 = vmatpush1.msra.mxu0 0.0
      %1441 = vmatprep.subr.mxu0 0.0
      %1442 = vmatpush1.msra.mxu0 0.0
      %1443 = vmatprep.subr.mxu0 0.0
      %1444 = vmatpush1.msra.mxu0 0.0
      %1445 = vmatprep.subr.mxu0 0.0
      %1446 = vmatpush1.msra.mxu0 0.0
      %1447 = vmatprep.subr.mxu0 0.0
      %1448 = vmatpush1.msra.mxu0 0.0
      %1449 = vmatprep.subr.mxu0 0.0
      %1450 = vmatpush1.msra.mxu0 0.0
      %1451 = vmatprep.subr.mxu0 0.0
      %1452 = vmatpush1.msra.mxu0 0.0
      %1453 = vmatprep.subr.mxu0 0.0
      %1454 = vmatpush1.msra.mxu0 0.0
      %1455 = vmatprep.subr.mxu0 0.0
      %1456 = vmatpush1.msra.mxu0 0.0
      %1457 = vmatprep.subr.mxu0 0.0
      %1458 = vmatpush1.msra.mxu0 0.0
      %1459 = vmatprep.subr.mxu0 0.0
      %1460 = vmatpush1.msra.mxu0 0.0
      %1461 = vmatprep.subr.mxu0 0.0
      %1462 = vmatpush1.msra.mxu0 0.0
      %1463 = vmatprep.subr.mxu0 0.0
      %1464 = vmatpush1.msra.mxu0 0.0
      %1465 = vmatprep.subr.mxu0 0.0
      %1466 = vmatpush1.msra.mxu0 0.0
      %1467 = vmatprep.subr.mxu0 0.0
      %1468 = vmatpush1.msra.mxu0 0.0
      %1469 = vmatprep.subr.mxu0 0.0
      %1470 = vmatpush1.msra.mxu0 0.0
      %1471 = vmatprep.subr.mxu0 0.0
      %1472 = vmatpush1.msra.mxu0 0.0
      %1473 = vmatprep.subr.mxu0 0.0
      %1474 = vmatpush1.msra.mxu0 0.0
      %1475 = vmatprep.subr.mxu0 0.0
      %1476 = vmatpush1.msra.mxu0 0.0
      %1477 = vmatprep.subr.mxu0 0.0
      %1478 = vmatpush1.msra.mxu0 0.0
      %1479 = vmatprep.mubr.f32.mxu0 0.0
      %1480 = vmatmul.mubr.f32.gmra.mrb[0].mxu0 %v825
      %v1481 = vpop.f32.mrb[0].mxu0
      %v1482 = vadd.f32 0.0, %v1481
      %v1483 = vpop.f32.mrb[0].mxu0
      %v1484 = vadd.f32 0.0, %v1483
      %1485 = vmatprep.mubr.f32.mxu0 0.0
      %1486 = vmatmul.mubr.f32.gmra.mrb[0].mxu0 %v828
      %v1487 = vpop.f32.mrb[0].mxu0
      %v1488 = vadd.f32 0.0, %v1487
      %v1489 = vpop.f32.mrb[0].mxu0
      %v1490 = vadd.f32 0.0, %v1489
      %1491 = vdwg.mxu0
      %1492 = vmatprep.subr.mxu0 %v1410
      %1493 = vmatpush1.msra.mxu0 %v1409
      %1494 = vmatprep.subr.mxu0 %v1412
      %1495 = vmatpush1.msra.mxu0 %v1411
      %1496 = vmatprep.subr.mxu0 %v1414
      %1497 = vmatpush1.msra.mxu0 %v1413
      %1498 = vmatprep.subr.mxu0 0.0
      %1499 = vmatpush1.msra.mxu0 0.0
      %1500 = vmatprep.subr.mxu0 0.0
      %1501 = vmatpush1.msra.mxu0 0.0
      %1502 = vmatprep.subr.mxu0 0.0
      %1503 = vmatpush1.msra.mxu0 0.0
      %1504 = vmatprep.subr.mxu0 0.0
      %1505 = vmatpush1.msra.mxu0 0.0
      %1506 = vmatprep.subr.mxu0 0.0
      %1507 = vmatpush1.msra.mxu0 0.0
      %1508 = vmatprep.subr.mxu0 0.0
      %1509 = vmatpush1.msra.mxu0 0.0
      %1510 = vmatprep.subr.mxu0 0.0
      %1511 = vmatpush1.msra.mxu0 0.0
      %1512 = vmatprep.subr.mxu0 0.0
      %1513 = vmatpush1.msra.mxu0 0.0
      %1514 = vmatprep.subr.mxu0 0.0
      %1515 = vmatpush1.msra.mxu0 0.0
      %1516 = vmatprep.subr.mxu0 0.0
      %1517 = vmatpush1.msra.mxu0 0.0
      %1518 = vmatprep.subr.mxu0 0.0
      %1519 = vmatpush1.msra.mxu0 0.0
      %1520 = vmatprep.subr.mxu0 0.0
      %1521 = vmatpush1.msra.mxu0 0.0
      %1522 = vmatprep.subr.mxu0 0.0
      %1523 = vmatpush1.msra.mxu0 0.0
      %1524 = vmatprep.subr.mxu0 0.0
      %1525 = vmatpush1.msra.mxu0 0.0
      %1526 = vmatprep.subr.mxu0 0.0
      %1527 = vmatpush1.msra.mxu0 0.0
      %1528 = vmatprep.subr.mxu0 0.0
      %1529 = vmatpush1.msra.mxu0 0.0
      %1530 = vmatprep.subr.mxu0 0.0
      %1531 = vmatpush1.msra.mxu0 0.0
      %1532 = vmatprep.subr.mxu0 0.0
      %1533 = vmatpush1.msra.mxu0 0.0
      %1534 = vmatprep.subr.mxu0 0.0
      %1535 = vmatpush1.msra.mxu0 0.0
      %1536 = vmatprep.subr.mxu0 0.0
      %1537 = vmatpush1.msra.mxu0 0.0
      %1538 = vmatprep.subr.mxu0 0.0
      %1539 = vmatpush1.msra.mxu0 0.0
      %1540 = vmatprep.subr.mxu0 0.0
      %1541 = vmatpush1.msra.mxu0 0.0
      %1542 = vmatprep.subr.mxu0 0.0
      %1543 = vmatpush1.msra.mxu0 0.0
      %1544 = vmatprep.subr.mxu0 0.0
      %1545 = vmatpush1.msra.mxu0 0.0
      %1546 = vmatprep.subr.mxu0 0.0
      %1547 = vmatpush1.msra.mxu0 0.0
      %1548 = vmatprep.subr.mxu0 0.0
      %1549 = vmatpush1.msra.mxu0 0.0
      %1550 = vmatprep.subr.mxu0 0.0
      %1551 = vmatpush1.msra.mxu0 0.0
      %1552 = vmatprep.subr.mxu0 0.0
      %1553 = vmatpush1.msra.mxu0 0.0
      %1554 = vmatprep.subr.mxu0 0.0
      %1555 = vmatpush1.msra.mxu0 0.0
      %1556 = vmatprep.mubr.f32.mxu0 0.0
      %1557 = vmatmul.mubr.f32.gmra.mrb[0].mxu0 %v911
      %v1558 = vpop.f32.mrb[0].mxu0
      %v1559 = vadd.f32 0.0, %v1558
      %v1560 = vpop.f32.mrb[0].mxu0
      %v1561 = vadd.f32 0.0, %v1560
      %1562 = vmatprep.mubr.f32.mxu0 0.0
      %1563 = vmatmul.mubr.f32.gmra.mrb[0].mxu0 %v914
      %v1564 = vpop.f32.mrb[0].mxu0
      %v1565 = vadd.f32 0.0, %v1564
      %v1566 = vpop.f32.mrb[0].mxu0
      %v1567 = vadd.f32 0.0, %v1566
      %1568 = vdwg.mxu0
      %v1569 = vmax.f32 %v1482, %v1559
      %v1570 = vmax.f32 %v1484, %v1561
      %v1571 = vmax.f32 %v1488, %v1565
      %v1572 = vmax.f32 %v1490, %v1567
      %v1573 = vmax.f32 %v993, %v1569
      %v1574 = vmax.f32 %v994, %v1570
      %v1575 = vmax.f32 %v995, %v1571
      %v1576 = vmax.f32 %v996, %v1572
      %v1577 = vld [vmem:[%s2] sm:$0x3]
      %v1579 = vlaneseq
      %v1580 = vshrl.u32 %v1579, 7
      %v1581 = vsub.s32 0, %v1580
      %v1582 = vrot.slane %v1577, %v1581
      %v1583 = vlaneseq
      %v1584 = vshrl.u32 %v1583, 7
      %v1585 = vsub.s32 1, %v1584
      %v1586 = vrot.slane %v1577, %v1585
      %v1589 = vadd.f32 %v1573, %v1582
      %v1590 = vadd.f32 %v1574, %v1586
      %v1591 = vadd.f32 %v1575, %v1582
      %v1592 = vadd.f32 %v1576, %v1586
      %v1593 = vmax.f32 %v1589, 0.0
      %v1594 = vmax.f32 %v1590, 0.0
      %v1595 = vmax.f32 %v1591, 0.0
      %v1596 = vmax.f32 %v1592, 0.0
      %v1597 = vpack.c.bf16 %v1593, %v1593
      %v1598 = vpack.c.bf16 %v1594, %v1594
      %v1599 = vld [vmem:[%s3] sm:$0xff]
      %v1600 = vld [vmem:[%s3 + $0x8] sm:$0xff]
      %v1601 = vld [vmem:[%s3 + $0x10] sm:$0xff]
      %v1602 = vld [vmem:[%s3 + $0x18] sm:$0xff]
      %v1603 = vld [vmem:[%s3 + $0x20] sm:$0xff]
      %v1604 = vld [vmem:[%s3 + $0x28] sm:$0xff]
      %v1605 = vld [vmem:[%s3 + $0x30] sm:$0xff]
      %v1606 = vld [vmem:[%s3 + $0x38] sm:$0xff]
      %v1607 = vld [vmem:[%s3 + $0x40] sm:$0xff]
      %v1608 = vld [vmem:[%s3 + $0x48] sm:$0xff]
      %v1609 = vld [vmem:[%s3 + $0x50] sm:$0xff]
      %v1610 = vld [vmem:[%s3 + $0x58] sm:$0xff]
      %v1611 = vld [vmem:[%s3 + $0x60] sm:$0xff]
      %v1612 = vld [vmem:[%s3 + $0x68] sm:$0xff]
      %v1613 = vld [vmem:[%s3 + $0x70] sm:$0xff]
      %v1614 = vld [vmem:[%s3 + $0x78] sm:$0xff]
      %v1615 = vld [vmem:[%s3 + $0x80] sm:$0xff]
      %v1616 = vld [vmem:[%s3 + $0x88] sm:$0xff]
      %v1617 = vld [vmem:[%s3 + $0x90] sm:$0xff]
      %v1618 = vld [vmem:[%s3 + $0x98] sm:$0xff]
      %v1619 = vld [vmem:[%s3 + $0xa0] sm:$0xff]
      %v1620 = vld [vmem:[%s3 + $0xa8] sm:$0xff]
      %v1621 = vld [vmem:[%s3 + $0xb0] sm:$0xff]
      %v1622 = vld [vmem:[%s3 + $0xb8] sm:$0xff]
      %v1623 = vld [vmem:[%s3 + $0xc0] sm:$0xff]
      %v1624 = vld [vmem:[%s3 + $0xc8] sm:$0xff]
      %v1625 = vld [vmem:[%s3 + $0xd0] sm:$0xff]
      %v1626 = vld [vmem:[%s3 + $0xd8] sm:$0xff]
      %v1627 = vld [vmem:[%s3 + $0xe0] sm:$0xff]
      %v1628 = vld [vmem:[%s3 + $0xe8] sm:$0xff]
      %v1629 = vpack.c.bf16 %v1595, %v1593
      %v1630 = vpack.c.bf16 %v1596, %v1594
      %s1631 = scalar_lea.vmem %s3, 240
      %v1632 = vld [vmem:[%s1631] sm:$0xff]
      %v1633 = vld [vmem:[%s1631 + $0x8] sm:$0xff]
      %v1634 = vld [vmem:[%s1631 + $0x10] sm:$0xff]
      %v1635 = vld [vmem:[%s1631 + $0x18] sm:$0xff]
      %v1636 = vld [vmem:[%s1631 + $0x20] sm:$0xff]
      %v1637 = vld [vmem:[%s1631 + $0x28] sm:$0xff]
      %v1638 = vld [vmem:[%s1631 + $0x30] sm:$0xff]
      %v1639 = vld [vmem:[%s1631 + $0x38] sm:$0xff]
      %v1640 = vld [vmem:[%s1631 + $0x40] sm:$0xff]
      %v1641 = vld [vmem:[%s1631 + $0x48] sm:$0xff]
      %v1642 = vld [vmem:[%s1631 + $0x50] sm:$0xff]
      %v1643 = vld [vmem:[%s1631 + $0x58] sm:$0xff]
      %v1644 = vld [vmem:[%s1631 + $0x60] sm:$0xff]
      %v1645 = vld [vmem:[%s1631 + $0x68] sm:$0xff]
      %v1646 = vld [vmem:[%s1631 + $0x70] sm:$0xff]
      %v1647 = vld [vmem:[%s1631 + $0x78] sm:$0xff]
      %v1648 = vld [vmem:[%s1631 + $0x80] sm:$0xff]
      %v1649 = vld [vmem:[%s1631 + $0x88] sm:$0xff]
      %v1650 = vld [vmem:[%s1631 + $0x90] sm:$0xff]
      %v1651 = vld [vmem:[%s1631 + $0x98] sm:$0xff]
      %v1652 = vld [vmem:[%s1631 + $0xa0] sm:$0xff]
      %v1653 = vld [vmem:[%s1631 + $0xa8] sm:$0xff]
      %v1654 = vld [vmem:[%s1631 + $0xb0] sm:$0xff]
      %v1655 = vld [vmem:[%s1631 + $0xb8] sm:$0xff]
      %v1656 = vld [vmem:[%s1631 + $0xc0] sm:$0xff]
      %v1657 = vld [vmem:[%s1631 + $0xc8] sm:$0xff]
      %v1658 = vld [vmem:[%s1631 + $0xd0] sm:$0xff]
      %v1659 = vld [vmem:[%s1631 + $0xd8] sm:$0xff]
      %v1660 = vld [vmem:[%s1631 + $0xe0] sm:$0xff]
      %v1661 = vld [vmem:[%s1631 + $0xe8] sm:$0xff]
      %v1663 = vshrl.u32 %v1629, 16
      %v1665 = vshll.u32 %v1629, 16
      %v1667 = vrot.slane %v1665, 1
      %v1668 = vor.u32 %v1663, %v1667
      %v1670 = vshrl.u32 %v1630, 16
      %v1672 = vshll.u32 %v1630, 16
      %v1674 = vrot.slane %v1672, 1
      %v1675 = vor.u32 %v1670, %v1674
      %v1707 = vunpack.c.l.b16 %v1632
      %v1708 = vunpack.c.h.b16 %v1632
      %v1709 = vunpack.c.l.b16 %v1633
      %v1710 = vunpack.c.h.b16 %v1633
      %v1711 = vunpack.c.l.b16 %v1634
      %v1712 = vunpack.c.h.b16 %v1634
      %v1713 = vunpack.c.l.b16 %v1635
      %v1714 = vunpack.c.h.b16 %v1635
      %v1715 = vunpack.c.l.b16 %v1636
      %v1716 = vunpack.c.h.b16 %v1636
      %v1717 = vunpack.c.l.b16 %v1637
      %v1718 = vunpack.c.h.b16 %v1637
      %v1719 = vunpack.c.l.b16 %v1638
      %v1720 = vunpack.c.h.b16 %v1638
      %v1721 = vunpack.c.l.b16 %v1639
      %v1722 = vunpack.c.h.b16 %v1639
      %v1723 = vunpack.c.l.b16 %v1640
      %v1724 = vunpack.c.h.b16 %v1640
      %v1725 = vunpack.c.l.b16 %v1641
      %v1726 = vunpack.c.h.b16 %v1641
      %v1727 = vunpack.c.l.b16 %v1642
      %v1728 = vunpack.c.h.b16 %v1642
      %v1729 = vunpack.c.l.b16 %v1643
      %v1730 = vunpack.c.h.b16 %v1643
      %v1731 = vunpack.c.l.b16 %v1644
      %v1732 = vunpack.c.h.b16 %v1644
      %v1733 = vunpack.c.l.b16 %v1645
      %v1734 = vunpack.c.h.b16 %v1645
      %v1735 = vunpack.c.l.b16 %v1646
      %v1736 = vunpack.c.h.b16 %v1646
      %v1737 = vunpack.c.l.b16 %v1647
      %v1738 = vunpack.c.h.b16 %v1647
      %v1739 = vunpack.c.l.b16 %v1648
      %v1740 = vunpack.c.h.b16 %v1648
      %v1741 = vunpack.c.l.b16 %v1649
      %v1742 = vunpack.c.h.b16 %v1649
      %v1743 = vunpack.c.l.b16 %v1650
      %v1744 = vunpack.c.h.b16 %v1650
      %v1745 = vunpack.c.l.b16 %v1651
      %v1746 = vunpack.c.h.b16 %v1651
      %v1747 = vunpack.c.l.b16 %v1652
      %v1748 = vunpack.c.h.b16 %v1652
      %v1749 = vunpack.c.l.b16 %v1653
      %v1750 = vunpack.c.h.b16 %v1653
      %v1751 = vunpack.c.l.b16 %v1654
      %v1752 = vunpack.c.h.b16 %v1654
      %v1753 = vunpack.c.l.b16 %v1655
      %v1754 = vunpack.c.h.b16 %v1655
      %v1755 = vunpack.c.l.b16 %v1656
      %v1756 = vunpack.c.h.b16 %v1656
      %v1757 = vunpack.c.l.b16 %v1657
      %v1758 = vunpack.c.h.b16 %v1657
      %v1759 = vunpack.c.l.b16 %v1658
      %v1760 = vunpack.c.h.b16 %v1658
      %v1761 = vunpack.c.l.b16 %v1659
      %v1762 = vunpack.c.h.b16 %v1659
      %v1763 = vunpack.c.l.b16 %v1660
      %v1764 = vunpack.c.h.b16 %v1660
      %v1765 = vunpack.c.l.b16 %v1661
      %v1766 = vunpack.c.h.b16 %v1661
      %v1767 = vpack.c.b16 %v1709, %v1707
      %v1768 = vpack.c.b16 %v1710, %v1708
      %v1769 = vpack.c.b16 %v1713, %v1711
      %v1770 = vpack.c.b16 %v1714, %v1712
      %v1771 = vpack.c.b16 %v1717, %v1715
      %v1772 = vpack.c.b16 %v1718, %v1716
      %v1773 = vpack.c.b16 %v1721, %v1719
      %v1774 = vpack.c.b16 %v1722, %v1720
      %v1775 = vpack.c.b16 %v1725, %v1723
      %v1776 = vpack.c.b16 %v1726, %v1724
      %v1777 = vpack.c.b16 %v1729, %v1727
      %v1778 = vpack.c.b16 %v1730, %v1728
      %v1779 = vpack.c.b16 %v1733, %v1731
      %v1780 = vpack.c.b16 %v1734, %v1732
      %v1781 = vpack.c.b16 %v1737, %v1735
      %v1782 = vpack.c.b16 %v1738, %v1736
      %v1783 = vpack.c.b16 %v1741, %v1739
      %v1784 = vpack.c.b16 %v1742, %v1740
      %v1785 = vpack.c.b16 %v1745, %v1743
      %v1786 = vpack.c.b16 %v1746, %v1744
      %v1787 = vpack.c.b16 %v1749, %v1747
      %v1788 = vpack.c.b16 %v1750, %v1748
      %v1789 = vpack.c.b16 %v1753, %v1751
      %v1790 = vpack.c.b16 %v1754, %v1752
      %v1791 = vpack.c.b16 %v1757, %v1755
      %v1792 = vpack.c.b16 %v1758, %v1756
      %v1793 = vpack.c.b16 %v1761, %v1759
      %v1794 = vpack.c.b16 %v1762, %v1760
      %v1795 = vpack.c.b16 %v1765, %v1763
      %v1796 = vpack.c.b16 %v1766, %v1764
      %vm1827 = vcmask 916480
      %v1829 = vsel %vm1827, %v1675, 0
      %1831 = vmatprep.subr.bf16.mxu0 %v1768
      %1832 = vmatpush1.bf16.msra.mxu0 %v1767
      %1833 = vmatprep.subr.bf16.mxu0 %v1770
      %1834 = vmatpush1.bf16.msra.mxu0 %v1769
      %1835 = vmatprep.subr.bf16.mxu0 %v1772
      %1836 = vmatpush1.bf16.msra.mxu0 %v1771
      %1837 = vmatprep.subr.bf16.mxu0 %v1774
      %1838 = vmatpush1.bf16.msra.mxu0 %v1773
      %1839 = vmatprep.subr.bf16.mxu0 %v1776
      %1840 = vmatpush1.bf16.msra.mxu0 %v1775
      %1841 = vmatprep.subr.bf16.mxu0 %v1778
      %1842 = vmatpush1.bf16.msra.mxu0 %v1777
      %1843 = vmatprep.subr.bf16.mxu0 %v1780
      %1844 = vmatpush1.bf16.msra.mxu0 %v1779
      %1845 = vmatprep.subr.bf16.mxu0 %v1782
      %1846 = vmatpush1.bf16.msra.mxu0 %v1781
      %1847 = vmatprep.subr.bf16.mxu0 %v1784
      %1848 = vmatpush1.bf16.msra.mxu0 %v1783
      %1849 = vmatprep.subr.bf16.mxu0 %v1786
      %1850 = vmatpush1.bf16.msra.mxu0 %v1785
      %1851 = vmatprep.subr.bf16.mxu0 %v1788
      %1852 = vmatpush1.bf16.msra.mxu0 %v1787
      %1853 = vmatprep.subr.bf16.mxu0 %v1790
      %1854 = vmatpush1.bf16.msra.mxu0 %v1789
      %1855 = vmatprep.subr.bf16.mxu0 %v1792
      %1856 = vmatpush1.bf16.msra.mxu0 %v1791
      %1857 = vmatprep.subr.bf16.mxu0 %v1794
      %1858 = vmatpush1.bf16.msra.mxu0 %v1793
      %1859 = vmatprep.subr.bf16.mxu0 %v1796
      %1860 = vmatpush1.bf16.msra.mxu0 %v1795
      %1861 = vmatprep.subr.bf16.mxu0 0
      %1862 = vmatpush1.bf16.msra.mxu0 0
      %1863 = vmatprep.mubr.bf16.mxu0 %v1829
      %1864 = vmatmul.mubr.bf16.gmra.mrb[0].mxu0 %v1668
      %v1865 = vpop.f32.mrb[0].mxu0
      %v1866 = vadd.f32 0.0, %v1865
      %v1867 = vpop.f32.mrb[0].mxu0
      %v1868 = vadd.f32 0.0, %v1867
      %v1869 = vpop.f32.mrb[0].mxu0
      %v1870 = vpop.f32.mrb[0].mxu0
      %1871 = vdwg.mxu0
      %v1902 = vunpack.c.l.b16 %v1599
      %v1903 = vunpack.c.h.b16 %v1599
      %v1904 = vunpack.c.l.b16 %v1600
      %v1905 = vunpack.c.h.b16 %v1600
      %v1906 = vunpack.c.l.b16 %v1601
      %v1907 = vunpack.c.h.b16 %v1601
      %v1908 = vunpack.c.l.b16 %v1602
      %v1909 = vunpack.c.h.b16 %v1602
      %v1910 = vunpack.c.l.b16 %v1603
      %v1911 = vunpack.c.h.b16 %v1603
      %v1912 = vunpack.c.l.b16 %v1604
      %v1913 = vunpack.c.h.b16 %v1604
      %v1914 = vunpack.c.l.b16 %v1605
      %v1915 = vunpack.c.h.b16 %v1605
      %v1916 = vunpack.c.l.b16 %v1606
      %v1917 = vunpack.c.h.b16 %v1606
      %v1918 = vunpack.c.l.b16 %v1607
      %v1919 = vunpack.c.h.b16 %v1607
      %v1920 = vunpack.c.l.b16 %v1608
      %v1921 = vunpack.c.h.b16 %v1608
      %v1922 = vunpack.c.l.b16 %v1609
      %v1923 = vunpack.c.h.b16 %v1609
      %v1924 = vunpack.c.l.b16 %v1610
      %v1925 = vunpack.c.h.b16 %v1610
      %v1926 = vunpack.c.l.b16 %v1611
      %v1927 = vunpack.c.h.b16 %v1611
      %v1928 = vunpack.c.l.b16 %v1612
      %v1929 = vunpack.c.h.b16 %v1612
      %v1930 = vunpack.c.l.b16 %v1613
      %v1931 = vunpack.c.h.b16 %v1613
      %v1932 = vunpack.c.l.b16 %v1614
      %v1933 = vunpack.c.h.b16 %v1614
      %v1934 = vunpack.c.l.b16 %v1615
      %v1935 = vunpack.c.h.b16 %v1615
      %v1936 = vunpack.c.l.b16 %v1616
      %v1937 = vunpack.c.h.b16 %v1616
      %v1938 = vunpack.c.l.b16 %v1617
      %v1939 = vunpack.c.h.b16 %v1617
      %v1940 = vunpack.c.l.b16 %v1618
      %v1941 = vunpack.c.h.b16 %v1618
      %v1942 = vunpack.c.l.b16 %v1619
      %v1943 = vunpack.c.h.b16 %v1619
      %v1944 = vunpack.c.l.b16 %v1620
      %v1945 = vunpack.c.h.b16 %v1620
      %v1946 = vunpack.c.l.b16 %v1621
      %v1947 = vunpack.c.h.b16 %v1621
      %v1948 = vunpack.c.l.b16 %v1622
      %v1949 = vunpack.c.h.b16 %v1622
      %v1950 = vunpack.c.l.b16 %v1623
      %v1951 = vunpack.c.h.b16 %v1623
      %v1952 = vunpack.c.l.b16 %v1624
      %v1953 = vunpack.c.h.b16 %v1624
      %v1954 = vunpack.c.l.b16 %v1625
      %v1955 = vunpack.c.h.b16 %v1625
      %v1956 = vunpack.c.l.b16 %v1626
      %v1957 = vunpack.c.h.b16 %v1626
      %v1958 = vunpack.c.l.b16 %v1627
      %v1959 = vunpack.c.h.b16 %v1627
      %v1960 = vunpack.c.l.b16 %v1628
      %v1961 = vunpack.c.h.b16 %v1628
      %v1962 = vpack.c.b16 %v1904, %v1902
      %v1963 = vpack.c.b16 %v1905, %v1903
      %v1964 = vpack.c.b16 %v1908, %v1906
      %v1965 = vpack.c.b16 %v1909, %v1907
      %v1966 = vpack.c.b16 %v1912, %v1910
      %v1967 = vpack.c.b16 %v1913, %v1911
      %v1968 = vpack.c.b16 %v1916, %v1914
      %v1969 = vpack.c.b16 %v1917, %v1915
      %v1970 = vpack.c.b16 %v1920, %v1918
      %v1971 = vpack.c.b16 %v1921, %v1919
      %v1972 = vpack.c.b16 %v1924, %v1922
      %v1973 = vpack.c.b16 %v1925, %v1923
      %v1974 = vpack.c.b16 %v1928, %v1926
      %v1975 = vpack.c.b16 %v1929, %v1927
      %v1976 = vpack.c.b16 %v1932, %v1930
      %v1977 = vpack.c.b16 %v1933, %v1931
      %v1978 = vpack.c.b16 %v1936, %v1934
      %v1979 = vpack.c.b16 %v1937, %v1935
      %v1980 = vpack.c.b16 %v1940, %v1938
      %v1981 = vpack.c.b16 %v1941, %v1939
      %v1982 = vpack.c.b16 %v1944, %v1942
      %v1983 = vpack.c.b16 %v1945, %v1943
      %v1984 = vpack.c.b16 %v1948, %v1946
      %v1985 = vpack.c.b16 %v1949, %v1947
      %v1986 = vpack.c.b16 %v1952, %v1950
      %v1987 = vpack.c.b16 %v1953, %v1951
      %v1988 = vpack.c.b16 %v1956, %v1954
      %v1989 = vpack.c.b16 %v1957, %v1955
      %v1990 = vpack.c.b16 %v1960, %v1958
      %v1991 = vpack.c.b16 %v1961, %v1959
      %v2023 = vsel %vm1827, %v1598, 0
      %2025 = vmatprep.subr.bf16.mxu0 %v1963
      %2026 = vmatpush1.bf16.msra.mxu0 %v1962
      %2027 = vmatprep.subr.bf16.mxu0 %v1965
      %2028 = vmatpush1.bf16.msra.mxu0 %v1964
      %2029 = vmatprep.subr.bf16.mxu0 %v1967
      %2030 = vmatpush1.bf16.msra.mxu0 %v1966
      %2031 = vmatprep.subr.bf16.mxu0 %v1969
      %2032 = vmatpush1.bf16.msra.mxu0 %v1968
      %2033 = vmatprep.subr.bf16.mxu0 %v1971
      %2034 = vmatpush1.bf16.msra.mxu0 %v1970
      %2035 = vmatprep.subr.bf16.mxu0 %v1973
      %2036 = vmatpush1.bf16.msra.mxu0 %v1972
      %2037 = vmatprep.subr.bf16.mxu0 %v1975
      %2038 = vmatpush1.bf16.msra.mxu0 %v1974
      %2039 = vmatprep.subr.bf16.mxu0 %v1977
      %2040 = vmatpush1.bf16.msra.mxu0 %v1976
      %2041 = vmatprep.subr.bf16.mxu0 %v1979
      %2042 = vmatpush1.bf16.msra.mxu0 %v1978
      %2043 = vmatprep.subr.bf16.mxu0 %v1981
      %2044 = vmatpush1.bf16.msra.mxu0 %v1980
      %2045 = vmatprep.subr.bf16.mxu0 %v1983
      %2046 = vmatpush1.bf16.msra.mxu0 %v1982
      %2047 = vmatprep.subr.bf16.mxu0 %v1985
      %2048 = vmatpush1.bf16.msra.mxu0 %v1984
      %2049 = vmatprep.subr.bf16.mxu0 %v1987
      %2050 = vmatpush1.bf16.msra.mxu0 %v1986
      %2051 = vmatprep.subr.bf16.mxu0 %v1989
      %2052 = vmatpush1.bf16.msra.mxu0 %v1988
      %2053 = vmatprep.subr.bf16.mxu0 %v1991
      %2054 = vmatpush1.bf16.msra.mxu0 %v1990
      %2055 = vmatprep.subr.bf16.mxu0 0
      %2056 = vmatpush1.bf16.msra.mxu0 0
      %2057 = vmatprep.mubr.bf16.mxu0 %v2023
      %2058 = vmatmul.mubr.bf16.gmra.mrb[0].mxu0 %v1597
      %v2059 = vpop.f32.mrb[0].mxu0
      %v2060 = vadd.f32 %v1866, %v2059
      %v2061 = vpop.f32.mrb[0].mxu0
      %v2062 = vadd.f32 %v1868, %v2061
      %v2063 = vpop.f32.mrb[0].mxu0
      %v2064 = vpop.f32.mrb[0].mxu0
      %2065 = vdwg.mxu0
      %s2066 = scalar_lea.vmem %s3, 480
      %v2067 = vld [vmem:[%s2066] sm:$0xff]
      %v2068 = vld [vmem:[%s2066 + $0x8] sm:$0xff]
      %v2069 = vld [vmem:[%s2066 + $0x10] sm:$0xff]
      %v2070 = vld [vmem:[%s2066 + $0x18] sm:$0xff]
      %v2071 = vld [vmem:[%s2066 + $0x20] sm:$0xff]
      %v2072 = vld [vmem:[%s2066 + $0x28] sm:$0xff]
      %v2073 = vld [vmem:[%s2066 + $0x30] sm:$0xff]
      %v2074 = vld [vmem:[%s2066 + $0x38] sm:$0xff]
      %v2075 = vld [vmem:[%s2066 + $0x40] sm:$0xff]
      %v2076 = vld [vmem:[%s2066 + $0x48] sm:$0xff]
      %v2077 = vld [vmem:[%s2066 + $0x50] sm:$0xff]
      %v2078 = vld [vmem:[%s2066 + $0x58] sm:$0xff]
      %v2079 = vld [vmem:[%s2066 + $0x60] sm:$0xff]
      %v2080 = vld [vmem:[%s2066 + $0x68] sm:$0xff]
      %v2081 = vld [vmem:[%s2066 + $0x70] sm:$0xff]
      %v2082 = vld [vmem:[%s2066 + $0x78] sm:$0xff]
      %v2083 = vld [vmem:[%s2066 + $0x80] sm:$0xff]
      %v2084 = vld [vmem:[%s2066 + $0x88] sm:$0xff]
      %v2085 = vld [vmem:[%s2066 + $0x90] sm:$0xff]
      %v2086 = vld [vmem:[%s2066 + $0x98] sm:$0xff]
      %v2087 = vld [vmem:[%s2066 + $0xa0] sm:$0xff]
      %v2088 = vld [vmem:[%s2066 + $0xa8] sm:$0xff]
      %v2089 = vld [vmem:[%s2066 + $0xb0] sm:$0xff]
      %v2090 = vld [vmem:[%s2066 + $0xb8] sm:$0xff]
      %v2091 = vld [vmem:[%s2066 + $0xc0] sm:$0xff]
      %v2092 = vld [vmem:[%s2066 + $0xc8] sm:$0xff]
      %v2093 = vld [vmem:[%s2066 + $0xd0] sm:$0xff]
      %v2094 = vld [vmem:[%s2066 + $0xd8] sm:$0xff]
      %v2095 = vld [vmem:[%s2066 + $0xe0] sm:$0xff]
      %v2096 = vld [vmem:[%s2066 + $0xe8] sm:$0xff]
      %v2099 = vrot.slane %v1629, 1
      %v2100 = vrot.slane %v1630, 1
      %v2132 = vunpack.c.l.b16 %v2067
      %v2133 = vunpack.c.h.b16 %v2067
      %v2134 = vunpack.c.l.b16 %v2068
      %v2135 = vunpack.c.h.b16 %v2068
      %v2136 = vunpack.c.l.b16 %v2069
      %v2137 = vunpack.c.h.b16 %v2069
      %v2138 = vunpack.c.l.b16 %v2070
      %v2139 = vunpack.c.h.b16 %v2070
      %v2140 = vunpack.c.l.b16 %v2071
      %v2141 = vunpack.c.h.b16 %v2071
      %v2142 = vunpack.c.l.b16 %v2072
      %v2143 = vunpack.c.h.b16 %v2072
      %v2144 = vunpack.c.l.b16 %v2073
      %v2145 = vunpack.c.h.b16 %v2073
      %v2146 = vunpack.c.l.b16 %v2074
      %v2147 = vunpack.c.h.b16 %v2074
      %v2148 = vunpack.c.l.b16 %v2075
      %v2149 = vunpack.c.h.b16 %v2075
      %v2150 = vunpack.c.l.b16 %v2076
      %v2151 = vunpack.c.h.b16 %v2076
      %v2152 = vunpack.c.l.b16 %v2077
      %v2153 = vunpack.c.h.b16 %v2077
      %v2154 = vunpack.c.l.b16 %v2078
      %v2155 = vunpack.c.h.b16 %v2078
      %v2156 = vunpack.c.l.b16 %v2079
      %v2157 = vunpack.c.h.b16 %v2079
      %v2158 = vunpack.c.l.b16 %v2080
      %v2159 = vunpack.c.h.b16 %v2080
      %v2160 = vunpack.c.l.b16 %v2081
      %v2161 = vunpack.c.h.b16 %v2081
      %v2162 = vunpack.c.l.b16 %v2082
      %v2163 = vunpack.c.h.b16 %v2082
      %v2164 = vunpack.c.l.b16 %v2083
      %v2165 = vunpack.c.h.b16 %v2083
      %v2166 = vunpack.c.l.b16 %v2084
      %v2167 = vunpack.c.h.b16 %v2084
      %v2168 = vunpack.c.l.b16 %v2085
      %v2169 = vunpack.c.h.b16 %v2085
      %v2170 = vunpack.c.l.b16 %v2086
      %v2171 = vunpack.c.h.b16 %v2086
      %v2172 = vunpack.c.l.b16 %v2087
      %v2173 = vunpack.c.h.b16 %v2087
      %v2174 = vunpack.c.l.b16 %v2088
      %v2175 = vunpack.c.h.b16 %v2088
      %v2176 = vunpack.c.l.b16 %v2089
      %v2177 = vunpack.c.h.b16 %v2089
      %v2178 = vunpack.c.l.b16 %v2090
      %v2179 = vunpack.c.h.b16 %v2090
      %v2180 = vunpack.c.l.b16 %v2091
      %v2181 = vunpack.c.h.b16 %v2091
      %v2182 = vunpack.c.l.b16 %v2092
      %v2183 = vunpack.c.h.b16 %v2092
      %v2184 = vunpack.c.l.b16 %v2093
      %v2185 = vunpack.c.h.b16 %v2093
      %v2186 = vunpack.c.l.b16 %v2094
      %v2187 = vunpack.c.h.b16 %v2094
      %v2188 = vunpack.c.l.b16 %v2095
      %v2189 = vunpack.c.h.b16 %v2095
      %v2190 = vunpack.c.l.b16 %v2096
      %v2191 = vunpack.c.h.b16 %v2096
      %v2192 = vpack.c.b16 %v2134, %v2132
      %v2193 = vpack.c.b16 %v2135, %v2133
      %v2194 = vpack.c.b16 %v2138, %v2136
      %v2195 = vpack.c.b16 %v2139, %v2137
      %v2196 = vpack.c.b16 %v2142, %v2140
      %v2197 = vpack.c.b16 %v2143, %v2141
      %v2198 = vpack.c.b16 %v2146, %v2144
      %v2199 = vpack.c.b16 %v2147, %v2145
      %v2200 = vpack.c.b16 %v2150, %v2148
      %v2201 = vpack.c.b16 %v2151, %v2149
      %v2202 = vpack.c.b16 %v2154, %v2152
      %v2203 = vpack.c.b16 %v2155, %v2153
      %v2204 = vpack.c.b16 %v2158, %v2156
      %v2205 = vpack.c.b16 %v2159, %v2157
      %v2206 = vpack.c.b16 %v2162, %v2160
      %v2207 = vpack.c.b16 %v2163, %v2161
      %v2208 = vpack.c.b16 %v2166, %v2164
      %v2209 = vpack.c.b16 %v2167, %v2165
      %v2210 = vpack.c.b16 %v2170, %v2168
      %v2211 = vpack.c.b16 %v2171, %v2169
      %v2212 = vpack.c.b16 %v2174, %v2172
      %v2213 = vpack.c.b16 %v2175, %v2173
      %v2214 = vpack.c.b16 %v2178, %v2176
      %v2215 = vpack.c.b16 %v2179, %v2177
      %v2216 = vpack.c.b16 %v2182, %v2180
      %v2217 = vpack.c.b16 %v2183, %v2181
      %v2218 = vpack.c.b16 %v2186, %v2184
      %v2219 = vpack.c.b16 %v2187, %v2185
      %v2220 = vpack.c.b16 %v2190, %v2188
      %v2221 = vpack.c.b16 %v2191, %v2189
      %v2253 = vsel %vm1827, %v2100, 0
      %2255 = vmatprep.subr.bf16.mxu0 %v2193
      %2256 = vmatpush1.bf16.msra.mxu0 %v2192
      %2257 = vmatprep.subr.bf16.mxu0 %v2195
      %2258 = vmatpush1.bf16.msra.mxu0 %v2194
      %2259 = vmatprep.subr.bf16.mxu0 %v2197
      %2260 = vmatpush1.bf16.msra.mxu0 %v2196
      %2261 = vmatprep.subr.bf16.mxu0 %v2199
      %2262 = vmatpush1.bf16.msra.mxu0 %v2198
      %2263 = vmatprep.subr.bf16.mxu0 %v2201
      %2264 = vmatpush1.bf16.msra.mxu0 %v2200
      %2265 = vmatprep.subr.bf16.mxu0 %v2203
      %2266 = vmatpush1.bf16.msra.mxu0 %v2202
      %2267 = vmatprep.subr.bf16.mxu0 %v2205
      %2268 = vmatpush1.bf16.msra.mxu0 %v2204
      %2269 = vmatprep.subr.bf16.mxu0 %v2207
      %2270 = vmatpush1.bf16.msra.mxu0 %v2206
      %2271 = vmatprep.subr.bf16.mxu0 %v2209
      %2272 = vmatpush1.bf16.msra.mxu0 %v2208
      %2273 = vmatprep.subr.bf16.mxu0 %v2211
      %2274 = vmatpush1.bf16.msra.mxu0 %v2210
      %2275 = vmatprep.subr.bf16.mxu0 %v2213
      %2276 = vmatpush1.bf16.msra.mxu0 %v2212
      %2277 = vmatprep.subr.bf16.mxu0 %v2215
      %2278 = vmatpush1.bf16.msra.mxu0 %v2214
      %2279 = vmatprep.subr.bf16.mxu0 %v2217
      %2280 = vmatpush1.bf16.msra.mxu0 %v2216
      %2281 = vmatprep.subr.bf16.mxu0 %v2219
      %2282 = vmatpush1.bf16.msra.mxu0 %v2218
      %2283 = vmatprep.subr.bf16.mxu0 %v2221
      %2284 = vmatpush1.bf16.msra.mxu0 %v2220
      %2285 = vmatprep.subr.bf16.mxu0 0
      %2286 = vmatpush1.bf16.msra.mxu0 0
      %2287 = vmatprep.mubr.bf16.mxu0 %v2253
      %2288 = vmatmul.mubr.bf16.gmra.mrb[0].mxu0 %v2099
      %v2289 = vpop.f32.mrb[0].mxu0
      %v2290 = vadd.f32 0.0, %v2289
      %v2291 = vpop.f32.mrb[0].mxu0
      %v2292 = vadd.f32 0.0, %v2291
      %v2293 = vpop.f32.mrb[0].mxu0
      %v2294 = vpop.f32.mrb[0].mxu0
      %2295 = vdwg.mxu0
      %v2296 = vadd.f32 %v2060, %v2290
      %v2297 = vadd.f32 %v2062, %v2292
      %s2298 = scalar_lea.vmem %s3, 720
      %v2299 = vld [vmem:[%s2298] sm:$0xff]
      %v2300 = vld [vmem:[%s2298 + $0x8] sm:$0xff]
      %v2301 = vld [vmem:[%s2298 + $0x10] sm:$0xff]
      %v2302 = vld [vmem:[%s2298 + $0x18] sm:$0xff]
      %v2303 = vld [vmem:[%s2298 + $0x20] sm:$0xff]
      %v2304 = vld [vmem:[%s2298 + $0x28] sm:$0xff]
      %v2305 = vld [vmem:[%s2298 + $0x30] sm:$0xff]
      %v2306 = vld [vmem:[%s2298 + $0x38] sm:$0xff]
      %v2307 = vld [vmem:[%s2298 + $0x40] sm:$0xff]
      %v2308 = vld [vmem:[%s2298 + $0x48] sm:$0xff]
      %v2309 = vld [vmem:[%s2298 + $0x50] sm:$0xff]
      %v2310 = vld [vmem:[%s2298 + $0x58] sm:$0xff]
      %v2311 = vld [vmem:[%s2298 + $0x60] sm:$0xff]
      %v2312 = vld [vmem:[%s2298 + $0x68] sm:$0xff]
      %v2313 = vld [vmem:[%s2298 + $0x70] sm:$0xff]
      %v2314 = vld [vmem:[%s2298 + $0x78] sm:$0xff]
      %v2315 = vld [vmem:[%s2298 + $0x80] sm:$0xff]
      %v2316 = vld [vmem:[%s2298 + $0x88] sm:$0xff]
      %v2317 = vld [vmem:[%s2298 + $0x90] sm:$0xff]
      %v2318 = vld [vmem:[%s2298 + $0x98] sm:$0xff]
      %v2319 = vld [vmem:[%s2298 + $0xa0] sm:$0xff]
      %v2320 = vld [vmem:[%s2298 + $0xa8] sm:$0xff]
      %v2321 = vld [vmem:[%s2298 + $0xb0] sm:$0xff]
      %v2322 = vld [vmem:[%s2298 + $0xb8] sm:$0xff]
      %v2323 = vld [vmem:[%s2298 + $0xc0] sm:$0xff]
      %v2324 = vld [vmem:[%s2298 + $0xc8] sm:$0xff]
      %v2325 = vld [vmem:[%s2298 + $0xd0] sm:$0xff]
      %v2326 = vld [vmem:[%s2298 + $0xd8] sm:$0xff]
      %v2327 = vld [vmem:[%s2298 + $0xe0] sm:$0xff]
      %v2328 = vld [vmem:[%s2298 + $0xe8] sm:$0xff]
      %v2329 = vrot.slane %v1663, 1
      %v2330 = vrot.slane %v1665, 2
      %v2331 = vor.u32 %v2329, %v2330
      %v2332 = vrot.slane %v1670, 1
      %v2333 = vrot.slane %v1672, 2
      %v2334 = vor.u32 %v2332, %v2333
      %v2366 = vunpack.c.l.b16 %v2299
      %v2367 = vunpack.c.h.b16 %v2299
      %v2368 = vunpack.c.l.b16 %v2300
      %v2369 = vunpack.c.h.b16 %v2300
      %v2370 = vunpack.c.l.b16 %v2301
      %v2371 = vunpack.c.h.b16 %v2301
      %v2372 = vunpack.c.l.b16 %v2302
      %v2373 = vunpack.c.h.b16 %v2302
      %v2374 = vunpack.c.l.b16 %v2303
      %v2375 = vunpack.c.h.b16 %v2303
      %v2376 = vunpack.c.l.b16 %v2304
      %v2377 = vunpack.c.h.b16 %v2304
      %v2378 = vunpack.c.l.b16 %v2305
      %v2379 = vunpack.c.h.b16 %v2305
      %v2380 = vunpack.c.l.b16 %v2306
      %v2381 = vunpack.c.h.b16 %v2306
      %v2382 = vunpack.c.l.b16 %v2307
      %v2383 = vunpack.c.h.b16 %v2307
      %v2384 = vunpack.c.l.b16 %v2308
      %v2385 = vunpack.c.h.b16 %v2308
      %v2386 = vunpack.c.l.b16 %v2309
      %v2387 = vunpack.c.h.b16 %v2309
      %v2388 = vunpack.c.l.b16 %v2310
      %v2389 = vunpack.c.h.b16 %v2310
      %v2390 = vunpack.c.l.b16 %v2311
      %v2391 = vunpack.c.h.b16 %v2311
      %v2392 = vunpack.c.l.b16 %v2312
      %v2393 = vunpack.c.h.b16 %v2312
      %v2394 = vunpack.c.l.b16 %v2313
      %v2395 = vunpack.c.h.b16 %v2313
      %v2396 = vunpack.c.l.b16 %v2314
      %v2397 = vunpack.c.h.b16 %v2314
      %v2398 = vunpack.c.l.b16 %v2315
      %v2399 = vunpack.c.h.b16 %v2315
      %v2400 = vunpack.c.l.b16 %v2316
      %v2401 = vunpack.c.h.b16 %v2316
      %v2402 = vunpack.c.l.b16 %v2317
      %v2403 = vunpack.c.h.b16 %v2317
      %v2404 = vunpack.c.l.b16 %v2318
      %v2405 = vunpack.c.h.b16 %v2318
      %v2406 = vunpack.c.l.b16 %v2319
      %v2407 = vunpack.c.h.b16 %v2319
      %v2408 = vunpack.c.l.b16 %v2320
      %v2409 = vunpack.c.h.b16 %v2320
      %v2410 = vunpack.c.l.b16 %v2321
      %v2411 = vunpack.c.h.b16 %v2321
      %v2412 = vunpack.c.l.b16 %v2322
      %v2413 = vunpack.c.h.b16 %v2322
      %v2414 = vunpack.c.l.b16 %v2323
      %v2415 = vunpack.c.h.b16 %v2323
      %v2416 = vunpack.c.l.b16 %v2324
      %v2417 = vunpack.c.h.b16 %v2324
      %v2418 = vunpack.c.l.b16 %v2325
      %v2419 = vunpack.c.h.b16 %v2325
      %v2420 = vunpack.c.l.b16 %v2326
      %v2421 = vunpack.c.h.b16 %v2326
      %v2422 = vunpack.c.l.b16 %v2327
      %v2423 = vunpack.c.h.b16 %v2327
      %v2424 = vunpack.c.l.b16 %v2328
      %v2425 = vunpack.c.h.b16 %v2328
      %v2426 = vpack.c.b16 %v2368, %v2366
      %v2427 = vpack.c.b16 %v2369, %v2367
      %v2428 = vpack.c.b16 %v2372, %v2370
      %v2429 = vpack.c.b16 %v2373, %v2371
      %v2430 = vpack.c.b16 %v2376, %v2374
      %v2431 = vpack.c.b16 %v2377, %v2375
      %v2432 = vpack.c.b16 %v2380, %v2378
      %v2433 = vpack.c.b16 %v2381, %v2379
      %v2434 = vpack.c.b16 %v2384, %v2382
      %v2435 = vpack.c.b16 %v2385, %v2383
      %v2436 = vpack.c.b16 %v2388, %v2386
      %v2437 = vpack.c.b16 %v2389, %v2387
      %v2438 = vpack.c.b16 %v2392, %v2390
      %v2439 = vpack.c.b16 %v2393, %v2391
      %v2440 = vpack.c.b16 %v2396, %v2394
      %v2441 = vpack.c.b16 %v2397, %v2395
      %v2442 = vpack.c.b16 %v2400, %v2398
      %v2443 = vpack.c.b16 %v2401, %v2399
      %v2444 = vpack.c.b16 %v2404, %v2402
      %v2445 = vpack.c.b16 %v2405, %v2403
      %v2446 = vpack.c.b16 %v2408, %v2406
      %v2447 = vpack.c.b16 %v2409, %v2407
      %v2448 = vpack.c.b16 %v2412, %v2410
      %v2449 = vpack.c.b16 %v2413, %v2411
      %v2450 = vpack.c.b16 %v2416, %v2414
      %v2451 = vpack.c.b16 %v2417, %v2415
      %v2452 = vpack.c.b16 %v2420, %v2418
      %v2453 = vpack.c.b16 %v2421, %v2419
      %v2454 = vpack.c.b16 %v2424, %v2422
      %v2455 = vpack.c.b16 %v2425, %v2423
      %v2487 = vsel %vm1827, %v2334, 0
      %2489 = vmatprep.subr.bf16.mxu0 %v2427
      %2490 = vmatpush1.bf16.msra.mxu0 %v2426
      %2491 = vmatprep.subr.bf16.mxu0 %v2429
      %2492 = vmatpush1.bf16.msra.mxu0 %v2428
      %2493 = vmatprep.subr.bf16.mxu0 %v2431
      %2494 = vmatpush1.bf16.msra.mxu0 %v2430
      %2495 = vmatprep.subr.bf16.mxu0 %v2433
      %2496 = vmatpush1.bf16.msra.mxu0 %v2432
      %2497 = vmatprep.subr.bf16.mxu0 %v2435
      %2498 = vmatpush1.bf16.msra.mxu0 %v2434
      %2499 = vmatprep.subr.bf16.mxu0 %v2437
      %2500 = vmatpush1.bf16.msra.mxu0 %v2436
      %2501 = vmatprep.subr.bf16.mxu0 %v2439
      %2502 = vmatpush1.bf16.msra.mxu0 %v2438
      %2503 = vmatprep.subr.bf16.mxu0 %v2441
      %2504 = vmatpush1.bf16.msra.mxu0 %v2440
      %2505 = vmatprep.subr.bf16.mxu0 %v2443
      %2506 = vmatpush1.bf16.msra.mxu0 %v2442
      %2507 = vmatprep.subr.bf16.mxu0 %v2445
      %2508 = vmatpush1.bf16.msra.mxu0 %v2444
      %2509 = vmatprep.subr.bf16.mxu0 %v2447
      %2510 = vmatpush1.bf16.msra.mxu0 %v2446
      %2511 = vmatprep.subr.bf16.mxu0 %v2449
      %2512 = vmatpush1.bf16.msra.mxu0 %v2448
      %2513 = vmatprep.subr.bf16.mxu0 %v2451
      %2514 = vmatpush1.bf16.msra.mxu0 %v2450
      %2515 = vmatprep.subr.bf16.mxu0 %v2453
      %2516 = vmatpush1.bf16.msra.mxu0 %v2452
      %2517 = vmatprep.subr.bf16.mxu0 %v2455
      %2518 = vmatpush1.bf16.msra.mxu0 %v2454
      %2519 = vmatprep.subr.bf16.mxu0 0
      %2520 = vmatpush1.bf16.msra.mxu0 0
      %2521 = vmatprep.mubr.bf16.mxu0 %v2487
      %2522 = vmatmul.mubr.bf16.gmra.mrb[0].mxu0 %v2331
      %v2523 = vpop.f32.mrb[0].mxu0
      %v2524 = vadd.f32 0.0, %v2523
      %v2525 = vpop.f32.mrb[0].mxu0
      %v2526 = vadd.f32 0.0, %v2525
      %v2527 = vpop.f32.mrb[0].mxu0
      %v2528 = vpop.f32.mrb[0].mxu0
      %2529 = vdwg.mxu0
      %v2530 = vadd.f32 %v2296, %v2524
      %v2531 = vadd.f32 %v2297, %v2526
      %s2532 = scalar_lea.vmem %s3, 960
      %v2533 = vld [vmem:[%s2532] sm:$0xff]
      %v2534 = vld [vmem:[%s2532 + $0x8] sm:$0xff]
      %v2535 = vld [vmem:[%s2532 + $0x10] sm:$0xff]
      %v2536 = vld [vmem:[%s2532 + $0x18] sm:$0xff]
      %v2537 = vld [vmem:[%s2532 + $0x20] sm:$0xff]
      %v2538 = vld [vmem:[%s2532 + $0x28] sm:$0xff]
      %v2539 = vld [vmem:[%s2532 + $0x30] sm:$0xff]
      %v2540 = vld [vmem:[%s2532 + $0x38] sm:$0xff]
      %v2541 = vld [vmem:[%s2532 + $0x40] sm:$0xff]
      %v2542 = vld [vmem:[%s2532 + $0x48] sm:$0xff]
      %v2543 = vld [vmem:[%s2532 + $0x50] sm:$0xff]
      %v2544 = vld [vmem:[%s2532 + $0x58] sm:$0xff]
      %v2545 = vld [vmem:[%s2532 + $0x60] sm:$0xff]
      %v2546 = vld [vmem:[%s2532 + $0x68] sm:$0xff]
      %v2547 = vld [vmem:[%s2532 + $0x70] sm:$0xff]
      %v2548 = vld [vmem:[%s2532 + $0x78] sm:$0xff]
      %v2549 = vld [vmem:[%s2532 + $0x80] sm:$0xff]
      %v2550 = vld [vmem:[%s2532 + $0x88] sm:$0xff]
      %v2551 = vld [vmem:[%s2532 + $0x90] sm:$0xff]
      %v2552 = vld [vmem:[%s2532 + $0x98] sm:$0xff]
      %v2553 = vld [vmem:[%s2532 + $0xa0] sm:$0xff]
      %v2554 = vld [vmem:[%s2532 + $0xa8] sm:$0xff]
      %v2555 = vld [vmem:[%s2532 + $0xb0] sm:$0xff]
      %v2556 = vld [vmem:[%s2532 + $0xb8] sm:$0xff]
      %v2557 = vld [vmem:[%s2532 + $0xc0] sm:$0xff]
      %v2558 = vld [vmem:[%s2532 + $0xc8] sm:$0xff]
      %v2559 = vld [vmem:[%s2532 + $0xd0] sm:$0xff]
      %v2560 = vld [vmem:[%s2532 + $0xd8] sm:$0xff]
      %v2561 = vld [vmem:[%s2532 + $0xe0] sm:$0xff]
      %v2562 = vld [vmem:[%s2532 + $0xe8] sm:$0xff]
      %v2563 = vrot.slane %v1629, 2
      %v2564 = vrot.slane %v1630, 2
      %v2596 = vunpack.c.l.b16 %v2533
      %v2597 = vunpack.c.h.b16 %v2533
      %v2598 = vunpack.c.l.b16 %v2534
      %v2599 = vunpack.c.h.b16 %v2534
      %v2600 = vunpack.c.l.b16 %v2535
      %v2601 = vunpack.c.h.b16 %v2535
      %v2602 = vunpack.c.l.b16 %v2536
      %v2603 = vunpack.c.h.b16 %v2536
      %v2604 = vunpack.c.l.b16 %v2537
      %v2605 = vunpack.c.h.b16 %v2537
      %v2606 = vunpack.c.l.b16 %v2538
      %v2607 = vunpack.c.h.b16 %v2538
      %v2608 = vunpack.c.l.b16 %v2539
      %v2609 = vunpack.c.h.b16 %v2539
      %v2610 = vunpack.c.l.b16 %v2540
      %v2611 = vunpack.c.h.b16 %v2540
      %v2612 = vunpack.c.l.b16 %v2541
      %v2613 = vunpack.c.h.b16 %v2541
      %v2614 = vunpack.c.l.b16 %v2542
      %v2615 = vunpack.c.h.b16 %v2542
      %v2616 = vunpack.c.l.b16 %v2543
      %v2617 = vunpack.c.h.b16 %v2543
      %v2618 = vunpack.c.l.b16 %v2544
      %v2619 = vunpack.c.h.b16 %v2544
      %v2620 = vunpack.c.l.b16 %v2545
      %v2621 = vunpack.c.h.b16 %v2545
      %v2622 = vunpack.c.l.b16 %v2546
      %v2623 = vunpack.c.h.b16 %v2546
      %v2624 = vunpack.c.l.b16 %v2547
      %v2625 = vunpack.c.h.b16 %v2547
      %v2626 = vunpack.c.l.b16 %v2548
      %v2627 = vunpack.c.h.b16 %v2548
      %v2628 = vunpack.c.l.b16 %v2549
      %v2629 = vunpack.c.h.b16 %v2549
      %v2630 = vunpack.c.l.b16 %v2550
      %v2631 = vunpack.c.h.b16 %v2550
      %v2632 = vunpack.c.l.b16 %v2551
      %v2633 = vunpack.c.h.b16 %v2551
      %v2634 = vunpack.c.l.b16 %v2552
      %v2635 = vunpack.c.h.b16 %v2552
      %v2636 = vunpack.c.l.b16 %v2553
      %v2637 = vunpack.c.h.b16 %v2553
      %v2638 = vunpack.c.l.b16 %v2554
      %v2639 = vunpack.c.h.b16 %v2554
      %v2640 = vunpack.c.l.b16 %v2555
      %v2641 = vunpack.c.h.b16 %v2555
      %v2642 = vunpack.c.l.b16 %v2556
      %v2643 = vunpack.c.h.b16 %v2556
      %v2644 = vunpack.c.l.b16 %v2557
      %v2645 = vunpack.c.h.b16 %v2557
      %v2646 = vunpack.c.l.b16 %v2558
      %v2647 = vunpack.c.h.b16 %v2558
      %v2648 = vunpack.c.l.b16 %v2559
      %v2649 = vunpack.c.h.b16 %v2559
      %v2650 = vunpack.c.l.b16 %v2560
      %v2651 = vunpack.c.h.b16 %v2560
      %v2652 = vunpack.c.l.b16 %v2561
      %v2653 = vunpack.c.h.b16 %v2561
      %v2654 = vunpack.c.l.b16 %v2562
      %v2655 = vunpack.c.h.b16 %v2562
      %v2656 = vpack.c.b16 %v2598, %v2596
      %v2657 = vpack.c.b16 %v2599, %v2597
      %v2658 = vpack.c.b16 %v2602, %v2600
      %v2659 = vpack.c.b16 %v2603, %v2601
      %v2660 = vpack.c.b16 %v2606, %v2604
      %v2661 = vpack.c.b16 %v2607, %v2605
      %v2662 = vpack.c.b16 %v2610, %v2608
      %v2663 = vpack.c.b16 %v2611, %v2609
      %v2664 = vpack.c.b16 %v2614, %v2612
      %v2665 = vpack.c.b16 %v2615, %v2613
      %v2666 = vpack.c.b16 %v2618, %v2616
      %v2667 = vpack.c.b16 %v2619, %v2617
      %v2668 = vpack.c.b16 %v2622, %v2620
      %v2669 = vpack.c.b16 %v2623, %v2621
      %v2670 = vpack.c.b16 %v2626, %v2624
      %v2671 = vpack.c.b16 %v2627, %v2625
      %v2672 = vpack.c.b16 %v2630, %v2628
      %v2673 = vpack.c.b16 %v2631, %v2629
      %v2674 = vpack.c.b16 %v2634, %v2632
      %v2675 = vpack.c.b16 %v2635, %v2633
      %v2676 = vpack.c.b16 %v2638, %v2636
      %v2677 = vpack.c.b16 %v2639, %v2637
      %v2678 = vpack.c.b16 %v2642, %v2640
      %v2679 = vpack.c.b16 %v2643, %v2641
      %v2680 = vpack.c.b16 %v2646, %v2644
      %v2681 = vpack.c.b16 %v2647, %v2645
      %v2682 = vpack.c.b16 %v2650, %v2648
      %v2683 = vpack.c.b16 %v2651, %v2649
      %v2684 = vpack.c.b16 %v2654, %v2652
      %v2685 = vpack.c.b16 %v2655, %v2653
      %v2717 = vsel %vm1827, %v2564, 0
      %2719 = vmatprep.subr.bf16.mxu0 %v2657
      %2720 = vmatpush1.bf16.msra.mxu0 %v2656
      %2721 = vmatprep.subr.bf16.mxu0 %v2659
      %2722 = vmatpush1.bf16.msra.mxu0 %v2658
      %2723 = vmatprep.subr.bf16.mxu0 %v2661
      %2724 = vmatpush1.bf16.msra.mxu0 %v2660
      %2725 = vmatprep.subr.bf16.mxu0 %v2663
      %2726 = vmatpush1.bf16.msra.mxu0 %v2662
      %2727 = vmatprep.subr.bf16.mxu0 %v2665
      %2728 = vmatpush1.bf16.msra.mxu0 %v2664
      %2729 = vmatprep.subr.bf16.mxu0 %v2667
      %2730 = vmatpush1.bf16.msra.mxu0 %v2666
      %2731 = vmatprep.subr.bf16.mxu0 %v2669
      %2732 = vmatpush1.bf16.msra.mxu0 %v2668
      %2733 = vmatprep.subr.bf16.mxu0 %v2671
      %2734 = vmatpush1.bf16.msra.mxu0 %v2670
      %2735 = vmatprep.subr.bf16.mxu0 %v2673
      %2736 = vmatpush1.bf16.msra.mxu0 %v2672
      %2737 = vmatprep.subr.bf16.mxu0 %v2675
      %2738 = vmatpush1.bf16.msra.mxu0 %v2674
      %2739 = vmatprep.subr.bf16.mxu0 %v2677
      %2740 = vmatpush1.bf16.msra.mxu0 %v2676
      %2741 = vmatprep.subr.bf16.mxu0 %v2679
      %2742 = vmatpush1.bf16.msra.mxu0 %v2678
      %2743 = vmatprep.subr.bf16.mxu0 %v2681
      %2744 = vmatpush1.bf16.msra.mxu0 %v2680
      %2745 = vmatprep.subr.bf16.mxu0 %v2683
      %2746 = vmatpush1.bf16.msra.mxu0 %v2682
      %2747 = vmatprep.subr.bf16.mxu0 %v2685
      %2748 = vmatpush1.bf16.msra.mxu0 %v2684
      %2749 = vmatprep.subr.bf16.mxu0 0
      %2750 = vmatpush1.bf16.msra.mxu0 0
      %2751 = vmatprep.mubr.bf16.mxu0 %v2717
      %2752 = vmatmul.mubr.bf16.gmra.mrb[0].mxu0 %v2563
      %v2753 = vpop.f32.mrb[0].mxu0
      %v2754 = vadd.f32 0.0, %v2753
      %v2755 = vpop.f32.mrb[0].mxu0
      %v2756 = vadd.f32 0.0, %v2755
      %v2757 = vpop.f32.mrb[0].mxu0
      %v2758 = vpop.f32.mrb[0].mxu0
      %2759 = vdwg.mxu0
      %v2760 = vadd.f32 %v2530, %v2754
      %v2761 = vadd.f32 %v2531, %v2756
      %v2762 = vld [vmem:[%s8] sm:$0xf]
      %vm2763 = vcmask 64512
      %v2765 = vsel %vm2763, %v2762, 0
      %2767 = vmatprep.subr.mxu0 %v2761
      %2768 = vmatpush1.msra.mxu0 %v2760
      %2769 = vmatprep.subr.mxu0 0.0
      %2770 = vmatpush1.msra.mxu0 0.0
      %2771 = vmatprep.subr.mxu0 0.0
      %2772 = vmatpush1.msra.mxu0 0.0
      %2773 = vmatprep.subr.mxu0 0.0
      %2774 = vmatpush1.msra.mxu0 0.0
      %2775 = vmatprep.subr.mxu0 0.0
      %2776 = vmatpush1.msra.mxu0 0.0
      %2777 = vmatprep.subr.mxu0 0.0
      %2778 = vmatpush1.msra.mxu0 0.0
      %2779 = vmatprep.subr.mxu0 0.0
      %2780 = vmatpush1.msra.mxu0 0.0
      %2781 = vmatprep.subr.mxu0 0.0
      %2782 = vmatpush1.msra.mxu0 0.0
      %2783 = vmatprep.subr.mxu0 0.0
      %2784 = vmatpush1.msra.mxu0 0.0
      %2785 = vmatprep.subr.mxu0 0.0
      %2786 = vmatpush1.msra.mxu0 0.0
      %2787 = vmatprep.subr.mxu0 0.0
      %2788 = vmatpush1.msra.mxu0 0.0
      %2789 = vmatprep.subr.mxu0 0.0
      %2790 = vmatpush1.msra.mxu0 0.0
      %2791 = vmatprep.subr.mxu0 0.0
      %2792 = vmatpush1.msra.mxu0 0.0
      %2793 = vmatprep.subr.mxu0 0.0
      %2794 = vmatpush1.msra.mxu0 0.0
      %2795 = vmatprep.subr.mxu0 0.0
      %2796 = vmatpush1.msra.mxu0 0.0
      %2797 = vmatprep.subr.mxu0 0.0
      %2798 = vmatpush1.msra.mxu0 0.0
      %2799 = vmatprep.subr.mxu0 0.0
      %2800 = vmatpush1.msra.mxu0 0.0
      %2801 = vmatprep.subr.mxu0 0.0
      %2802 = vmatpush1.msra.mxu0 0.0
      %2803 = vmatprep.subr.mxu0 0.0
      %2804 = vmatpush1.msra.mxu0 0.0
      %2805 = vmatprep.subr.mxu0 0.0
      %2806 = vmatpush1.msra.mxu0 0.0
      %2807 = vmatprep.subr.mxu0 0.0
      %2808 = vmatpush1.msra.mxu0 0.0
      %2809 = vmatprep.subr.mxu0 0.0
      %2810 = vmatpush1.msra.mxu0 0.0
      %2811 = vmatprep.subr.mxu0 0.0
      %2812 = vmatpush1.msra.mxu0 0.0
      %2813 = vmatprep.subr.mxu0 0.0
      %2814 = vmatpush1.msra.mxu0 0.0
      %2815 = vmatprep.subr.mxu0 0.0
      %2816 = vmatpush1.msra.mxu0 0.0
      %2817 = vmatprep.subr.mxu0 0.0
      %2818 = vmatpush1.msra.mxu0 0.0
      %2819 = vmatprep.subr.mxu0 0.0
      %2820 = vmatpush1.msra.mxu0 0.0
      %2821 = vmatprep.subr.mxu0 0.0
      %2822 = vmatpush1.msra.mxu0 0.0
      %2823 = vmatprep.subr.mxu0 0.0
      %2824 = vmatpush1.msra.mxu0 0.0
      %2825 = vmatprep.subr.mxu0 0.0
      %2826 = vmatpush1.msra.mxu0 0.0
      %2827 = vmatprep.subr.mxu0 0.0
      %2828 = vmatpush1.msra.mxu0 0.0
      %2829 = vmatprep.subr.mxu0 0.0
      %2830 = vmatpush1.msra.mxu0 0.0
      %2831 = vmatprep.mubr.f32.mxu0 0.0
      %2832 = vmatmul.mubr.f32.gmra.mrb[0].mxu0 %v2765
      %v2833 = vpop.f32.mrb[0].mxu0
      %v2834 = vadd.f32 0.0, %v2833
      %v2835 = vpop.f32.mrb[0].mxu0
      %v2836 = vadd.f32 0.0, %v2835
      %2837 = vdwg.mxu0
      %s2838 = scalar_lea.vmem %s8, 4
      %v2839 = vld [vmem:[%s2838] sm:$0xf]
      %v2841 = vsel %vm2763, %v2839, 0
      %2843 = vmatprep.subr.mxu0 %v2761
      %2844 = vmatpush1.msra.mxu0 %v2760
      %2845 = vmatprep.subr.mxu0 0.0
      %2846 = vmatpush1.msra.mxu0 0.0
      %2847 = vmatprep.subr.mxu0 0.0
      %2848 = vmatpush1.msra.mxu0 0.0
      %2849 = vmatprep.subr.mxu0 0.0
      %2850 = vmatpush1.msra.mxu0 0.0
      %2851 = vmatprep.subr.mxu0 0.0
      %2852 = vmatpush1.msra.mxu0 0.0
      %2853 = vmatprep.subr.mxu0 0.0
      %2854 = vmatpush1.msra.mxu0 0.0
      %2855 = vmatprep.subr.mxu0 0.0
      %2856 = vmatpush1.msra.mxu0 0.0
      %2857 = vmatprep.subr.mxu0 0.0
      %2858 = vmatpush1.msra.mxu0 0.0
      %2859 = vmatprep.subr.mxu0 0.0
      %2860 = vmatpush1.msra.mxu0 0.0
      %2861 = vmatprep.subr.mxu0 0.0
      %2862 = vmatpush1.msra.mxu0 0.0
      %2863 = vmatprep.subr.mxu0 0.0
      %2864 = vmatpush1.msra.mxu0 0.0
      %2865 = vmatprep.subr.mxu0 0.0
      %2866 = vmatpush1.msra.mxu0 0.0
      %2867 = vmatprep.subr.mxu0 0.0
      %2868 = vmatpush1.msra.mxu0 0.0
      %2869 = vmatprep.subr.mxu0 0.0
      %2870 = vmatpush1.msra.mxu0 0.0
      %2871 = vmatprep.subr.mxu0 0.0
      %2872 = vmatpush1.msra.mxu0 0.0
      %2873 = vmatprep.subr.mxu0 0.0
      %2874 = vmatpush1.msra.mxu0 0.0
      %2875 = vmatprep.subr.mxu0 0.0
      %2876 = vmatpush1.msra.mxu0 0.0
      %2877 = vmatprep.subr.mxu0 0.0
      %2878 = vmatpush1.msra.mxu0 0.0
      %2879 = vmatprep.subr.mxu0 0.0
      %2880 = vmatpush1.msra.mxu0 0.0
      %2881 = vmatprep.subr.mxu0 0.0
      %2882 = vmatpush1.msra.mxu0 0.0
      %2883 = vmatprep.subr.mxu0 0.0
      %2884 = vmatpush1.msra.mxu0 0.0
      %2885 = vmatprep.subr.mxu0 0.0
      %2886 = vmatpush1.msra.mxu0 0.0
      %2887 = vmatprep.subr.mxu0 0.0
      %2888 = vmatpush1.msra.mxu0 0.0
      %2889 = vmatprep.subr.mxu0 0.0
      %2890 = vmatpush1.msra.mxu0 0.0
      %2891 = vmatprep.subr.mxu0 0.0
      %2892 = vmatpush1.msra.mxu0 0.0
      %2893 = vmatprep.subr.mxu0 0.0
      %2894 = vmatpush1.msra.mxu0 0.0
      %2895 = vmatprep.subr.mxu0 0.0
      %2896 = vmatpush1.msra.mxu0 0.0
      %2897 = vmatprep.subr.mxu0 0.0
      %2898 = vmatpush1.msra.mxu0 0.0
      %2899 = vmatprep.subr.mxu0 0.0
      %2900 = vmatpush1.msra.mxu0 0.0
      %2901 = vmatprep.subr.mxu0 0.0
      %2902 = vmatpush1.msra.mxu0 0.0
      %2903 = vmatprep.subr.mxu0 0.0
      %2904 = vmatpush1.msra.mxu0 0.0
      %2905 = vmatprep.subr.mxu0 0.0
      %2906 = vmatpush1.msra.mxu0 0.0
      %2907 = vmatprep.mubr.f32.mxu0 0.0
      %2908 = vmatmul.mubr.f32.gmra.mrb[0].mxu0 %v2841
      %v2909 = vpop.f32.mrb[0].mxu0
      %v2910 = vadd.f32 0.0, %v2909
      %v2911 = vpop.f32.mrb[0].mxu0
      %v2912 = vadd.f32 0.0, %v2911
      %2913 = vdwg.mxu0
      %v2914 = vmax.f32 %v2834, %v2910
      %v2915 = vmax.f32 %v2836, %v2912
      %s2916 = scalar_lea.vmem %s3, 1200
      %v2917 = vld [vmem:[%s2916] sm:$0xff]
      %v2918 = vld [vmem:[%s2916 + $0x8] sm:$0xff]
      %v2919 = vld [vmem:[%s2916 + $0x10] sm:$0xff]
      %v2920 = vld [vmem:[%s2916 + $0x18] sm:$0xff]
      %v2921 = vld [vmem:[%s2916 + $0x20] sm:$0xff]
      %v2922 = vld [vmem:[%s2916 + $0x28] sm:$0xff]
      %v2923 = vld [vmem:[%s2916 + $0x30] sm:$0xff]
      %v2924 = vld [vmem:[%s2916 + $0x38] sm:$0xff]
      %v2925 = vld [vmem:[%s2916 + $0x40] sm:$0xff]
      %v2926 = vld [vmem:[%s2916 + $0x48] sm:$0xff]
      %v2927 = vld [vmem:[%s2916 + $0x50] sm:$0xff]
      %v2928 = vld [vmem:[%s2916 + $0x58] sm:$0xff]
      %v2929 = vld [vmem:[%s2916 + $0x60] sm:$0xff]
      %v2930 = vld [vmem:[%s2916 + $0x68] sm:$0xff]
      %v2931 = vld [vmem:[%s2916 + $0x70] sm:$0xff]
      %v2932 = vld [vmem:[%s2916 + $0x78] sm:$0xff]
      %v2933 = vld [vmem:[%s2916 + $0x80] sm:$0xff]
      %v2934 = vld [vmem:[%s2916 + $0x88] sm:$0xff]
      %v2935 = vld [vmem:[%s2916 + $0x90] sm:$0xff]
      %v2936 = vld [vmem:[%s2916 + $0x98] sm:$0xff]
      %v2937 = vld [vmem:[%s2916 + $0xa0] sm:$0xff]
      %v2938 = vld [vmem:[%s2916 + $0xa8] sm:$0xff]
      %v2939 = vld [vmem:[%s2916 + $0xb0] sm:$0xff]
      %v2940 = vld [vmem:[%s2916 + $0xb8] sm:$0xff]
      %v2941 = vld [vmem:[%s2916 + $0xc0] sm:$0xff]
      %v2942 = vld [vmem:[%s2916 + $0xc8] sm:$0xff]
      %v2943 = vld [vmem:[%s2916 + $0xd0] sm:$0xff]
      %v2944 = vld [vmem:[%s2916 + $0xd8] sm:$0xff]
      %v2945 = vld [vmem:[%s2916 + $0xe0] sm:$0xff]
      %v2946 = vld [vmem:[%s2916 + $0xe8] sm:$0xff]
      %s2947 = scalar_lea.vmem %s3, 1440
      %v2948 = vld [vmem:[%s2947] sm:$0xff]
      %v2949 = vld [vmem:[%s2947 + $0x8] sm:$0xff]
      %v2950 = vld [vmem:[%s2947 + $0x10] sm:$0xff]
      %v2951 = vld [vmem:[%s2947 + $0x18] sm:$0xff]
      %v2952 = vld [vmem:[%s2947 + $0x20] sm:$0xff]
      %v2953 = vld [vmem:[%s2947 + $0x28] sm:$0xff]
      %v2954 = vld [vmem:[%s2947 + $0x30] sm:$0xff]
      %v2955 = vld [vmem:[%s2947 + $0x38] sm:$0xff]
      %v2956 = vld [vmem:[%s2947 + $0x40] sm:$0xff]
      %v2957 = vld [vmem:[%s2947 + $0x48] sm:$0xff]
      %v2958 = vld [vmem:[%s2947 + $0x50] sm:$0xff]
      %v2959 = vld [vmem:[%s2947 + $0x58] sm:$0xff]
      %v2960 = vld [vmem:[%s2947 + $0x60] sm:$0xff]
      %v2961 = vld [vmem:[%s2947 + $0x68] sm:$0xff]
      %v2962 = vld [vmem:[%s2947 + $0x70] sm:$0xff]
      %v2963 = vld [vmem:[%s2947 + $0x78] sm:$0xff]
      %v2964 = vld [vmem:[%s2947 + $0x80] sm:$0xff]
      %v2965 = vld [vmem:[%s2947 + $0x88] sm:$0xff]
      %v2966 = vld [vmem:[%s2947 + $0x90] sm:$0xff]
      %v2967 = vld [vmem:[%s2947 + $0x98] sm:$0xff]
      %v2968 = vld [vmem:[%s2947 + $0xa0] sm:$0xff]
      %v2969 = vld [vmem:[%s2947 + $0xa8] sm:$0xff]
      %v2970 = vld [vmem:[%s2947 + $0xb0] sm:$0xff]
      %v2971 = vld [vmem:[%s2947 + $0xb8] sm:$0xff]
      %v2972 = vld [vmem:[%s2947 + $0xc0] sm:$0xff]
      %v2973 = vld [vmem:[%s2947 + $0xc8] sm:$0xff]
      %v2974 = vld [vmem:[%s2947 + $0xd0] sm:$0xff]
      %v2975 = vld [vmem:[%s2947 + $0xd8] sm:$0xff]
      %v2976 = vld [vmem:[%s2947 + $0xe0] sm:$0xff]
      %v2977 = vld [vmem:[%s2947 + $0xe8] sm:$0xff]
      %v3008 = vunpack.c.l.b16 %v2948
      %v3009 = vunpack.c.h.b16 %v2948
      %v3010 = vunpack.c.l.b16 %v2949
      %v3011 = vunpack.c.h.b16 %v2949
      %v3012 = vunpack.c.l.b16 %v2950
      %v3013 = vunpack.c.h.b16 %v2950
      %v3014 = vunpack.c.l.b16 %v2951
      %v3015 = vunpack.c.h.b16 %v2951
      %v3016 = vunpack.c.l.b16 %v2952
      %v3017 = vunpack.c.h.b16 %v2952
      %v3018 = vunpack.c.l.b16 %v2953
      %v3019 = vunpack.c.h.b16 %v2953
      %v3020 = vunpack.c.l.b16 %v2954
      %v3021 = vunpack.c.h.b16 %v2954
      %v3022 = vunpack.c.l.b16 %v2955
      %v3023 = vunpack.c.h.b16 %v2955
      %v3024 = vunpack.c.l.b16 %v2956
      %v3025 = vunpack.c.h.b16 %v2956
      %v3026 = vunpack.c.l.b16 %v2957
      %v3027 = vunpack.c.h.b16 %v2957
      %v3028 = vunpack.c.l.b16 %v2958
      %v3029 = vunpack.c.h.b16 %v2958
      %v3030 = vunpack.c.l.b16 %v2959
      %v3031 = vunpack.c.h.b16 %v2959
      %v3032 = vunpack.c.l.b16 %v2960
      %v3033 = vunpack.c.h.b16 %v2960
      %v3034 = vunpack.c.l.b16 %v2961
      %v3035 = vunpack.c.h.b16 %v2961
      %v3036 = vunpack.c.l.b16 %v2962
      %v3037 = vunpack.c.h.b16 %v2962
      %v3038 = vunpack.c.l.b16 %v2963
      %v3039 = vunpack.c.h.b16 %v2963
      %v3040 = vunpack.c.l.b16 %v2964
      %v3041 = vunpack.c.h.b16 %v2964
      %v3042 = vunpack.c.l.b16 %v2965
      %v3043 = vunpack.c.h.b16 %v2965
      %v3044 = vunpack.c.l.b16 %v2966
      %v3045 = vunpack.c.h.b16 %v2966
      %v3046 = vunpack.c.l.b16 %v2967
      %v3047 = vunpack.c.h.b16 %v2967
      %v3048 = vunpack.c.l.b16 %v2968
      %v3049 = vunpack.c.h.b16 %v2968
      %v3050 = vunpack.c.l.b16 %v2969
      %v3051 = vunpack.c.h.b16 %v2969
      %v3052 = vunpack.c.l.b16 %v2970
      %v3053 = vunpack.c.h.b16 %v2970
      %v3054 = vunpack.c.l.b16 %v2971
      %v3055 = vunpack.c.h.b16 %v2971
      %v3056 = vunpack.c.l.b16 %v2972
      %v3057 = vunpack.c.h.b16 %v2972
      %v3058 = vunpack.c.l.b16 %v2973
      %v3059 = vunpack.c.h.b16 %v2973
      %v3060 = vunpack.c.l.b16 %v2974
      %v3061 = vunpack.c.h.b16 %v2974
      %v3062 = vunpack.c.l.b16 %v2975
      %v3063 = vunpack.c.h.b16 %v2975
      %v3064 = vunpack.c.l.b16 %v2976
      %v3065 = vunpack.c.h.b16 %v2976
      %v3066 = vunpack.c.l.b16 %v2977
      %v3067 = vunpack.c.h.b16 %v2977
      %v3068 = vpack.c.b16 %v3010, %v3008
      %v3069 = vpack.c.b16 %v3011, %v3009
      %v3070 = vpack.c.b16 %v3014, %v3012
      %v3071 = vpack.c.b16 %v3015, %v3013
      %v3072 = vpack.c.b16 %v3018, %v3016
      %v3073 = vpack.c.b16 %v3019, %v3017
      %v3074 = vpack.c.b16 %v3022, %v3020
      %v3075 = vpack.c.b16 %v3023, %v3021
      %v3076 = vpack.c.b16 %v3026, %v3024
      %v3077 = vpack.c.b16 %v3027, %v3025
      %v3078 = vpack.c.b16 %v3030, %v3028
      %v3079 = vpack.c.b16 %v3031, %v3029
      %v3080 = vpack.c.b16 %v3034, %v3032
      %v3081 = vpack.c.b16 %v3035, %v3033
      %v3082 = vpack.c.b16 %v3038, %v3036
      %v3083 = vpack.c.b16 %v3039, %v3037
      %v3084 = vpack.c.b16 %v3042, %v3040
      %v3085 = vpack.c.b16 %v3043, %v3041
      %v3086 = vpack.c.b16 %v3046, %v3044
      %v3087 = vpack.c.b16 %v3047, %v3045
      %v3088 = vpack.c.b16 %v3050, %v3048
      %v3089 = vpack.c.b16 %v3051, %v3049
      %v3090 = vpack.c.b16 %v3054, %v3052
      %v3091 = vpack.c.b16 %v3055, %v3053
      %v3092 = vpack.c.b16 %v3058, %v3056
      %v3093 = vpack.c.b16 %v3059, %v3057
      %v3094 = vpack.c.b16 %v3062, %v3060
      %v3095 = vpack.c.b16 %v3063, %v3061
      %v3096 = vpack.c.b16 %v3066, %v3064
      %v3097 = vpack.c.b16 %v3067, %v3065
      %3128 = vmatprep.subr.bf16.mxu0 %v3069
      %3129 = vmatpush1.bf16.msra.mxu0 %v3068
      %3130 = vmatprep.subr.bf16.mxu0 %v3071
      %3131 = vmatpush1.bf16.msra.mxu0 %v3070
      %3132 = vmatprep.subr.bf16.mxu0 %v3073
      %3133 = vmatpush1.bf16.msra.mxu0 %v3072
      %3134 = vmatprep.subr.bf16.mxu0 %v3075
      %3135 = vmatpush1.bf16.msra.mxu0 %v3074
      %3136 = vmatprep.subr.bf16.mxu0 %v3077
      %3137 = vmatpush1.bf16.msra.mxu0 %v3076
      %3138 = vmatprep.subr.bf16.mxu0 %v3079
      %3139 = vmatpush1.bf16.msra.mxu0 %v3078
      %3140 = vmatprep.subr.bf16.mxu0 %v3081
      %3141 = vmatpush1.bf16.msra.mxu0 %v3080
      %3142 = vmatprep.subr.bf16.mxu0 %v3083
      %3143 = vmatpush1.bf16.msra.mxu0 %v3082
      %3144 = vmatprep.subr.bf16.mxu0 %v3085
      %3145 = vmatpush1.bf16.msra.mxu0 %v3084
      %3146 = vmatprep.subr.bf16.mxu0 %v3087
      %3147 = vmatpush1.bf16.msra.mxu0 %v3086
      %3148 = vmatprep.subr.bf16.mxu0 %v3089
      %3149 = vmatpush1.bf16.msra.mxu0 %v3088
      %3150 = vmatprep.subr.bf16.mxu0 %v3091
      %3151 = vmatpush1.bf16.msra.mxu0 %v3090
      %3152 = vmatprep.subr.bf16.mxu0 %v3093
      %3153 = vmatpush1.bf16.msra.mxu0 %v3092
      %3154 = vmatprep.subr.bf16.mxu0 %v3095
      %3155 = vmatpush1.bf16.msra.mxu0 %v3094
      %3156 = vmatprep.subr.bf16.mxu0 %v3097
      %3157 = vmatpush1.bf16.msra.mxu0 %v3096
      %3158 = vmatprep.subr.bf16.mxu0 0
      %3159 = vmatpush1.bf16.msra.mxu0 0
      %3160 = vmatprep.mubr.bf16.mxu0 %v1829
      %3161 = vmatmul.mubr.bf16.gmra.mrb[0].mxu0 %v1668
      %v3162 = vpop.f32.mrb[0].mxu0
      %v3163 = vadd.f32 0.0, %v3162
      %v3164 = vpop.f32.mrb[0].mxu0
      %v3165 = vadd.f32 0.0, %v3164
      %v3166 = vpop.f32.mrb[0].mxu0
      %v3167 = vpop.f32.mrb[0].mxu0
      %3168 = vdwg.mxu0
      %v3199 = vunpack.c.l.b16 %v2917
      %v3200 = vunpack.c.h.b16 %v2917
      %v3201 = vunpack.c.l.b16 %v2918
      %v3202 = vunpack.c.h.b16 %v2918
      %v3203 = vunpack.c.l.b16 %v2919
      %v3204 = vunpack.c.h.b16 %v2919
      %v3205 = vunpack.c.l.b16 %v2920
      %v3206 = vunpack.c.h.b16 %v2920
      %v3207 = vunpack.c.l.b16 %v2921
      %v3208 = vunpack.c.h.b16 %v2921
      %v3209 = vunpack.c.l.b16 %v2922
      %v3210 = vunpack.c.h.b16 %v2922
      %v3211 = vunpack.c.l.b16 %v2923
      %v3212 = vunpack.c.h.b16 %v2923
      %v3213 = vunpack.c.l.b16 %v2924
      %v3214 = vunpack.c.h.b16 %v2924
      %v3215 = vunpack.c.l.b16 %v2925
      %v3216 = vunpack.c.h.b16 %v2925
      %v3217 = vunpack.c.l.b16 %v2926
      %v3218 = vunpack.c.h.b16 %v2926
      %v3219 = vunpack.c.l.b16 %v2927
      %v3220 = vunpack.c.h.b16 %v2927
      %v3221 = vunpack.c.l.b16 %v2928
      %v3222 = vunpack.c.h.b16 %v2928
      %v3223 = vunpack.c.l.b16 %v2929
      %v3224 = vunpack.c.h.b16 %v2929
      %v3225 = vunpack.c.l.b16 %v2930
      %v3226 = vunpack.c.h.b16 %v2930
      %v3227 = vunpack.c.l.b16 %v2931
      %v3228 = vunpack.c.h.b16 %v2931
      %v3229 = vunpack.c.l.b16 %v2932
      %v3230 = vunpack.c.h.b16 %v2932
      %v3231 = vunpack.c.l.b16 %v2933
      %v3232 = vunpack.c.h.b16 %v2933
      %v3233 = vunpack.c.l.b16 %v2934
      %v3234 = vunpack.c.h.b16 %v2934
      %v3235 = vunpack.c.l.b16 %v2935
      %v3236 = vunpack.c.h.b16 %v2935
      %v3237 = vunpack.c.l.b16 %v2936
      %v3238 = vunpack.c.h.b16 %v2936
      %v3239 = vunpack.c.l.b16 %v2937
      %v3240 = vunpack.c.h.b16 %v2937
      %v3241 = vunpack.c.l.b16 %v2938
      %v3242 = vunpack.c.h.b16 %v2938
      %v3243 = vunpack.c.l.b16 %v2939
      %v3244 = vunpack.c.h.b16 %v2939
      %v3245 = vunpack.c.l.b16 %v2940
      %v3246 = vunpack.c.h.b16 %v2940
      %v3247 = vunpack.c.l.b16 %v2941
      %v3248 = vunpack.c.h.b16 %v2941
      %v3249 = vunpack.c.l.b16 %v2942
      %v3250 = vunpack.c.h.b16 %v2942
      %v3251 = vunpack.c.l.b16 %v2943
      %v3252 = vunpack.c.h.b16 %v2943
      %v3253 = vunpack.c.l.b16 %v2944
      %v3254 = vunpack.c.h.b16 %v2944
      %v3255 = vunpack.c.l.b16 %v2945
      %v3256 = vunpack.c.h.b16 %v2945
      %v3257 = vunpack.c.l.b16 %v2946
      %v3258 = vunpack.c.h.b16 %v2946
      %v3259 = vpack.c.b16 %v3201, %v3199
      %v3260 = vpack.c.b16 %v3202, %v3200
      %v3261 = vpack.c.b16 %v3205, %v3203
      %v3262 = vpack.c.b16 %v3206, %v3204
      %v3263 = vpack.c.b16 %v3209, %v3207
      %v3264 = vpack.c.b16 %v3210, %v3208
      %v3265 = vpack.c.b16 %v3213, %v3211
      %v3266 = vpack.c.b16 %v3214, %v3212
      %v3267 = vpack.c.b16 %v3217, %v3215
      %v3268 = vpack.c.b16 %v3218, %v3216
      %v3269 = vpack.c.b16 %v3221, %v3219
      %v3270 = vpack.c.b16 %v3222, %v3220
      %v3271 = vpack.c.b16 %v3225, %v3223
      %v3272 = vpack.c.b16 %v3226, %v3224
      %v3273 = vpack.c.b16 %v3229, %v3227
      %v3274 = vpack.c.b16 %v3230, %v3228
      %v3275 = vpack.c.b16 %v3233, %v3231
      %v3276 = vpack.c.b16 %v3234, %v3232
      %v3277 = vpack.c.b16 %v3237, %v3235
      %v3278 = vpack.c.b16 %v3238, %v3236
      %v3279 = vpack.c.b16 %v3241, %v3239
      %v3280 = vpack.c.b16 %v3242, %v3240
      %v3281 = vpack.c.b16 %v3245, %v3243
      %v3282 = vpack.c.b16 %v3246, %v3244
      %v3283 = vpack.c.b16 %v3249, %v3247
      %v3284 = vpack.c.b16 %v3250, %v3248
      %v3285 = vpack.c.b16 %v3253, %v3251
      %v3286 = vpack.c.b16 %v3254, %v3252
      %v3287 = vpack.c.b16 %v3257, %v3255
      %v3288 = vpack.c.b16 %v3258, %v3256
      %3319 = vmatprep.subr.bf16.mxu0 %v3260
      %3320 = vmatpush1.bf16.msra.mxu0 %v3259
      %3321 = vmatprep.subr.bf16.mxu0 %v3262
      %3322 = vmatpush1.bf16.msra.mxu0 %v3261
      %3323 = vmatprep.subr.bf16.mxu0 %v3264
      %3324 = vmatpush1.bf16.msra.mxu0 %v3263
      %3325 = vmatprep.subr.bf16.mxu0 %v3266
      %3326 = vmatpush1.bf16.msra.mxu0 %v3265
      %3327 = vmatprep.subr.bf16.mxu0 %v3268
      %3328 = vmatpush1.bf16.msra.mxu0 %v3267
      %3329 = vmatprep.subr.bf16.mxu0 %v3270
      %3330 = vmatpush1.bf16.msra.mxu0 %v3269
      %3331 = vmatprep.subr.bf16.mxu0 %v3272
      %3332 = vmatpush1.bf16.msra.mxu0 %v3271
      %3333 = vmatprep.subr.bf16.mxu0 %v3274
      %3334 = vmatpush1.bf16.msra.mxu0 %v3273
      %3335 = vmatprep.subr.bf16.mxu0 %v3276
      %3336 = vmatpush1.bf16.msra.mxu0 %v3275
      %3337 = vmatprep.subr.bf16.mxu0 %v3278
      %3338 = vmatpush1.bf16.msra.mxu0 %v3277
      %3339 = vmatprep.subr.bf16.mxu0 %v3280
      %3340 = vmatpush1.bf16.msra.mxu0 %v3279
      %3341 = vmatprep.subr.bf16.mxu0 %v3282
      %3342 = vmatpush1.bf16.msra.mxu0 %v3281
      %3343 = vmatprep.subr.bf16.mxu0 %v3284
      %3344 = vmatpush1.bf16.msra.mxu0 %v3283
      %3345 = vmatprep.subr.bf16.mxu0 %v3286
      %3346 = vmatpush1.bf16.msra.mxu0 %v3285
      %3347 = vmatprep.subr.bf16.mxu0 %v3288
      %3348 = vmatpush1.bf16.msra.mxu0 %v3287
      %3349 = vmatprep.subr.bf16.mxu0 0
      %3350 = vmatpush1.bf16.msra.mxu0 0
      %3351 = vmatprep.mubr.bf16.mxu0 %v2023
      %3352 = vmatmul.mubr.bf16.gmra.mrb[0].mxu0 %v1597
      %v3353 = vpop.f32.mrb[0].mxu0
      %v3354 = vadd.f32 %v3163, %v3353
      %v3355 = vpop.f32.mrb[0].mxu0
      %v3356 = vadd.f32 %v3165, %v3355
      %v3357 = vpop.f32.mrb[0].mxu0
      %v3358 = vpop.f32.mrb[0].mxu0
      %3359 = vdwg.mxu0
      %s3360 = scalar_lea.vmem %s3, 1680
      %v3361 = vld [vmem:[%s3360] sm:$0xff]
      %v3362 = vld [vmem:[%s3360 + $0x8] sm:$0xff]
      %v3363 = vld [vmem:[%s3360 + $0x10] sm:$0xff]
      %v3364 = vld [vmem:[%s3360 + $0x18] sm:$0xff]
      %v3365 = vld [vmem:[%s3360 + $0x20] sm:$0xff]
      %v3366 = vld [vmem:[%s3360 + $0x28] sm:$0xff]
      %v3367 = vld [vmem:[%s3360 + $0x30] sm:$0xff]
      %v3368 = vld [vmem:[%s3360 + $0x38] sm:$0xff]
      %v3369 = vld [vmem:[%s3360 + $0x40] sm:$0xff]
      %v3370 = vld [vmem:[%s3360 + $0x48] sm:$0xff]
      %v3371 = vld [vmem:[%s3360 + $0x50] sm:$0xff]
      %v3372 = vld [vmem:[%s3360 + $0x58] sm:$0xff]
      %v3373 = vld [vmem:[%s3360 + $0x60] sm:$0xff]
      %v3374 = vld [vmem:[%s3360 + $0x68] sm:$0xff]
      %v3375 = vld [vmem:[%s3360 + $0x70] sm:$0xff]
      %v3376 = vld [vmem:[%s3360 + $0x78] sm:$0xff]
      %v3377 = vld [vmem:[%s3360 + $0x80] sm:$0xff]
      %v3378 = vld [vmem:[%s3360 + $0x88] sm:$0xff]
      %v3379 = vld [vmem:[%s3360 + $0x90] sm:$0xff]
      %v3380 = vld [vmem:[%s3360 + $0x98] sm:$0xff]
      %v3381 = vld [vmem:[%s3360 + $0xa0] sm:$0xff]
      %v3382 = vld [vmem:[%s3360 + $0xa8] sm:$0xff]
      %v3383 = vld [vmem:[%s3360 + $0xb0] sm:$0xff]
      %v3384 = vld [vmem:[%s3360 + $0xb8] sm:$0xff]
      %v3385 = vld [vmem:[%s3360 + $0xc0] sm:$0xff]
      %v3386 = vld [vmem:[%s3360 + $0xc8] sm:$0xff]
      %v3387 = vld [vmem:[%s3360 + $0xd0] sm:$0xff]
      %v3388 = vld [vmem:[%s3360 + $0xd8] sm:$0xff]
      %v3389 = vld [vmem:[%s3360 + $0xe0] sm:$0xff]
      %v3390 = vld [vmem:[%s3360 + $0xe8] sm:$0xff]
      %v3421 = vunpack.c.l.b16 %v3361
      %v3422 = vunpack.c.h.b16 %v3361
      %v3423 = vunpack.c.l.b16 %v3362
      %v3424 = vunpack.c.h.b16 %v3362
      %v3425 = vunpack.c.l.b16 %v3363
      %v3426 = vunpack.c.h.b16 %v3363
      %v3427 = vunpack.c.l.b16 %v3364
      %v3428 = vunpack.c.h.b16 %v3364
      %v3429 = vunpack.c.l.b16 %v3365
      %v3430 = vunpack.c.h.b16 %v3365
      %v3431 = vunpack.c.l.b16 %v3366
      %v3432 = vunpack.c.h.b16 %v3366
      %v3433 = vunpack.c.l.b16 %v3367
      %v3434 = vunpack.c.h.b16 %v3367
      %v3435 = vunpack.c.l.b16 %v3368
      %v3436 = vunpack.c.h.b16 %v3368
      %v3437 = vunpack.c.l.b16 %v3369
      %v3438 = vunpack.c.h.b16 %v3369
      %v3439 = vunpack.c.l.b16 %v3370
      %v3440 = vunpack.c.h.b16 %v3370
      %v3441 = vunpack.c.l.b16 %v3371
      %v3442 = vunpack.c.h.b16 %v3371
      %v3443 = vunpack.c.l.b16 %v3372
      %v3444 = vunpack.c.h.b16 %v3372
      %v3445 = vunpack.c.l.b16 %v3373
      %v3446 = vunpack.c.h.b16 %v3373
      %v3447 = vunpack.c.l.b16 %v3374
      %v3448 = vunpack.c.h.b16 %v3374
      %v3449 = vunpack.c.l.b16 %v3375
      %v3450 = vunpack.c.h.b16 %v3375
      %v3451 = vunpack.c.l.b16 %v3376
      %v3452 = vunpack.c.h.b16 %v3376
      %v3453 = vunpack.c.l.b16 %v3377
      %v3454 = vunpack.c.h.b16 %v3377
      %v3455 = vunpack.c.l.b16 %v3378
      %v3456 = vunpack.c.h.b16 %v3378
      %v3457 = vunpack.c.l.b16 %v3379
      %v3458 = vunpack.c.h.b16 %v3379
      %v3459 = vunpack.c.l.b16 %v3380
      %v3460 = vunpack.c.h.b16 %v3380
      %v3461 = vunpack.c.l.b16 %v3381
      %v3462 = vunpack.c.h.b16 %v3381
      %v3463 = vunpack.c.l.b16 %v3382
      %v3464 = vunpack.c.h.b16 %v3382
      %v3465 = vunpack.c.l.b16 %v3383
      %v3466 = vunpack.c.h.b16 %v3383
      %v3467 = vunpack.c.l.b16 %v3384
      %v3468 = vunpack.c.h.b16 %v3384
      %v3469 = vunpack.c.l.b16 %v3385
      %v3470 = vunpack.c.h.b16 %v3385
      %v3471 = vunpack.c.l.b16 %v3386
      %v3472 = vunpack.c.h.b16 %v3386
      %v3473 = vunpack.c.l.b16 %v3387
      %v3474 = vunpack.c.h.b16 %v3387
      %v3475 = vunpack.c.l.b16 %v3388
      %v3476 = vunpack.c.h.b16 %v3388
      %v3477 = vunpack.c.l.b16 %v3389
      %v3478 = vunpack.c.h.b16 %v3389
      %v3479 = vunpack.c.l.b16 %v3390
      %v3480 = vunpack.c.h.b16 %v3390
      %v3481 = vpack.c.b16 %v3423, %v3421
      %v3482 = vpack.c.b16 %v3424, %v3422
      %v3483 = vpack.c.b16 %v3427, %v3425
      %v3484 = vpack.c.b16 %v3428, %v3426
      %v3485 = vpack.c.b16 %v3431, %v3429
      %v3486 = vpack.c.b16 %v3432, %v3430
      %v3487 = vpack.c.b16 %v3435, %v3433
      %v3488 = vpack.c.b16 %v3436, %v3434
      %v3489 = vpack.c.b16 %v3439, %v3437
      %v3490 = vpack.c.b16 %v3440, %v3438
      %v3491 = vpack.c.b16 %v3443, %v3441
      %v3492 = vpack.c.b16 %v3444, %v3442
      %v3493 = vpack.c.b16 %v3447, %v3445
      %v3494 = vpack.c.b16 %v3448, %v3446
      %v3495 = vpack.c.b16 %v3451, %v3449
      %v3496 = vpack.c.b16 %v3452, %v3450
      %v3497 = vpack.c.b16 %v3455, %v3453
      %v3498 = vpack.c.b16 %v3456, %v3454
      %v3499 = vpack.c.b16 %v3459, %v3457
      %v3500 = vpack.c.b16 %v3460, %v3458
      %v3501 = vpack.c.b16 %v3463, %v3461
      %v3502 = vpack.c.b16 %v3464, %v3462
      %v3503 = vpack.c.b16 %v3467, %v3465
      %v3504 = vpack.c.b16 %v3468, %v3466
      %v3505 = vpack.c.b16 %v3471, %v3469
      %v3506 = vpack.c.b16 %v3472, %v3470
      %v3507 = vpack.c.b16 %v3475, %v3473
      %v3508 = vpack.c.b16 %v3476, %v3474
      %v3509 = vpack.c.b16 %v3479, %v3477
      %v3510 = vpack.c.b16 %v3480, %v3478
      %3541 = vmatprep.subr.bf16.mxu0 %v3482
      %3542 = vmatpush1.bf16.msra.mxu0 %v3481
      %3543 = vmatprep.subr.bf16.mxu0 %v3484
      %3544 = vmatpush1.bf16.msra.mxu0 %v3483
      %3545 = vmatprep.subr.bf16.mxu0 %v3486
      %3546 = vmatpush1.bf16.msra.mxu0 %v3485
      %3547 = vmatprep.subr.bf16.mxu0 %v3488
      %3548 = vmatpush1.bf16.msra.mxu0 %v3487
      %3549 = vmatprep.subr.bf16.mxu0 %v3490
      %3550 = vmatpush1.bf16.msra.mxu0 %v3489
      %3551 = vmatprep.subr.bf16.mxu0 %v3492
      %3552 = vmatpush1.bf16.msra.mxu0 %v3491
      %3553 = vmatprep.subr.bf16.mxu0 %v3494
      %3554 = vmatpush1.bf16.msra.mxu0 %v3493
      %3555 = vmatprep.subr.bf16.mxu0 %v3496
      %3556 = vmatpush1.bf16.msra.mxu0 %v3495
      %3557 = vmatprep.subr.bf16.mxu0 %v3498
      %3558 = vmatpush1.bf16.msra.mxu0 %v3497
      %3559 = vmatprep.subr.bf16.mxu0 %v3500
      %3560 = vmatpush1.bf16.msra.mxu0 %v3499
      %3561 = vmatprep.subr.bf16.mxu0 %v3502
      %3562 = vmatpush1.bf16.msra.mxu0 %v3501
      %3563 = vmatprep.subr.bf16.mxu0 %v3504
      %3564 = vmatpush1.bf16.msra.mxu0 %v3503
      %3565 = vmatprep.subr.bf16.mxu0 %v3506
      %3566 = vmatpush1.bf16.msra.mxu0 %v3505
      %3567 = vmatprep.subr.bf16.mxu0 %v3508
      %3568 = vmatpush1.bf16.msra.mxu0 %v3507
      %3569 = vmatprep.subr.bf16.mxu0 %v3510
      %3570 = vmatpush1.bf16.msra.mxu0 %v3509
      %3571 = vmatprep.subr.bf16.mxu0 0
      %3572 = vmatpush1.bf16.msra.mxu0 0
      %3573 = vmatprep.mubr.bf16.mxu0 %v2253
      %3574 = vmatmul.mubr.bf16.gmra.mrb[0].mxu0 %v2099
      %v3575 = vpop.f32.mrb[0].mxu0
      %v3576 = vadd.f32 0.0, %v3575
      %v3577 = vpop.f32.mrb[0].mxu0
      %v3578 = vadd.f32 0.0, %v3577
      %v3579 = vpop.f32.mrb[0].mxu0
      %v3580 = vpop.f32.mrb[0].mxu0
      %3581 = vdwg.mxu0
      %v3582 = vadd.f32 %v3354, %v3576
      %v3583 = vadd.f32 %v3356, %v3578
      %s3584 = scalar_lea.vmem %s3, 1920
      %v3585 = vld [vmem:[%s3584] sm:$0xff]
      %v3586 = vld [vmem:[%s3584 + $0x8] sm:$0xff]
      %v3587 = vld [vmem:[%s3584 + $0x10] sm:$0xff]
      %v3588 = vld [vmem:[%s3584 + $0x18] sm:$0xff]
      %v3589 = vld [vmem:[%s3584 + $0x20] sm:$0xff]
      %v3590 = vld [vmem:[%s3584 + $0x28] sm:$0xff]
      %v3591 = vld [vmem:[%s3584 + $0x30] sm:$0xff]
      %v3592 = vld [vmem:[%s3584 + $0x38] sm:$0xff]
      %v3593 = vld [vmem:[%s3584 + $0x40] sm:$0xff]
      %v3594 = vld [vmem:[%s3584 + $0x48] sm:$0xff]
      %v3595 = vld [vmem:[%s3584 + $0x50] sm:$0xff]
      %v3596 = vld [vmem:[%s3584 + $0x58] sm:$0xff]
      %v3597 = vld [vmem:[%s3584 + $0x60] sm:$0xff]
      %v3598 = vld [vmem:[%s3584 + $0x68] sm:$0xff]
      %v3599 = vld [vmem:[%s3584 + $0x70] sm:$0xff]
      %v3600 = vld [vmem:[%s3584 + $0x78] sm:$0xff]
      %v3601 = vld [vmem:[%s3584 + $0x80] sm:$0xff]
      %v3602 = vld [vmem:[%s3584 + $0x88] sm:$0xff]
      %v3603 = vld [vmem:[%s3584 + $0x90] sm:$0xff]
      %v3604 = vld [vmem:[%s3584 + $0x98] sm:$0xff]
      %v3605 = vld [vmem:[%s3584 + $0xa0] sm:$0xff]
      %v3606 = vld [vmem:[%s3584 + $0xa8] sm:$0xff]
      %v3607 = vld [vmem:[%s3584 + $0xb0] sm:$0xff]
      %v3608 = vld [vmem:[%s3584 + $0xb8] sm:$0xff]
      %v3609 = vld [vmem:[%s3584 + $0xc0] sm:$0xff]
      %v3610 = vld [vmem:[%s3584 + $0xc8] sm:$0xff]
      %v3611 = vld [vmem:[%s3584 + $0xd0] sm:$0xff]
      %v3612 = vld [vmem:[%s3584 + $0xd8] sm:$0xff]
      %v3613 = vld [vmem:[%s3584 + $0xe0] sm:$0xff]
      %v3614 = vld [vmem:[%s3584 + $0xe8] sm:$0xff]
      %v3645 = vunpack.c.l.b16 %v3585
      %v3646 = vunpack.c.h.b16 %v3585
      %v3647 = vunpack.c.l.b16 %v3586
      %v3648 = vunpack.c.h.b16 %v3586
      %v3649 = vunpack.c.l.b16 %v3587
      %v3650 = vunpack.c.h.b16 %v3587
      %v3651 = vunpack.c.l.b16 %v3588
      %v3652 = vunpack.c.h.b16 %v3588
      %v3653 = vunpack.c.l.b16 %v3589
      %v3654 = vunpack.c.h.b16 %v3589
      %v3655 = vunpack.c.l.b16 %v3590
      %v3656 = vunpack.c.h.b16 %v3590
      %v3657 = vunpack.c.l.b16 %v3591
      %v3658 = vunpack.c.h.b16 %v3591
      %v3659 = vunpack.c.l.b16 %v3592
      %v3660 = vunpack.c.h.b16 %v3592
      %v3661 = vunpack.c.l.b16 %v3593
      %v3662 = vunpack.c.h.b16 %v3593
      %v3663 = vunpack.c.l.b16 %v3594
      %v3664 = vunpack.c.h.b16 %v3594
      %v3665 = vunpack.c.l.b16 %v3595
      %v3666 = vunpack.c.h.b16 %v3595
      %v3667 = vunpack.c.l.b16 %v3596
      %v3668 = vunpack.c.h.b16 %v3596
      %v3669 = vunpack.c.l.b16 %v3597
      %v3670 = vunpack.c.h.b16 %v3597
      %v3671 = vunpack.c.l.b16 %v3598
      %v3672 = vunpack.c.h.b16 %v3598
      %v3673 = vunpack.c.l.b16 %v3599
      %v3674 = vunpack.c.h.b16 %v3599
      %v3675 = vunpack.c.l.b16 %v3600
      %v3676 = vunpack.c.h.b16 %v3600
      %v3677 = vunpack.c.l.b16 %v3601
      %v3678 = vunpack.c.h.b16 %v3601
      %v3679 = vunpack.c.l.b16 %v3602
      %v3680 = vunpack.c.h.b16 %v3602
      %v3681 = vunpack.c.l.b16 %v3603
      %v3682 = vunpack.c.h.b16 %v3603
      %v3683 = vunpack.c.l.b16 %v3604
      %v3684 = vunpack.c.h.b16 %v3604
      %v3685 = vunpack.c.l.b16 %v3605
      %v3686 = vunpack.c.h.b16 %v3605
      %v3687 = vunpack.c.l.b16 %v3606
      %v3688 = vunpack.c.h.b16 %v3606
      %v3689 = vunpack.c.l.b16 %v3607
      %v3690 = vunpack.c.h.b16 %v3607
      %v3691 = vunpack.c.l.b16 %v3608
      %v3692 = vunpack.c.h.b16 %v3608
      %v3693 = vunpack.c.l.b16 %v3609
      %v3694 = vunpack.c.h.b16 %v3609
      %v3695 = vunpack.c.l.b16 %v3610
      %v3696 = vunpack.c.h.b16 %v3610
      %v3697 = vunpack.c.l.b16 %v3611
      %v3698 = vunpack.c.h.b16 %v3611
      %v3699 = vunpack.c.l.b16 %v3612
      %v3700 = vunpack.c.h.b16 %v3612
      %v3701 = vunpack.c.l.b16 %v3613
      %v3702 = vunpack.c.h.b16 %v3613
      %v3703 = vunpack.c.l.b16 %v3614
      %v3704 = vunpack.c.h.b16 %v3614
      %v3705 = vpack.c.b16 %v3647, %v3645
      %v3706 = vpack.c.b16 %v3648, %v3646
      %v3707 = vpack.c.b16 %v3651, %v3649
      %v3708 = vpack.c.b16 %v3652, %v3650
      %v3709 = vpack.c.b16 %v3655, %v3653
      %v3710 = vpack.c.b16 %v3656, %v3654
      %v3711 = vpack.c.b16 %v3659, %v3657
      %v3712 = vpack.c.b16 %v3660, %v3658
      %v3713 = vpack.c.b16 %v3663, %v3661
      %v3714 = vpack.c.b16 %v3664, %v3662
      %v3715 = vpack.c.b16 %v3667, %v3665
      %v3716 = vpack.c.b16 %v3668, %v3666
      %v3717 = vpack.c.b16 %v3671, %v3669
      %v3718 = vpack.c.b16 %v3672, %v3670
      %v3719 = vpack.c.b16 %v3675, %v3673
      %v3720 = vpack.c.b16 %v3676, %v3674
      %v3721 = vpack.c.b16 %v3679, %v3677
      %v3722 = vpack.c.b16 %v3680, %v3678
      %v3723 = vpack.c.b16 %v3683, %v3681
      %v3724 = vpack.c.b16 %v3684, %v3682
      %v3725 = vpack.c.b16 %v3687, %v3685
      %v3726 = vpack.c.b16 %v3688, %v3686
      %v3727 = vpack.c.b16 %v3691, %v3689
      %v3728 = vpack.c.b16 %v3692, %v3690
      %v3729 = vpack.c.b16 %v3695, %v3693
      %v3730 = vpack.c.b16 %v3696, %v3694
      %v3731 = vpack.c.b16 %v3699, %v3697
      %v3732 = vpack.c.b16 %v3700, %v3698
      %v3733 = vpack.c.b16 %v3703, %v3701
      %v3734 = vpack.c.b16 %v3704, %v3702
      %3765 = vmatprep.subr.bf16.mxu0 %v3706
      %3766 = vmatpush1.bf16.msra.mxu0 %v3705
      %3767 = vmatprep.subr.bf16.mxu0 %v3708
      %3768 = vmatpush1.bf16.msra.mxu0 %v3707
      %3769 = vmatprep.subr.bf16.mxu0 %v3710
      %3770 = vmatpush1.bf16.msra.mxu0 %v3709
      %3771 = vmatprep.subr.bf16.mxu0 %v3712
      %3772 = vmatpush1.bf16.msra.mxu0 %v3711
      %3773 = vmatprep.subr.bf16.mxu0 %v3714
      %3774 = vmatpush1.bf16.msra.mxu0 %v3713
      %3775 = vmatprep.subr.bf16.mxu0 %v3716
      %3776 = vmatpush1.bf16.msra.mxu0 %v3715
      %3777 = vmatprep.subr.bf16.mxu0 %v3718
      %3778 = vmatpush1.bf16.msra.mxu0 %v3717
      %3779 = vmatprep.subr.bf16.mxu0 %v3720
      %3780 = vmatpush1.bf16.msra.mxu0 %v3719
      %3781 = vmatprep.subr.bf16.mxu0 %v3722
      %3782 = vmatpush1.bf16.msra.mxu0 %v3721
      %3783 = vmatprep.subr.bf16.mxu0 %v3724
      %3784 = vmatpush1.bf16.msra.mxu0 %v3723
      %3785 = vmatprep.subr.bf16.mxu0 %v3726
      %3786 = vmatpush1.bf16.msra.mxu0 %v3725
      %3787 = vmatprep.subr.bf16.mxu0 %v3728
      %3788 = vmatpush1.bf16.msra.mxu0 %v3727
      %3789 = vmatprep.subr.bf16.mxu0 %v3730
      %3790 = vmatpush1.bf16.msra.mxu0 %v3729
      %3791 = vmatprep.subr.bf16.mxu0 %v3732
      %3792 = vmatpush1.bf16.msra.mxu0 %v3731
      %3793 = vmatprep.subr.bf16.mxu0 %v3734
      %3794 = vmatpush1.bf16.msra.mxu0 %v3733
      %3795 = vmatprep.subr.bf16.mxu0 0
      %3796 = vmatpush1.bf16.msra.mxu0 0
      %3797 = vmatprep.mubr.bf16.mxu0 %v2487
      %3798 = vmatmul.mubr.bf16.gmra.mrb[0].mxu0 %v2331
      %v3799 = vpop.f32.mrb[0].mxu0
      %v3800 = vadd.f32 0.0, %v3799
      %v3801 = vpop.f32.mrb[0].mxu0
      %v3802 = vadd.f32 0.0, %v3801
      %v3803 = vpop.f32.mrb[0].mxu0
      %v3804 = vpop.f32.mrb[0].mxu0
      %3805 = vdwg.mxu0
      %v3806 = vadd.f32 %v3582, %v3800
      %v3807 = vadd.f32 %v3583, %v3802
      %s3808 = scalar_lea.vmem %s3, 2160
      %v3809 = vld [vmem:[%s3808] sm:$0xff]
      %v3810 = vld [vmem:[%s3808 + $0x8] sm:$0xff]
      %v3811 = vld [vmem:[%s3808 + $0x10] sm:$0xff]
      %v3812 = vld [vmem:[%s3808 + $0x18] sm:$0xff]
      %v3813 = vld [vmem:[%s3808 + $0x20] sm:$0xff]
      %v3814 = vld [vmem:[%s3808 + $0x28] sm:$0xff]
      %v3815 = vld [vmem:[%s3808 + $0x30] sm:$0xff]
      %v3816 = vld [vmem:[%s3808 + $0x38] sm:$0xff]
      %v3817 = vld [vmem:[%s3808 + $0x40] sm:$0xff]
      %v3818 = vld [vmem:[%s3808 + $0x48] sm:$0xff]
      %v3819 = vld [vmem:[%s3808 + $0x50] sm:$0xff]
      %v3820 = vld [vmem:[%s3808 + $0x58] sm:$0xff]
      %v3821 = vld [vmem:[%s3808 + $0x60] sm:$0xff]
      %v3822 = vld [vmem:[%s3808 + $0x68] sm:$0xff]
      %v3823 = vld [vmem:[%s3808 + $0x70] sm:$0xff]
      %v3824 = vld [vmem:[%s3808 + $0x78] sm:$0xff]
      %v3825 = vld [vmem:[%s3808 + $0x80] sm:$0xff]
      %v3826 = vld [vmem:[%s3808 + $0x88] sm:$0xff]
      %v3827 = vld [vmem:[%s3808 + $0x90] sm:$0xff]
      %v3828 = vld [vmem:[%s3808 + $0x98] sm:$0xff]
      %v3829 = vld [vmem:[%s3808 + $0xa0] sm:$0xff]
      %v3830 = vld [vmem:[%s3808 + $0xa8] sm:$0xff]
      %v3831 = vld [vmem:[%s3808 + $0xb0] sm:$0xff]
      %v3832 = vld [vmem:[%s3808 + $0xb8] sm:$0xff]
      %v3833 = vld [vmem:[%s3808 + $0xc0] sm:$0xff]
      %v3834 = vld [vmem:[%s3808 + $0xc8] sm:$0xff]
      %v3835 = vld [vmem:[%s3808 + $0xd0] sm:$0xff]
      %v3836 = vld [vmem:[%s3808 + $0xd8] sm:$0xff]
      %v3837 = vld [vmem:[%s3808 + $0xe0] sm:$0xff]
      %v3838 = vld [vmem:[%s3808 + $0xe8] sm:$0xff]
      %v3869 = vunpack.c.l.b16 %v3809
      %v3870 = vunpack.c.h.b16 %v3809
      %v3871 = vunpack.c.l.b16 %v3810
      %v3872 = vunpack.c.h.b16 %v3810
      %v3873 = vunpack.c.l.b16 %v3811
      %v3874 = vunpack.c.h.b16 %v3811
      %v3875 = vunpack.c.l.b16 %v3812
      %v3876 = vunpack.c.h.b16 %v3812
      %v3877 = vunpack.c.l.b16 %v3813
      %v3878 = vunpack.c.h.b16 %v3813
      %v3879 = vunpack.c.l.b16 %v3814
      %v3880 = vunpack.c.h.b16 %v3814
      %v3881 = vunpack.c.l.b16 %v3815
      %v3882 = vunpack.c.h.b16 %v3815
      %v3883 = vunpack.c.l.b16 %v3816
      %v3884 = vunpack.c.h.b16 %v3816
      %v3885 = vunpack.c.l.b16 %v3817
      %v3886 = vunpack.c.h.b16 %v3817
      %v3887 = vunpack.c.l.b16 %v3818
      %v3888 = vunpack.c.h.b16 %v3818
      %v3889 = vunpack.c.l.b16 %v3819
      %v3890 = vunpack.c.h.b16 %v3819
      %v3891 = vunpack.c.l.b16 %v3820
      %v3892 = vunpack.c.h.b16 %v3820
      %v3893 = vunpack.c.l.b16 %v3821
      %v3894 = vunpack.c.h.b16 %v3821
      %v3895 = vunpack.c.l.b16 %v3822
      %v3896 = vunpack.c.h.b16 %v3822
      %v3897 = vunpack.c.l.b16 %v3823
      %v3898 = vunpack.c.h.b16 %v3823
      %v3899 = vunpack.c.l.b16 %v3824
      %v3900 = vunpack.c.h.b16 %v3824
      %v3901 = vunpack.c.l.b16 %v3825
      %v3902 = vunpack.c.h.b16 %v3825
      %v3903 = vunpack.c.l.b16 %v3826
      %v3904 = vunpack.c.h.b16 %v3826
      %v3905 = vunpack.c.l.b16 %v3827
      %v3906 = vunpack.c.h.b16 %v3827
      %v3907 = vunpack.c.l.b16 %v3828
      %v3908 = vunpack.c.h.b16 %v3828
      %v3909 = vunpack.c.l.b16 %v3829
      %v3910 = vunpack.c.h.b16 %v3829
      %v3911 = vunpack.c.l.b16 %v3830
      %v3912 = vunpack.c.h.b16 %v3830
      %v3913 = vunpack.c.l.b16 %v3831
      %v3914 = vunpack.c.h.b16 %v3831
      %v3915 = vunpack.c.l.b16 %v3832
      %v3916 = vunpack.c.h.b16 %v3832
      %v3917 = vunpack.c.l.b16 %v3833
      %v3918 = vunpack.c.h.b16 %v3833
      %v3919 = vunpack.c.l.b16 %v3834
      %v3920 = vunpack.c.h.b16 %v3834
      %v3921 = vunpack.c.l.b16 %v3835
      %v3922 = vunpack.c.h.b16 %v3835
      %v3923 = vunpack.c.l.b16 %v3836
      %v3924 = vunpack.c.h.b16 %v3836
      %v3925 = vunpack.c.l.b16 %v3837
      %v3926 = vunpack.c.h.b16 %v3837
      %v3927 = vunpack.c.l.b16 %v3838
      %v3928 = vunpack.c.h.b16 %v3838
      %v3929 = vpack.c.b16 %v3871, %v3869
      %v3930 = vpack.c.b16 %v3872, %v3870
      %v3931 = vpack.c.b16 %v3875, %v3873
      %v3932 = vpack.c.b16 %v3876, %v3874
      %v3933 = vpack.c.b16 %v3879, %v3877
      %v3934 = vpack.c.b16 %v3880, %v3878
      %v3935 = vpack.c.b16 %v3883, %v3881
      %v3936 = vpack.c.b16 %v3884, %v3882
      %v3937 = vpack.c.b16 %v3887, %v3885
      %v3938 = vpack.c.b16 %v3888, %v3886
      %v3939 = vpack.c.b16 %v3891, %v3889
      %v3940 = vpack.c.b16 %v3892, %v3890
      %v3941 = vpack.c.b16 %v3895, %v3893
      %v3942 = vpack.c.b16 %v3896, %v3894
      %v3943 = vpack.c.b16 %v3899, %v3897
      %v3944 = vpack.c.b16 %v3900, %v3898
      %v3945 = vpack.c.b16 %v3903, %v3901
      %v3946 = vpack.c.b16 %v3904, %v3902
      %v3947 = vpack.c.b16 %v3907, %v3905
      %v3948 = vpack.c.b16 %v3908, %v3906
      %v3949 = vpack.c.b16 %v3911, %v3909
      %v3950 = vpack.c.b16 %v3912, %v3910
      %v3951 = vpack.c.b16 %v3915, %v3913
      %v3952 = vpack.c.b16 %v3916, %v3914
      %v3953 = vpack.c.b16 %v3919, %v3917
      %v3954 = vpack.c.b16 %v3920, %v3918
      %v3955 = vpack.c.b16 %v3923, %v3921
      %v3956 = vpack.c.b16 %v3924, %v3922
      %v3957 = vpack.c.b16 %v3927, %v3925
      %v3958 = vpack.c.b16 %v3928, %v3926
      %3989 = vmatprep.subr.bf16.mxu0 %v3930
      %3990 = vmatpush1.bf16.msra.mxu0 %v3929
      %3991 = vmatprep.subr.bf16.mxu0 %v3932
      %3992 = vmatpush1.bf16.msra.mxu0 %v3931
      %3993 = vmatprep.subr.bf16.mxu0 %v3934
      %3994 = vmatpush1.bf16.msra.mxu0 %v3933
      %3995 = vmatprep.subr.bf16.mxu0 %v3936
      %3996 = vmatpush1.bf16.msra.mxu0 %v3935
      %3997 = vmatprep.subr.bf16.mxu0 %v3938
      %3998 = vmatpush1.bf16.msra.mxu0 %v3937
      %3999 = vmatprep.subr.bf16.mxu0 %v3940
      %4000 = vmatpush1.bf16.msra.mxu0 %v3939
      %4001 = vmatprep.subr.bf16.mxu0 %v3942
      %4002 = vmatpush1.bf16.msra.mxu0 %v3941
      %4003 = vmatprep.subr.bf16.mxu0 %v3944
      %4004 = vmatpush1.bf16.msra.mxu0 %v3943
      %4005 = vmatprep.subr.bf16.mxu0 %v3946
      %4006 = vmatpush1.bf16.msra.mxu0 %v3945
      %4007 = vmatprep.subr.bf16.mxu0 %v3948
      %4008 = vmatpush1.bf16.msra.mxu0 %v3947
      %4009 = vmatprep.subr.bf16.mxu0 %v3950
      %4010 = vmatpush1.bf16.msra.mxu0 %v3949
      %4011 = vmatprep.subr.bf16.mxu0 %v3952
      %4012 = vmatpush1.bf16.msra.mxu0 %v3951
      %4013 = vmatprep.subr.bf16.mxu0 %v3954
      %4014 = vmatpush1.bf16.msra.mxu0 %v3953
      %4015 = vmatprep.subr.bf16.mxu0 %v3956
      %4016 = vmatpush1.bf16.msra.mxu0 %v3955
      %4017 = vmatprep.subr.bf16.mxu0 %v3958
      %4018 = vmatpush1.bf16.msra.mxu0 %v3957
      %4019 = vmatprep.subr.bf16.mxu0 0
      %4020 = vmatpush1.bf16.msra.mxu0 0
      %4021 = vmatprep.mubr.bf16.mxu0 %v2717
      %4022 = vmatmul.mubr.bf16.gmra.mrb[0].mxu0 %v2563
      %v4023 = vpop.f32.mrb[0].mxu0
      %v4024 = vadd.f32 0.0, %v4023
      %v4025 = vpop.f32.mrb[0].mxu0
      %v4026 = vadd.f32 0.0, %v4025
      %v4027 = vpop.f32.mrb[0].mxu0
      %v4028 = vpop.f32.mrb[0].mxu0
      %4029 = vdwg.mxu0
      %v4030 = vadd.f32 %v3806, %v4024
      %v4031 = vadd.f32 %v3807, %v4026
      %4032 = vmatprep.subr.mxu0 %v4031
      %4033 = vmatpush1.msra.mxu0 %v4030
      %4034 = vmatprep.subr.mxu0 0.0
      %4035 = vmatpush1.msra.mxu0 0.0
      %4036 = vmatprep.subr.mxu0 0.0
      %4037 = vmatpush1.msra.mxu0 0.0
      %4038 = vmatprep.subr.mxu0 0.0
      %4039 = vmatpush1.msra.mxu0 0.0
      %4040 = vmatprep.subr.mxu0 0.0
      %4041 = vmatpush1.msra.mxu0 0.0
      %4042 = vmatprep.subr.mxu0 0.0
      %4043 = vmatpush1.msra.mxu0 0.0
      %4044 = vmatprep.subr.mxu0 0.0
      %4045 = vmatpush1.msra.mxu0 0.0
      %4046 = vmatprep.subr.mxu0 0.0
      %4047 = vmatpush1.msra.mxu0 0.0
      %4048 = vmatprep.subr.mxu0 0.0
      %4049 = vmatpush1.msra.mxu0 0.0
      %4050 = vmatprep.subr.mxu0 0.0
      %4051 = vmatpush1.msra.mxu0 0.0
      %4052 = vmatprep.subr.mxu0 0.0
      %4053 = vmatpush1.msra.mxu0 0.0
      %4054 = vmatprep.subr.mxu0 0.0
      %4055 = vmatpush1.msra.mxu0 0.0
      %4056 = vmatprep.subr.mxu0 0.0
      %4057 = vmatpush1.msra.mxu0 0.0
      %4058 = vmatprep.subr.mxu0 0.0
      %4059 = vmatpush1.msra.mxu0 0.0
      %4060 = vmatprep.subr.mxu0 0.0
      %4061 = vmatpush1.msra.mxu0 0.0
      %4062 = vmatprep.subr.mxu0 0.0
      %4063 = vmatpush1.msra.mxu0 0.0
      %4064 = vmatprep.subr.mxu0 0.0
      %4065 = vmatpush1.msra.mxu0 0.0
      %4066 = vmatprep.subr.mxu0 0.0
      %4067 = vmatpush1.msra.mxu0 0.0
      %4068 = vmatprep.subr.mxu0 0.0
      %4069 = vmatpush1.msra.mxu0 0.0
      %4070 = vmatprep.subr.mxu0 0.0
      %4071 = vmatpush1.msra.mxu0 0.0
      %4072 = vmatprep.subr.mxu0 0.0
      %4073 = vmatpush1.msra.mxu0 0.0
      %4074 = vmatprep.subr.mxu0 0.0
      %4075 = vmatpush1.msra.mxu0 0.0
      %4076 = vmatprep.subr.mxu0 0.0
      %4077 = vmatpush1.msra.mxu0 0.0
      %4078 = vmatprep.subr.mxu0 0.0
      %4079 = vmatpush1.msra.mxu0 0.0
      %4080 = vmatprep.subr.mxu0 0.0
      %4081 = vmatpush1.msra.mxu0 0.0
      %4082 = vmatprep.subr.mxu0 0.0
      %4083 = vmatpush1.msra.mxu0 0.0
      %4084 = vmatprep.subr.mxu0 0.0
      %4085 = vmatpush1.msra.mxu0 0.0
      %4086 = vmatprep.subr.mxu0 0.0
      %4087 = vmatpush1.msra.mxu0 0.0
      %4088 = vmatprep.subr.mxu0 0.0
      %4089 = vmatpush1.msra.mxu0 0.0
      %4090 = vmatprep.subr.mxu0 0.0
      %4091 = vmatpush1.msra.mxu0 0.0
      %4092 = vmatprep.subr.mxu0 0.0
      %4093 = vmatpush1.msra.mxu0 0.0
      %4094 = vmatprep.subr.mxu0 0.0
      %4095 = vmatpush1.msra.mxu0 0.0
      %4096 = vmatprep.mubr.f32.mxu0 0.0
      %4097 = vmatmul.mubr.f32.gmra.mrb[0].mxu0 %v2765
      %v4098 = vpop.f32.mrb[0].mxu0
      %v4099 = vadd.f32 0.0, %v4098
      %v4100 = vpop.f32.mrb[0].mxu0
      %v4101 = vadd.f32 0.0, %v4100
      %4102 = vdwg.mxu0
      %4103 = vmatprep.subr.mxu0 %v4031
      %4104 = vmatpush1.msra.mxu0 %v4030
      %4105 = vmatprep.subr.mxu0 0.0
      %4106 = vmatpush1.msra.mxu0 0.0
      %4107 = vmatprep.subr.mxu0 0.0
      %4108 = vmatpush1.msra.mxu0 0.0
      %4109 = vmatprep.subr.mxu0 0.0
      %4110 = vmatpush1.msra.mxu0 0.0
      %4111 = vmatprep.subr.mxu0 0.0
      %4112 = vmatpush1.msra.mxu0 0.0
      %4113 = vmatprep.subr.mxu0 0.0
      %4114 = vmatpush1.msra.mxu0 0.0
      %4115 = vmatprep.subr.mxu0 0.0
      %4116 = vmatpush1.msra.mxu0 0.0
      %4117 = vmatprep.subr.mxu0 0.0
      %4118 = vmatpush1.msra.mxu0 0.0
      %4119 = vmatprep.subr.mxu0 0.0
      %4120 = vmatpush1.msra.mxu0 0.0
      %4121 = vmatprep.subr.mxu0 0.0
      %4122 = vmatpush1.msra.mxu0 0.0
      %4123 = vmatprep.subr.mxu0 0.0
      %4124 = vmatpush1.msra.mxu0 0.0
      %4125 = vmatprep.subr.mxu0 0.0
      %4126 = vmatpush1.msra.mxu0 0.0
      %4127 = vmatprep.subr.mxu0 0.0
      %4128 = vmatpush1.msra.mxu0 0.0
      %4129 = vmatprep.subr.mxu0 0.0
      %4130 = vmatpush1.msra.mxu0 0.0
      %4131 = vmatprep.subr.mxu0 0.0
      %4132 = vmatpush1.msra.mxu0 0.0
      %4133 = vmatprep.subr.mxu0 0.0
      %4134 = vmatpush1.msra.mxu0 0.0
      %4135 = vmatprep.subr.mxu0 0.0
      %4136 = vmatpush1.msra.mxu0 0.0
      %4137 = vmatprep.subr.mxu0 0.0
      %4138 = vmatpush1.msra.mxu0 0.0
      %4139 = vmatprep.subr.mxu0 0.0
      %4140 = vmatpush1.msra.mxu0 0.0
      %4141 = vmatprep.subr.mxu0 0.0
      %4142 = vmatpush1.msra.mxu0 0.0
      %4143 = vmatprep.subr.mxu0 0.0
      %4144 = vmatpush1.msra.mxu0 0.0
      %4145 = vmatprep.subr.mxu0 0.0
      %4146 = vmatpush1.msra.mxu0 0.0
      %4147 = vmatprep.subr.mxu0 0.0
      %4148 = vmatpush1.msra.mxu0 0.0
      %4149 = vmatprep.subr.mxu0 0.0
      %4150 = vmatpush1.msra.mxu0 0.0
      %4151 = vmatprep.subr.mxu0 0.0
      %4152 = vmatpush1.msra.mxu0 0.0
      %4153 = vmatprep.subr.mxu0 0.0
      %4154 = vmatpush1.msra.mxu0 0.0
      %4155 = vmatprep.subr.mxu0 0.0
      %4156 = vmatpush1.msra.mxu0 0.0
      %4157 = vmatprep.subr.mxu0 0.0
      %4158 = vmatpush1.msra.mxu0 0.0
      %4159 = vmatprep.subr.mxu0 0.0
      %4160 = vmatpush1.msra.mxu0 0.0
      %4161 = vmatprep.subr.mxu0 0.0
      %4162 = vmatpush1.msra.mxu0 0.0
      %4163 = vmatprep.subr.mxu0 0.0
      %4164 = vmatpush1.msra.mxu0 0.0
      %4165 = vmatprep.subr.mxu0 0.0
      %4166 = vmatpush1.msra.mxu0 0.0
      %4167 = vmatprep.mubr.f32.mxu0 0.0
      %4168 = vmatmul.mubr.f32.gmra.mrb[0].mxu0 %v2841
      %v4169 = vpop.f32.mrb[0].mxu0
      %v4170 = vadd.f32 0.0, %v4169
      %v4171 = vpop.f32.mrb[0].mxu0
      %v4172 = vadd.f32 0.0, %v4171
      %4173 = vdwg.mxu0
      %v4174 = vmax.f32 %v4099, %v4170
      %v4175 = vmax.f32 %v4101, %v4172
      %v4176 = vmax.f32 %v2914, %v4174
      %v4177 = vmax.f32 %v2915, %v4175
      %v4178 = vld [vmem:[%s4] sm:$0x3]
      %v4180 = vlaneseq
      %v4181 = vshrl.u32 %v4180, 7
      %v4182 = vsub.s32 0, %v4181
      %v4183 = vrot.slane %v4178, %v4182
      %v4184 = vlaneseq
      %v4185 = vshrl.u32 %v4184, 7
      %v4186 = vsub.s32 1, %v4185
      %v4187 = vrot.slane %v4178, %v4186
      %v4190 = vadd.f32 %v4176, %v4183
      %v4191 = vadd.f32 %v4177, %v4187
      %v4192 = vmax.f32 %v4190, 0.0
      %v4193 = vmax.f32 %v4191, 0.0
      %v4194 = vpack.c.bf16 %v4192, %v4192
      %v4195 = vpack.c.bf16 %v4193, %v4193
      %v4196 = vld [vmem:[%s5] sm:$0xff]
      %v4197 = vld [vmem:[%s5 + $0x8] sm:$0xff]
      %v4198 = vld [vmem:[%s5 + $0x10] sm:$0xff]
      %v4199 = vld [vmem:[%s5 + $0x18] sm:$0xff]
      %v4200 = vld [vmem:[%s5 + $0x20] sm:$0xff]
      %v4201 = vld [vmem:[%s5 + $0x28] sm:$0xff]
      %v4202 = vld [vmem:[%s5 + $0x30] sm:$0xff]
      %v4203 = vld [vmem:[%s5 + $0x38] sm:$0xff]
      %v4204 = vld [vmem:[%s5 + $0x40] sm:$0xff]
      %v4205 = vld [vmem:[%s5 + $0x48] sm:$0xff]
      %v4206 = vld [vmem:[%s5 + $0x50] sm:$0xff]
      %v4207 = vld [vmem:[%s5 + $0x58] sm:$0xff]
      %v4208 = vld [vmem:[%s5 + $0x60] sm:$0xff]
      %v4209 = vld [vmem:[%s5 + $0x68] sm:$0xff]
      %v4210 = vld [vmem:[%s5 + $0x70] sm:$0xff]
      %v4211 = vld [vmem:[%s5 + $0x78] sm:$0xff]
      %v4212 = vld [vmem:[%s5 + $0x80] sm:$0xff]
      %v4213 = vld [vmem:[%s5 + $0x88] sm:$0xff]
      %v4214 = vld [vmem:[%s5 + $0x90] sm:$0xff]
      %v4215 = vld [vmem:[%s5 + $0x98] sm:$0xff]
      %v4216 = vld [vmem:[%s5 + $0xa0] sm:$0xff]
      %v4217 = vld [vmem:[%s5 + $0xa8] sm:$0xff]
      %v4218 = vld [vmem:[%s5 + $0xb0] sm:$0xff]
      %v4219 = vld [vmem:[%s5 + $0xb8] sm:$0xff]
      %v4220 = vld [vmem:[%s5 + $0xc0] sm:$0xff]
      %v4221 = vld [vmem:[%s5 + $0xc8] sm:$0xff]
      %v4222 = vld [vmem:[%s5 + $0xd0] sm:$0xff]
      %v4223 = vld [vmem:[%s5 + $0xd8] sm:$0xff]
      %v4224 = vld [vmem:[%s5 + $0xe0] sm:$0xff]
      %v4225 = vld [vmem:[%s5 + $0xe8] sm:$0xff]
      %v4226 = vld [vmem:[%s5 + $0xf0] sm:$0xff]
      %v4227 = vld [vmem:[%s5 + $0xf8] sm:$0xff]
      %v4228 = vld [vmem:[%s5 + $0x100] sm:$0xff]
      %v4229 = vld [vmem:[%s5 + $0x108] sm:$0xff]
      %v4230 = vld [vmem:[%s5 + $0x110] sm:$0xff]
      %v4231 = vld [vmem:[%s5 + $0x118] sm:$0xff]
      %v4232 = vld [vmem:[%s5 + $0x120] sm:$0xff]
      %v4233 = vld [vmem:[%s5 + $0x128] sm:$0xff]
      %v4234 = vld [vmem:[%s5 + $0x130] sm:$0xff]
      %v4235 = vld [vmem:[%s5 + $0x138] sm:$0xff]
      %v4236 = vld [vmem:[%s5 + $0x140] sm:$0xff]
      %v4237 = vld [vmem:[%s5 + $0x148] sm:$0xff]
      %v4238 = vld [vmem:[%s5 + $0x150] sm:$0xff]
      %v4239 = vld [vmem:[%s5 + $0x158] sm:$0xff]
      %v4240 = vld [vmem:[%s5 + $0x160] sm:$0xff]
      %v4241 = vld [vmem:[%s5 + $0x168] sm:$0xff]
      %v4242 = vld [vmem:[%s5 + $0x170] sm:$0xff]
      %v4243 = vld [vmem:[%s5 + $0x178] sm:$0xff]
      %v4244 = vld [vmem:[%s5 + $0x180] sm:$0xff]
      %v4245 = vld [vmem:[%s5 + $0x188] sm:$0xff]
      %s4246 = scalar_lea.vmem %s5, 400
      %v4247 = vld [vmem:[%s4246] sm:$0xff]
      %v4248 = vld [vmem:[%s4246 + $0x8] sm:$0xff]
      %v4249 = vld [vmem:[%s4246 + $0x10] sm:$0xff]
      %v4250 = vld [vmem:[%s4246 + $0x18] sm:$0xff]
      %v4251 = vld [vmem:[%s4246 + $0x20] sm:$0xff]
      %v4252 = vld [vmem:[%s4246 + $0x28] sm:$0xff]
      %v4253 = vld [vmem:[%s4246 + $0x30] sm:$0xff]
      %v4254 = vld [vmem:[%s4246 + $0x38] sm:$0xff]
      %v4255 = vld [vmem:[%s4246 + $0x40] sm:$0xff]
      %v4256 = vld [vmem:[%s4246 + $0x48] sm:$0xff]
      %v4257 = vld [vmem:[%s4246 + $0x50] sm:$0xff]
      %v4258 = vld [vmem:[%s4246 + $0x58] sm:$0xff]
      %v4259 = vld [vmem:[%s4246 + $0x60] sm:$0xff]
      %v4260 = vld [vmem:[%s4246 + $0x68] sm:$0xff]
      %v4261 = vld [vmem:[%s4246 + $0x70] sm:$0xff]
      %v4262 = vld [vmem:[%s4246 + $0x78] sm:$0xff]
      %v4263 = vld [vmem:[%s4246 + $0x80] sm:$0xff]
      %v4264 = vld [vmem:[%s4246 + $0x88] sm:$0xff]
      %v4265 = vld [vmem:[%s4246 + $0x90] sm:$0xff]
      %v4266 = vld [vmem:[%s4246 + $0x98] sm:$0xff]
      %v4267 = vld [vmem:[%s4246 + $0xa0] sm:$0xff]
      %v4268 = vld [vmem:[%s4246 + $0xa8] sm:$0xff]
      %v4269 = vld [vmem:[%s4246 + $0xb0] sm:$0xff]
      %v4270 = vld [vmem:[%s4246 + $0xb8] sm:$0xff]
      %v4271 = vld [vmem:[%s4246 + $0xc0] sm:$0xff]
      %v4272 = vld [vmem:[%s4246 + $0xc8] sm:$0xff]
      %v4273 = vld [vmem:[%s4246 + $0xd0] sm:$0xff]
      %v4274 = vld [vmem:[%s4246 + $0xd8] sm:$0xff]
      %v4275 = vld [vmem:[%s4246 + $0xe0] sm:$0xff]
      %v4276 = vld [vmem:[%s4246 + $0xe8] sm:$0xff]
      %v4277 = vld [vmem:[%s4246 + $0xf0] sm:$0xff]
      %v4278 = vld [vmem:[%s4246 + $0xf8] sm:$0xff]
      %v4279 = vld [vmem:[%s4246 + $0x100] sm:$0xff]
      %v4280 = vld [vmem:[%s4246 + $0x108] sm:$0xff]
      %v4281 = vld [vmem:[%s4246 + $0x110] sm:$0xff]
      %v4282 = vld [vmem:[%s4246 + $0x118] sm:$0xff]
      %v4283 = vld [vmem:[%s4246 + $0x120] sm:$0xff]
      %v4284 = vld [vmem:[%s4246 + $0x128] sm:$0xff]
      %v4285 = vld [vmem:[%s4246 + $0x130] sm:$0xff]
      %v4286 = vld [vmem:[%s4246 + $0x138] sm:$0xff]
      %v4287 = vld [vmem:[%s4246 + $0x140] sm:$0xff]
      %v4288 = vld [vmem:[%s4246 + $0x148] sm:$0xff]
      %v4289 = vld [vmem:[%s4246 + $0x150] sm:$0xff]
      %v4290 = vld [vmem:[%s4246 + $0x158] sm:$0xff]
      %v4291 = vld [vmem:[%s4246 + $0x160] sm:$0xff]
      %v4292 = vld [vmem:[%s4246 + $0x168] sm:$0xff]
      %v4293 = vld [vmem:[%s4246 + $0x170] sm:$0xff]
      %v4294 = vld [vmem:[%s4246 + $0x178] sm:$0xff]
      %v4295 = vld [vmem:[%s4246 + $0x180] sm:$0xff]
      %v4296 = vld [vmem:[%s4246 + $0x188] sm:$0xff]
      %v4298 = vshrl.u32 %v4194, 16
      %v4301 = vshrl.u32 %v4195, 16
      %v4354 = vunpack.c.l.b16 %v4247
      %v4355 = vunpack.c.h.b16 %v4247
      %v4356 = vunpack.c.l.b16 %v4248
      %v4357 = vunpack.c.h.b16 %v4248
      %v4358 = vunpack.c.l.b16 %v4249
      %v4359 = vunpack.c.h.b16 %v4249
      %v4360 = vunpack.c.l.b16 %v4250
      %v4361 = vunpack.c.h.b16 %v4250
      %v4362 = vunpack.c.l.b16 %v4251
      %v4363 = vunpack.c.h.b16 %v4251
      %v4364 = vunpack.c.l.b16 %v4252
      %v4365 = vunpack.c.h.b16 %v4252
      %v4366 = vunpack.c.l.b16 %v4253
      %v4367 = vunpack.c.h.b16 %v4253
      %v4368 = vunpack.c.l.b16 %v4254
      %v4369 = vunpack.c.h.b16 %v4254
      %v4370 = vunpack.c.l.b16 %v4255
      %v4371 = vunpack.c.h.b16 %v4255
      %v4372 = vunpack.c.l.b16 %v4256
      %v4373 = vunpack.c.h.b16 %v4256
      %v4374 = vunpack.c.l.b16 %v4257
      %v4375 = vunpack.c.h.b16 %v4257
      %v4376 = vunpack.c.l.b16 %v4258
      %v4377 = vunpack.c.h.b16 %v4258
      %v4378 = vunpack.c.l.b16 %v4259
      %v4379 = vunpack.c.h.b16 %v4259
      %v4380 = vunpack.c.l.b16 %v4260
      %v4381 = vunpack.c.h.b16 %v4260
      %v4382 = vunpack.c.l.b16 %v4261
      %v4383 = vunpack.c.h.b16 %v4261
      %v4384 = vunpack.c.l.b16 %v4262
      %v4385 = vunpack.c.h.b16 %v4262
      %v4386 = vunpack.c.l.b16 %v4263
      %v4387 = vunpack.c.h.b16 %v4263
      %v4388 = vunpack.c.l.b16 %v4264
      %v4389 = vunpack.c.h.b16 %v4264
      %v4390 = vunpack.c.l.b16 %v4265
      %v4391 = vunpack.c.h.b16 %v4265
      %v4392 = vunpack.c.l.b16 %v4266
      %v4393 = vunpack.c.h.b16 %v4266
      %v4394 = vunpack.c.l.b16 %v4267
      %v4395 = vunpack.c.h.b16 %v4267
      %v4396 = vunpack.c.l.b16 %v4268
      %v4397 = vunpack.c.h.b16 %v4268
      %v4398 = vunpack.c.l.b16 %v4269
      %v4399 = vunpack.c.h.b16 %v4269
      %v4400 = vunpack.c.l.b16 %v4270
      %v4401 = vunpack.c.h.b16 %v4270
      %v4402 = vunpack.c.l.b16 %v4271
      %v4403 = vunpack.c.h.b16 %v4271
      %v4404 = vunpack.c.l.b16 %v4272
      %v4405 = vunpack.c.h.b16 %v4272
      %v4406 = vunpack.c.l.b16 %v4273
      %v4407 = vunpack.c.h.b16 %v4273
      %v4408 = vunpack.c.l.b16 %v4274
      %v4409 = vunpack.c.h.b16 %v4274
      %v4410 = vunpack.c.l.b16 %v4275
      %v4411 = vunpack.c.h.b16 %v4275
      %v4412 = vunpack.c.l.b16 %v4276
      %v4413 = vunpack.c.h.b16 %v4276
      %v4414 = vunpack.c.l.b16 %v4277
      %v4415 = vunpack.c.h.b16 %v4277
      %v4416 = vunpack.c.l.b16 %v4278
      %v4417 = vunpack.c.h.b16 %v4278
      %v4418 = vunpack.c.l.b16 %v4279
      %v4419 = vunpack.c.h.b16 %v4279
      %v4420 = vunpack.c.l.b16 %v4280
      %v4421 = vunpack.c.h.b16 %v4280
      %v4422 = vunpack.c.l.b16 %v4281
      %v4423 = vunpack.c.h.b16 %v4281
      %v4424 = vunpack.c.l.b16 %v4282
      %v4425 = vunpack.c.h.b16 %v4282
      %v4426 = vunpack.c.l.b16 %v4283
      %v4427 = vunpack.c.h.b16 %v4283
      %v4428 = vunpack.c.l.b16 %v4284
      %v4429 = vunpack.c.h.b16 %v4284
      %v4430 = vunpack.c.l.b16 %v4285
      %v4431 = vunpack.c.h.b16 %v4285
      %v4432 = vunpack.c.l.b16 %v4286
      %v4433 = vunpack.c.h.b16 %v4286
      %v4434 = vunpack.c.l.b16 %v4287
      %v4435 = vunpack.c.h.b16 %v4287
      %v4436 = vunpack.c.l.b16 %v4288
      %v4437 = vunpack.c.h.b16 %v4288
      %v4438 = vunpack.c.l.b16 %v4289
      %v4439 = vunpack.c.h.b16 %v4289
      %v4440 = vunpack.c.l.b16 %v4290
      %v4441 = vunpack.c.h.b16 %v4290
      %v4442 = vunpack.c.l.b16 %v4291
      %v4443 = vunpack.c.h.b16 %v4291
      %v4444 = vunpack.c.l.b16 %v4292
      %v4445 = vunpack.c.h.b16 %v4292
      %v4446 = vunpack.c.l.b16 %v4293
      %v4447 = vunpack.c.h.b16 %v4293
      %v4448 = vunpack.c.l.b16 %v4294
      %v4449 = vunpack.c.h.b16 %v4294
      %v4450 = vunpack.c.l.b16 %v4295
      %v4451 = vunpack.c.h.b16 %v4295
      %v4452 = vunpack.c.l.b16 %v4296
      %v4453 = vunpack.c.h.b16 %v4296
      %v4454 = vpack.c.b16 %v4358, %v4354
      %v4455 = vpack.c.b16 %v4359, %v4355
      %v4456 = vpack.c.b16 %v4360, %v4356
      %v4457 = vpack.c.b16 %v4361, %v4357
      %v4458 = vpack.c.b16 %v4366, %v4362
      %v4459 = vpack.c.b16 %v4367, %v4363
      %v4460 = vpack.c.b16 %v4368, %v4364
      %v4461 = vpack.c.b16 %v4369, %v4365
      %v4462 = vpack.c.b16 %v4374, %v4370
      %v4463 = vpack.c.b16 %v4375, %v4371
      %v4464 = vpack.c.b16 %v4376, %v4372
      %v4465 = vpack.c.b16 %v4377, %v4373
      %v4466 = vpack.c.b16 %v4382, %v4378
      %v4467 = vpack.c.b16 %v4383, %v4379
      %v4468 = vpack.c.b16 %v4384, %v4380
      %v4469 = vpack.c.b16 %v4385, %v4381
      %v4470 = vpack.c.b16 %v4390, %v4386
      %v4471 = vpack.c.b16 %v4391, %v4387
      %v4472 = vpack.c.b16 %v4392, %v4388
      %v4473 = vpack.c.b16 %v4393, %v4389
      %v4474 = vpack.c.b16 %v4398, %v4394
      %v4475 = vpack.c.b16 %v4399, %v4395
      %v4476 = vpack.c.b16 %v4400, %v4396
      %v4477 = vpack.c.b16 %v4401, %v4397
      %v4478 = vpack.c.b16 %v4406, %v4402
      %v4479 = vpack.c.b16 %v4407, %v4403
      %v4480 = vpack.c.b16 %v4408, %v4404
      %v4481 = vpack.c.b16 %v4409, %v4405
      %v4482 = vpack.c.b16 %v4414, %v4410
      %v4483 = vpack.c.b16 %v4415, %v4411
      %v4484 = vpack.c.b16 %v4416, %v4412
      %v4485 = vpack.c.b16 %v4417, %v4413
      %v4486 = vpack.c.b16 %v4422, %v4418
      %v4487 = vpack.c.b16 %v4423, %v4419
      %v4488 = vpack.c.b16 %v4424, %v4420
      %v4489 = vpack.c.b16 %v4425, %v4421
      %v4490 = vpack.c.b16 %v4430, %v4426
      %v4491 = vpack.c.b16 %v4431, %v4427
      %v4492 = vpack.c.b16 %v4432, %v4428
      %v4493 = vpack.c.b16 %v4433, %v4429
      %v4494 = vpack.c.b16 %v4438, %v4434
      %v4495 = vpack.c.b16 %v4439, %v4435
      %v4496 = vpack.c.b16 %v4440, %v4436
      %v4497 = vpack.c.b16 %v4441, %v4437
      %v4498 = vpack.c.b16 %v4446, %v4442
      %v4499 = vpack.c.b16 %v4447, %v4443
      %v4500 = vpack.c.b16 %v4448, %v4444
      %v4501 = vpack.c.b16 %v4449, %v4445
      %v4502 = vpack.c.b16 %v4450, %v4450
      %v4503 = vpack.c.b16 %v4451, %v4451
      %v4504 = vpack.c.b16 %v4452, %v4452
      %v4505 = vpack.c.b16 %v4453, %v4453
      %vm4554 = vcmask 588800
      %v4556 = vsel %vm4554, %v4301, 0
      %vm4558 = vcmask 1043456
      %v4560 = vsel %vm4558, %v4502, 0
      %v4563 = vsel %vm4558, %v4503, 0
      %v4566 = vsel %vm4558, %v4504, 0
      %v4569 = vsel %vm4558, %v4505, 0
      %4571 = vmatprep.subr.bf16.mxu0 %v4455
      %4572 = vmatpush1.bf16.msra.mxu0 %v4454
      %4573 = vmatprep.subr.bf16.mxu0 %v4459
      %4574 = vmatpush1.bf16.msra.mxu0 %v4458
      %4575 = vmatprep.subr.bf16.mxu0 %v4463
      %4576 = vmatpush1.bf16.msra.mxu0 %v4462
      %4577 = vmatprep.subr.bf16.mxu0 %v4467
      %4578 = vmatpush1.bf16.msra.mxu0 %v4466
      %4579 = vmatprep.subr.bf16.mxu0 %v4471
      %4580 = vmatpush1.bf16.msra.mxu0 %v4470
      %4581 = vmatprep.subr.bf16.mxu0 %v4475
      %4582 = vmatpush1.bf16.msra.mxu0 %v4474
      %4583 = vmatprep.subr.bf16.mxu0 %v4479
      %4584 = vmatpush1.bf16.msra.mxu0 %v4478
      %4585 = vmatprep.subr.bf16.mxu0 %v4483
      %4586 = vmatpush1.bf16.msra.mxu0 %v4482
      %4587 = vmatprep.subr.bf16.mxu0 %v4487
      %4588 = vmatpush1.bf16.msra.mxu0 %v4486
      %4589 = vmatprep.subr.bf16.mxu0 %v4491
      %4590 = vmatpush1.bf16.msra.mxu0 %v4490
      %4591 = vmatprep.subr.bf16.mxu0 %v4495
      %4592 = vmatpush1.bf16.msra.mxu0 %v4494
      %4593 = vmatprep.subr.bf16.mxu0 %v4499
      %4594 = vmatpush1.bf16.msra.mxu0 %v4498
      %4595 = vmatprep.subr.bf16.mxu0 %v4563
      %4596 = vmatpush1.bf16.msra.mxu0 %v4560
      %4597 = vmatprep.subr.bf16.mxu0 0
      %4598 = vmatpush1.bf16.msra.mxu0 0
      %4599 = vmatprep.subr.bf16.mxu0 0
      %4600 = vmatpush1.bf16.msra.mxu0 0
      %4601 = vmatprep.subr.bf16.mxu0 0
      %4602 = vmatpush1.bf16.msra.mxu0 0
      %4603 = vmatprep.mubr.bf16.mxu0 %v4556
      %4604 = vmatmul.mubr.bf16.gmra.mrb[0].mxu0 %v4298
      %v4605 = vpop.f32.mrb[0].mxu0
      %v4606 = vadd.f32 0.0, %v4605
      %v4607 = vpop.f32.mrb[0].mxu0
      %v4608 = vadd.f32 0.0, %v4607
      %v4609 = vpop.f32.mrb[0].mxu0
      %v4610 = vpop.f32.mrb[0].mxu0
      %4611 = vdwg.mxu0
      %4612 = vmatprep.subr.bf16.mxu0 %v4457
      %4613 = vmatpush1.bf16.msra.mxu0 %v4456
      %4614 = vmatprep.subr.bf16.mxu0 %v4461
      %4615 = vmatpush1.bf16.msra.mxu0 %v4460
      %4616 = vmatprep.subr.bf16.mxu0 %v4465
      %4617 = vmatpush1.bf16.msra.mxu0 %v4464
      %4618 = vmatprep.subr.bf16.mxu0 %v4469
      %4619 = vmatpush1.bf16.msra.mxu0 %v4468
      %4620 = vmatprep.subr.bf16.mxu0 %v4473
      %4621 = vmatpush1.bf16.msra.mxu0 %v4472
      %4622 = vmatprep.subr.bf16.mxu0 %v4477
      %4623 = vmatpush1.bf16.msra.mxu0 %v4476
      %4624 = vmatprep.subr.bf16.mxu0 %v4481
      %4625 = vmatpush1.bf16.msra.mxu0 %v4480
      %4626 = vmatprep.subr.bf16.mxu0 %v4485
      %4627 = vmatpush1.bf16.msra.mxu0 %v4484
      %4628 = vmatprep.subr.bf16.mxu0 %v4489
      %4629 = vmatpush1.bf16.msra.mxu0 %v4488
      %4630 = vmatprep.subr.bf16.mxu0 %v4493
      %4631 = vmatpush1.bf16.msra.mxu0 %v4492
      %4632 = vmatprep.subr.bf16.mxu0 %v4497
      %4633 = vmatpush1.bf16.msra.mxu0 %v4496
      %4634 = vmatprep.subr.bf16.mxu0 %v4501
      %4635 = vmatpush1.bf16.msra.mxu0 %v4500
      %4636 = vmatprep.subr.bf16.mxu0 %v4569
      %4637 = vmatpush1.bf16.msra.mxu0 %v4566
      %4638 = vmatprep.subr.bf16.mxu0 0
      %4639 = vmatpush1.bf16.msra.mxu0 0
      %4640 = vmatprep.subr.bf16.mxu0 0
      %4641 = vmatpush1.bf16.msra.mxu0 0
      %4642 = vmatprep.subr.bf16.mxu0 0
      %4643 = vmatpush1.bf16.msra.mxu0 0
      %4644 = vmatprep.mubr.bf16.mxu0 %v4556
      %4645 = vmatmul.mubr.bf16.gmra.mrb[0].mxu0 %v4298
      %v4646 = vpop.f32.mrb[0].mxu0
      %v4647 = vadd.f32 0.0, %v4646
      %v4648 = vpop.f32.mrb[0].mxu0
      %v4649 = vadd.f32 0.0, %v4648
      %v4650 = vpop.f32.mrb[0].mxu0
      %v4651 = vpop.f32.mrb[0].mxu0
      %4652 = vdwg.mxu0
      %v4703 = vunpack.c.l.b16 %v4196
      %v4704 = vunpack.c.h.b16 %v4196
      %v4705 = vunpack.c.l.b16 %v4197
      %v4706 = vunpack.c.h.b16 %v4197
      %v4707 = vunpack.c.l.b16 %v4198
      %v4708 = vunpack.c.h.b16 %v4198
      %v4709 = vunpack.c.l.b16 %v4199
      %v4710 = vunpack.c.h.b16 %v4199
      %v4711 = vunpack.c.l.b16 %v4200
      %v4712 = vunpack.c.h.b16 %v4200
      %v4713 = vunpack.c.l.b16 %v4201
      %v4714 = vunpack.c.h.b16 %v4201
      %v4715 = vunpack.c.l.b16 %v4202
      %v4716 = vunpack.c.h.b16 %v4202
      %v4717 = vunpack.c.l.b16 %v4203
      %v4718 = vunpack.c.h.b16 %v4203
      %v4719 = vunpack.c.l.b16 %v4204
      %v4720 = vunpack.c.h.b16 %v4204
      %v4721 = vunpack.c.l.b16 %v4205
      %v4722 = vunpack.c.h.b16 %v4205
      %v4723 = vunpack.c.l.b16 %v4206
      %v4724 = vunpack.c.h.b16 %v4206
      %v4725 = vunpack.c.l.b16 %v4207
      %v4726 = vunpack.c.h.b16 %v4207
      %v4727 = vunpack.c.l.b16 %v4208
      %v4728 = vunpack.c.h.b16 %v4208
      %v4729 = vunpack.c.l.b16 %v4209
      %v4730 = vunpack.c.h.b16 %v4209
      %v4731 = vunpack.c.l.b16 %v4210
      %v4732 = vunpack.c.h.b16 %v4210
      %v4733 = vunpack.c.l.b16 %v4211
      %v4734 = vunpack.c.h.b16 %v4211
      %v4735 = vunpack.c.l.b16 %v4212
      %v4736 = vunpack.c.h.b16 %v4212
      %v4737 = vunpack.c.l.b16 %v4213
      %v4738 = vunpack.c.h.b16 %v4213
      %v4739 = vunpack.c.l.b16 %v4214
      %v4740 = vunpack.c.h.b16 %v4214
      %v4741 = vunpack.c.l.b16 %v4215
      %v4742 = vunpack.c.h.b16 %v4215
      %v4743 = vunpack.c.l.b16 %v4216
      %v4744 = vunpack.c.h.b16 %v4216
      %v4745 = vunpack.c.l.b16 %v4217
      %v4746 = vunpack.c.h.b16 %v4217
      %v4747 = vunpack.c.l.b16 %v4218
      %v4748 = vunpack.c.h.b16 %v4218
      %v4749 = vunpack.c.l.b16 %v4219
      %v4750 = vunpack.c.h.b16 %v4219
      %v4751 = vunpack.c.l.b16 %v4220
      %v4752 = vunpack.c.h.b16 %v4220
      %v4753 = vunpack.c.l.b16 %v4221
      %v4754 = vunpack.c.h.b16 %v4221
      %v4755 = vunpack.c.l.b16 %v4222
      %v4756 = vunpack.c.h.b16 %v4222
      %v4757 = vunpack.c.l.b16 %v4223
      %v4758 = vunpack.c.h.b16 %v4223
      %v4759 = vunpack.c.l.b16 %v4224
      %v4760 = vunpack.c.h.b16 %v4224
      %v4761 = vunpack.c.l.b16 %v4225
      %v4762 = vunpack.c.h.b16 %v4225
      %v4763 = vunpack.c.l.b16 %v4226
      %v4764 = vunpack.c.h.b16 %v4226
      %v4765 = vunpack.c.l.b16 %v4227
      %v4766 = vunpack.c.h.b16 %v4227
      %v4767 = vunpack.c.l.b16 %v4228
      %v4768 = vunpack.c.h.b16 %v4228
      %v4769 = vunpack.c.l.b16 %v4229
      %v4770 = vunpack.c.h.b16 %v4229
      %v4771 = vunpack.c.l.b16 %v4230
      %v4772 = vunpack.c.h.b16 %v4230
      %v4773 = vunpack.c.l.b16 %v4231
      %v4774 = vunpack.c.h.b16 %v4231
      %v4775 = vunpack.c.l.b16 %v4232
      %v4776 = vunpack.c.h.b16 %v4232
      %v4777 = vunpack.c.l.b16 %v4233
      %v4778 = vunpack.c.h.b16 %v4233
      %v4779 = vunpack.c.l.b16 %v4234
      %v4780 = vunpack.c.h.b16 %v4234
      %v4781 = vunpack.c.l.b16 %v4235
      %v4782 = vunpack.c.h.b16 %v4235
      %v4783 = vunpack.c.l.b16 %v4236
      %v4784 = vunpack.c.h.b16 %v4236
      %v4785 = vunpack.c.l.b16 %v4237
      %v4786 = vunpack.c.h.b16 %v4237
      %v4787 = vunpack.c.l.b16 %v4238
      %v4788 = vunpack.c.h.b16 %v4238
      %v4789 = vunpack.c.l.b16 %v4239
      %v4790 = vunpack.c.h.b16 %v4239
      %v4791 = vunpack.c.l.b16 %v4240
      %v4792 = vunpack.c.h.b16 %v4240
      %v4793 = vunpack.c.l.b16 %v4241
      %v4794 = vunpack.c.h.b16 %v4241
      %v4795 = vunpack.c.l.b16 %v4242
      %v4796 = vunpack.c.h.b16 %v4242
      %v4797 = vunpack.c.l.b16 %v4243
      %v4798 = vunpack.c.h.b16 %v4243
      %v4799 = vunpack.c.l.b16 %v4244
      %v4800 = vunpack.c.h.b16 %v4244
      %v4801 = vunpack.c.l.b16 %v4245
      %v4802 = vunpack.c.h.b16 %v4245
      %v4803 = vpack.c.b16 %v4707, %v4703
      %v4804 = vpack.c.b16 %v4708, %v4704
      %v4805 = vpack.c.b16 %v4709, %v4705
      %v4806 = vpack.c.b16 %v4710, %v4706
      %v4807 = vpack.c.b16 %v4715, %v4711
      %v4808 = vpack.c.b16 %v4716, %v4712
      %v4809 = vpack.c.b16 %v4717, %v4713
      %v4810 = vpack.c.b16 %v4718, %v4714
      %v4811 = vpack.c.b16 %v4723, %v4719
      %v4812 = vpack.c.b16 %v4724, %v4720
      %v4813 = vpack.c.b16 %v4725, %v4721
      %v4814 = vpack.c.b16 %v4726, %v4722
      %v4815 = vpack.c.b16 %v4731, %v4727
      %v4816 = vpack.c.b16 %v4732, %v4728
      %v4817 = vpack.c.b16 %v4733, %v4729
      %v4818 = vpack.c.b16 %v4734, %v4730
      %v4819 = vpack.c.b16 %v4739, %v4735
      %v4820 = vpack.c.b16 %v4740, %v4736
      %v4821 = vpack.c.b16 %v4741, %v4737
      %v4822 = vpack.c.b16 %v4742, %v4738
      %v4823 = vpack.c.b16 %v4747, %v4743
      %v4824 = vpack.c.b16 %v4748, %v4744
      %v4825 = vpack.c.b16 %v4749, %v4745
      %v4826 = vpack.c.b16 %v4750, %v4746
      %v4827 = vpack.c.b16 %v4755, %v4751
      %v4828 = vpack.c.b16 %v4756, %v4752
      %v4829 = vpack.c.b16 %v4757, %v4753
      %v4830 = vpack.c.b16 %v4758, %v4754
      %v4831 = vpack.c.b16 %v4763, %v4759
      %v4832 = vpack.c.b16 %v4764, %v4760
      %v4833 = vpack.c.b16 %v4765, %v4761
      %v4834 = vpack.c.b16 %v4766, %v4762
      %v4835 = vpack.c.b16 %v4771, %v4767
      %v4836 = vpack.c.b16 %v4772, %v4768
      %v4837 = vpack.c.b16 %v4773, %v4769
      %v4838 = vpack.c.b16 %v4774, %v4770
      %v4839 = vpack.c.b16 %v4779, %v4775
      %v4840 = vpack.c.b16 %v4780, %v4776
      %v4841 = vpack.c.b16 %v4781, %v4777
      %v4842 = vpack.c.b16 %v4782, %v4778
      %v4843 = vpack.c.b16 %v4787, %v4783
      %v4844 = vpack.c.b16 %v4788, %v4784
      %v4845 = vpack.c.b16 %v4789, %v4785
      %v4846 = vpack.c.b16 %v4790, %v4786
      %v4847 = vpack.c.b16 %v4795, %v4791
      %v4848 = vpack.c.b16 %v4796, %v4792
      %v4849 = vpack.c.b16 %v4797, %v4793
      %v4850 = vpack.c.b16 %v4798, %v4794
      %v4851 = vpack.c.b16 %v4799, %v4799
      %v4852 = vpack.c.b16 %v4800, %v4800
      %v4853 = vpack.c.b16 %v4801, %v4801
      %v4854 = vpack.c.b16 %v4802, %v4802
      %v4903 = vsel %vm4554, %v4195, 0
      %v4906 = vsel %vm4558, %v4851, 0
      %v4909 = vsel %vm4558, %v4852, 0
      %v4912 = vsel %vm4558, %v4853, 0
      %v4915 = vsel %vm4558, %v4854, 0
      %4917 = vmatprep.subr.bf16.mxu0 %v4804
      %4918 = vmatpush1.bf16.msra.mxu0 %v4803
      %4919 = vmatprep.subr.bf16.mxu0 %v4808
      %4920 = vmatpush1.bf16.msra.mxu0 %v4807
      %4921 = vmatprep.subr.bf16.mxu0 %v4812
      %4922 = vmatpush1.bf16.msra.mxu0 %v4811
      %4923 = vmatprep.subr.bf16.mxu0 %v4816
      %4924 = vmatpush1.bf16.msra.mxu0 %v4815
      %4925 = vmatprep.subr.bf16.mxu0 %v4820
      %4926 = vmatpush1.bf16.msra.mxu0 %v4819
      %4927 = vmatprep.subr.bf16.mxu0 %v4824
      %4928 = vmatpush1.bf16.msra.mxu0 %v4823
      %4929 = vmatprep.subr.bf16.mxu0 %v4828
      %4930 = vmatpush1.bf16.msra.mxu0 %v4827
      %4931 = vmatprep.subr.bf16.mxu0 %v4832
      %4932 = vmatpush1.bf16.msra.mxu0 %v4831
      %4933 = vmatprep.subr.bf16.mxu0 %v4836
      %4934 = vmatpush1.bf16.msra.mxu0 %v4835
      %4935 = vmatprep.subr.bf16.mxu0 %v4840
      %4936 = vmatpush1.bf16.msra.mxu0 %v4839
      %4937 = vmatprep.subr.bf16.mxu0 %v4844
      %4938 = vmatpush1.bf16.msra.mxu0 %v4843
      %4939 = vmatprep.subr.bf16.mxu0 %v4848
      %4940 = vmatpush1.bf16.msra.mxu0 %v4847
      %4941 = vmatprep.subr.bf16.mxu0 %v4909
      %4942 = vmatpush1.bf16.msra.mxu0 %v4906
      %4943 = vmatprep.subr.bf16.mxu0 0
      %4944 = vmatpush1.bf16.msra.mxu0 0
      %4945 = vmatprep.subr.bf16.mxu0 0
      %4946 = vmatpush1.bf16.msra.mxu0 0
      %4947 = vmatprep.subr.bf16.mxu0 0
      %4948 = vmatpush1.bf16.msra.mxu0 0
      %4949 = vmatprep.mubr.bf16.mxu0 %v4903
      %4950 = vmatmul.mubr.bf16.gmra.mrb[0].mxu0 %v4194
      %v4951 = vpop.f32.mrb[0].mxu0
      %v4952 = vadd.f32 %v4606, %v4951
      %v4953 = vpop.f32.mrb[0].mxu0
      %v4954 = vadd.f32 %v4608, %v4953
      %v4955 = vpop.f32.mrb[0].mxu0
      %v4956 = vpop.f32.mrb[0].mxu0
      %4957 = vdwg.mxu0
      %4958 = vmatprep.subr.bf16.mxu0 %v4806
      %4959 = vmatpush1.bf16.msra.mxu0 %v4805
      %4960 = vmatprep.subr.bf16.mxu0 %v4810
      %4961 = vmatpush1.bf16.msra.mxu0 %v4809
      %4962 = vmatprep.subr.bf16.mxu0 %v4814
      %4963 = vmatpush1.bf16.msra.mxu0 %v4813
      %4964 = vmatprep.subr.bf16.mxu0 %v4818
      %4965 = vmatpush1.bf16.msra.mxu0 %v4817
      %4966 = vmatprep.subr.bf16.mxu0 %v4822
      %4967 = vmatpush1.bf16.msra.mxu0 %v4821
      %4968 = vmatprep.subr.bf16.mxu0 %v4826
      %4969 = vmatpush1.bf16.msra.mxu0 %v4825
      %4970 = vmatprep.subr.bf16.mxu0 %v4830
      %4971 = vmatpush1.bf16.msra.mxu0 %v4829
      %4972 = vmatprep.subr.bf16.mxu0 %v4834
      %4973 = vmatpush1.bf16.msra.mxu0 %v4833
      %4974 = vmatprep.subr.bf16.mxu0 %v4838
      %4975 = vmatpush1.bf16.msra.mxu0 %v4837
      %4976 = vmatprep.subr.bf16.mxu0 %v4842
      %4977 = vmatpush1.bf16.msra.mxu0 %v4841
      %4978 = vmatprep.subr.bf16.mxu0 %v4846
      %4979 = vmatpush1.bf16.msra.mxu0 %v4845
      %4980 = vmatprep.subr.bf16.mxu0 %v4850
      %4981 = vmatpush1.bf16.msra.mxu0 %v4849
      %4982 = vmatprep.subr.bf16.mxu0 %v4915
      %4983 = vmatpush1.bf16.msra.mxu0 %v4912
      %4984 = vmatprep.subr.bf16.mxu0 0
      %4985 = vmatpush1.bf16.msra.mxu0 0
      %4986 = vmatprep.subr.bf16.mxu0 0
      %4987 = vmatpush1.bf16.msra.mxu0 0
      %4988 = vmatprep.subr.bf16.mxu0 0
      %4989 = vmatpush1.bf16.msra.mxu0 0
      %4990 = vmatprep.mubr.bf16.mxu0 %v4903
      %4991 = vmatmul.mubr.bf16.gmra.mrb[0].mxu0 %v4194
      %v4992 = vpop.f32.mrb[0].mxu0
      %v4993 = vadd.f32 %v4647, %v4992
      %v4994 = vpop.f32.mrb[0].mxu0
      %v4995 = vadd.f32 %v4649, %v4994
      %v4996 = vpop.f32.mrb[0].mxu0
      %v4997 = vpop.f32.mrb[0].mxu0
      %4998 = vdwg.mxu0
      %s4999 = scalar_lea.vmem %s5, 800
      %v5000 = vld [vmem:[%s4999] sm:$0xff]
      %v5001 = vld [vmem:[%s4999 + $0x8] sm:$0xff]
      %v5002 = vld [vmem:[%s4999 + $0x10] sm:$0xff]
      %v5003 = vld [vmem:[%s4999 + $0x18] sm:$0xff]
      %v5004 = vld [vmem:[%s4999 + $0x20] sm:$0xff]
      %v5005 = vld [vmem:[%s4999 + $0x28] sm:$0xff]
      %v5006 = vld [vmem:[%s4999 + $0x30] sm:$0xff]
      %v5007 = vld [vmem:[%s4999 + $0x38] sm:$0xff]
      %v5008 = vld [vmem:[%s4999 + $0x40] sm:$0xff]
      %v5009 = vld [vmem:[%s4999 + $0x48] sm:$0xff]
      %v5010 = vld [vmem:[%s4999 + $0x50] sm:$0xff]
      %v5011 = vld [vmem:[%s4999 + $0x58] sm:$0xff]
      %v5012 = vld [vmem:[%s4999 + $0x60] sm:$0xff]
      %v5013 = vld [vmem:[%s4999 + $0x68] sm:$0xff]
      %v5014 = vld [vmem:[%s4999 + $0x70] sm:$0xff]
      %v5015 = vld [vmem:[%s4999 + $0x78] sm:$0xff]
      %v5016 = vld [vmem:[%s4999 + $0x80] sm:$0xff]
      %v5017 = vld [vmem:[%s4999 + $0x88] sm:$0xff]
      %v5018 = vld [vmem:[%s4999 + $0x90] sm:$0xff]
      %v5019 = vld [vmem:[%s4999 + $0x98] sm:$0xff]
      %v5020 = vld [vmem:[%s4999 + $0xa0] sm:$0xff]
      %v5021 = vld [vmem:[%s4999 + $0xa8] sm:$0xff]
      %v5022 = vld [vmem:[%s4999 + $0xb0] sm:$0xff]
      %v5023 = vld [vmem:[%s4999 + $0xb8] sm:$0xff]
      %v5024 = vld [vmem:[%s4999 + $0xc0] sm:$0xff]
      %v5025 = vld [vmem:[%s4999 + $0xc8] sm:$0xff]
      %v5026 = vld [vmem:[%s4999 + $0xd0] sm:$0xff]
      %v5027 = vld [vmem:[%s4999 + $0xd8] sm:$0xff]
      %v5028 = vld [vmem:[%s4999 + $0xe0] sm:$0xff]
      %v5029 = vld [vmem:[%s4999 + $0xe8] sm:$0xff]
      %v5030 = vld [vmem:[%s4999 + $0xf0] sm:$0xff]
      %v5031 = vld [vmem:[%s4999 + $0xf8] sm:$0xff]
      %v5032 = vld [vmem:[%s4999 + $0x100] sm:$0xff]
      %v5033 = vld [vmem:[%s4999 + $0x108] sm:$0xff]
      %v5034 = vld [vmem:[%s4999 + $0x110] sm:$0xff]
      %v5035 = vld [vmem:[%s4999 + $0x118] sm:$0xff]
      %v5036 = vld [vmem:[%s4999 + $0x120] sm:$0xff]
      %v5037 = vld [vmem:[%s4999 + $0x128] sm:$0xff]
      %v5038 = vld [vmem:[%s4999 + $0x130] sm:$0xff]
      %v5039 = vld [vmem:[%s4999 + $0x138] sm:$0xff]
      %v5040 = vld [vmem:[%s4999 + $0x140] sm:$0xff]
      %v5041 = vld [vmem:[%s4999 + $0x148] sm:$0xff]
      %v5042 = vld [vmem:[%s4999 + $0x150] sm:$0xff]
      %v5043 = vld [vmem:[%s4999 + $0x158] sm:$0xff]
      %v5044 = vld [vmem:[%s4999 + $0x160] sm:$0xff]
      %v5045 = vld [vmem:[%s4999 + $0x168] sm:$0xff]
      %v5046 = vld [vmem:[%s4999 + $0x170] sm:$0xff]
      %v5047 = vld [vmem:[%s4999 + $0x178] sm:$0xff]
      %v5048 = vld [vmem:[%s4999 + $0x180] sm:$0xff]
      %v5049 = vld [vmem:[%s4999 + $0x188] sm:$0xff]
      %v5052 = vrot.slane %v4194, 1
      %v5053 = vrot.slane %v4195, 1
      %v5105 = vunpack.c.l.b16 %v5000
      %v5106 = vunpack.c.h.b16 %v5000
      %v5107 = vunpack.c.l.b16 %v5001
      %v5108 = vunpack.c.h.b16 %v5001
      %v5109 = vunpack.c.l.b16 %v5002
      %v5110 = vunpack.c.h.b16 %v5002
      %v5111 = vunpack.c.l.b16 %v5003
      %v5112 = vunpack.c.h.b16 %v5003
      %v5113 = vunpack.c.l.b16 %v5004
      %v5114 = vunpack.c.h.b16 %v5004
      %v5115 = vunpack.c.l.b16 %v5005
      %v5116 = vunpack.c.h.b16 %v5005
      %v5117 = vunpack.c.l.b16 %v5006
      %v5118 = vunpack.c.h.b16 %v5006
      %v5119 = vunpack.c.l.b16 %v5007
      %v5120 = vunpack.c.h.b16 %v5007
      %v5121 = vunpack.c.l.b16 %v5008
      %v5122 = vunpack.c.h.b16 %v5008
      %v5123 = vunpack.c.l.b16 %v5009
      %v5124 = vunpack.c.h.b16 %v5009
      %v5125 = vunpack.c.l.b16 %v5010
      %v5126 = vunpack.c.h.b16 %v5010
      %v5127 = vunpack.c.l.b16 %v5011
      %v5128 = vunpack.c.h.b16 %v5011
      %v5129 = vunpack.c.l.b16 %v5012
      %v5130 = vunpack.c.h.b16 %v5012
      %v5131 = vunpack.c.l.b16 %v5013
      %v5132 = vunpack.c.h.b16 %v5013
      %v5133 = vunpack.c.l.b16 %v5014
      %v5134 = vunpack.c.h.b16 %v5014
      %v5135 = vunpack.c.l.b16 %v5015
      %v5136 = vunpack.c.h.b16 %v5015
      %v5137 = vunpack.c.l.b16 %v5016
      %v5138 = vunpack.c.h.b16 %v5016
      %v5139 = vunpack.c.l.b16 %v5017
      %v5140 = vunpack.c.h.b16 %v5017
      %v5141 = vunpack.c.l.b16 %v5018
      %v5142 = vunpack.c.h.b16 %v5018
      %v5143 = vunpack.c.l.b16 %v5019
      %v5144 = vunpack.c.h.b16 %v5019
      %v5145 = vunpack.c.l.b16 %v5020
      %v5146 = vunpack.c.h.b16 %v5020
      %v5147 = vunpack.c.l.b16 %v5021
      %v5148 = vunpack.c.h.b16 %v5021
      %v5149 = vunpack.c.l.b16 %v5022
      %v5150 = vunpack.c.h.b16 %v5022
      %v5151 = vunpack.c.l.b16 %v5023
      %v5152 = vunpack.c.h.b16 %v5023
      %v5153 = vunpack.c.l.b16 %v5024
      %v5154 = vunpack.c.h.b16 %v5024
      %v5155 = vunpack.c.l.b16 %v5025
      %v5156 = vunpack.c.h.b16 %v5025
      %v5157 = vunpack.c.l.b16 %v5026
      %v5158 = vunpack.c.h.b16 %v5026
      %v5159 = vunpack.c.l.b16 %v5027
      %v5160 = vunpack.c.h.b16 %v5027
      %v5161 = vunpack.c.l.b16 %v5028
      %v5162 = vunpack.c.h.b16 %v5028
      %v5163 = vunpack.c.l.b16 %v5029
      %v5164 = vunpack.c.h.b16 %v5029
      %v5165 = vunpack.c.l.b16 %v5030
      %v5166 = vunpack.c.h.b16 %v5030
      %v5167 = vunpack.c.l.b16 %v5031
      %v5168 = vunpack.c.h.b16 %v5031
      %v5169 = vunpack.c.l.b16 %v5032
      %v5170 = vunpack.c.h.b16 %v5032
      %v5171 = vunpack.c.l.b16 %v5033
      %v5172 = vunpack.c.h.b16 %v5033
      %v5173 = vunpack.c.l.b16 %v5034
      %v5174 = vunpack.c.h.b16 %v5034
      %v5175 = vunpack.c.l.b16 %v5035
      %v5176 = vunpack.c.h.b16 %v5035
      %v5177 = vunpack.c.l.b16 %v5036
      %v5178 = vunpack.c.h.b16 %v5036
      %v5179 = vunpack.c.l.b16 %v5037
      %v5180 = vunpack.c.h.b16 %v5037
      %v5181 = vunpack.c.l.b16 %v5038
      %v5182 = vunpack.c.h.b16 %v5038
      %v5183 = vunpack.c.l.b16 %v5039
      %v5184 = vunpack.c.h.b16 %v5039
      %v5185 = vunpack.c.l.b16 %v5040
      %v5186 = vunpack.c.h.b16 %v5040
      %v5187 = vunpack.c.l.b16 %v5041
      %v5188 = vunpack.c.h.b16 %v5041
      %v5189 = vunpack.c.l.b16 %v5042
      %v5190 = vunpack.c.h.b16 %v5042
      %v5191 = vunpack.c.l.b16 %v5043
      %v5192 = vunpack.c.h.b16 %v5043
      %v5193 = vunpack.c.l.b16 %v5044
      %v5194 = vunpack.c.h.b16 %v5044
      %v5195 = vunpack.c.l.b16 %v5045
      %v5196 = vunpack.c.h.b16 %v5045
      %v5197 = vunpack.c.l.b16 %v5046
      %v5198 = vunpack.c.h.b16 %v5046
      %v5199 = vunpack.c.l.b16 %v5047
      %v5200 = vunpack.c.h.b16 %v5047
      %v5201 = vunpack.c.l.b16 %v5048
      %v5202 = vunpack.c.h.b16 %v5048
      %v5203 = vunpack.c.l.b16 %v5049
      %v5204 = vunpack.c.h.b16 %v5049
      %v5205 = vpack.c.b16 %v5109, %v5105
      %v5206 = vpack.c.b16 %v5110, %v5106
      %v5207 = vpack.c.b16 %v5111, %v5107
      %v5208 = vpack.c.b16 %v5112, %v5108
      %v5209 = vpack.c.b16 %v5117, %v5113
      %v5210 = vpack.c.b16 %v5118, %v5114
      %v5211 = vpack.c.b16 %v5119, %v5115
      %v5212 = vpack.c.b16 %v5120, %v5116
      %v5213 = vpack.c.b16 %v5125, %v5121
      %v5214 = vpack.c.b16 %v5126, %v5122
      %v5215 = vpack.c.b16 %v5127, %v5123
      %v5216 = vpack.c.b16 %v5128, %v5124
      %v5217 = vpack.c.b16 %v5133, %v5129
      %v5218 = vpack.c.b16 %v5134, %v5130
      %v5219 = vpack.c.b16 %v5135, %v5131
      %v5220 = vpack.c.b16 %v5136, %v5132
      %v5221 = vpack.c.b16 %v5141, %v5137
      %v5222 = vpack.c.b16 %v5142, %v5138
      %v5223 = vpack.c.b16 %v5143, %v5139
      %v5224 = vpack.c.b16 %v5144, %v5140
      %v5225 = vpack.c.b16 %v5149, %v5145
      %v5226 = vpack.c.b16 %v5150, %v5146
      %v5227 = vpack.c.b16 %v5151, %v5147
      %v5228 = vpack.c.b16 %v5152, %v5148
      %v5229 = vpack.c.b16 %v5157, %v5153
      %v5230 = vpack.c.b16 %v5158, %v5154
      %v5231 = vpack.c.b16 %v5159, %v5155
      %v5232 = vpack.c.b16 %v5160, %v5156
      %v5233 = vpack.c.b16 %v5165, %v5161
      %v5234 = vpack.c.b16 %v5166, %v5162
      %v5235 = vpack.c.b16 %v5167, %v5163
      %v5236 = vpack.c.b16 %v5168, %v5164
      %v5237 = vpack.c.b16 %v5173, %v5169
      %v5238 = vpack.c.b16 %v5174, %v5170
      %v5239 = vpack.c.b16 %v5175, %v5171
      %v5240 = vpack.c.b16 %v5176, %v5172
      %v5241 = vpack.c.b16 %v5181, %v5177
      %v5242 = vpack.c.b16 %v5182, %v5178
      %v5243 = vpack.c.b16 %v5183, %v5179
      %v5244 = vpack.c.b16 %v5184, %v5180
      %v5245 = vpack.c.b16 %v5189, %v5185
      %v5246 = vpack.c.b16 %v5190, %v5186
      %v5247 = vpack.c.b16 %v5191, %v5187
      %v5248 = vpack.c.b16 %v5192, %v5188
      %v5249 = vpack.c.b16 %v5197, %v5193
      %v5250 = vpack.c.b16 %v5198, %v5194
      %v5251 = vpack.c.b16 %v5199, %v5195
      %v5252 = vpack.c.b16 %v5200, %v5196
      %v5253 = vpack.c.b16 %v5201, %v5201
      %v5254 = vpack.c.b16 %v5202, %v5202
      %v5255 = vpack.c.b16 %v5203, %v5203
      %v5256 = vpack.c.b16 %v5204, %v5204
      %v5306 = vsel %vm4554, %v5053, 0
      %v5309 = vsel %vm4558, %v5253, 0
      %v5312 = vsel %vm4558, %v5254, 0
      %v5315 = vsel %vm4558, %v5255, 0
      %v5318 = vsel %vm4558, %v5256, 0
      %5320 = vmatprep.subr.bf16.mxu0 %v5206
      %5321 = vmatpush1.bf16.msra.mxu0 %v5205
      %5322 = vmatprep.subr.bf16.mxu0 %v5210
      %5323 = vmatpush1.bf16.msra.mxu0 %v5209
      %5324 = vmatprep.subr.bf16.mxu0 %v5214
      %5325 = vmatpush1.bf16.msra.mxu0 %v5213
      %5326 = vmatprep.subr.bf16.mxu0 %v5218
      %5327 = vmatpush1.bf16.msra.mxu0 %v5217
      %5328 = vmatprep.subr.bf16.mxu0 %v5222
      %5329 = vmatpush1.bf16.msra.mxu0 %v5221
      %5330 = vmatprep.subr.bf16.mxu0 %v5226
      %5331 = vmatpush1.bf16.msra.mxu0 %v5225
      %5332 = vmatprep.subr.bf16.mxu0 %v5230
      %5333 = vmatpush1.bf16.msra.mxu0 %v5229
      %5334 = vmatprep.subr.bf16.mxu0 %v5234
      %5335 = vmatpush1.bf16.msra.mxu0 %v5233
      %5336 = vmatprep.subr.bf16.mxu0 %v5238
      %5337 = vmatpush1.bf16.msra.mxu0 %v5237
      %5338 = vmatprep.subr.bf16.mxu0 %v5242
      %5339 = vmatpush1.bf16.msra.mxu0 %v5241
      %5340 = vmatprep.subr.bf16.mxu0 %v5246
      %5341 = vmatpush1.bf16.msra.mxu0 %v5245
      %5342 = vmatprep.subr.bf16.mxu0 %v5250
      %5343 = vmatpush1.bf16.msra.mxu0 %v5249
      %5344 = vmatprep.subr.bf16.mxu0 %v5312
      %5345 = vmatpush1.bf16.msra.mxu0 %v5309
      %5346 = vmatprep.subr.bf16.mxu0 0
      %5347 = vmatpush1.bf16.msra.mxu0 0
      %5348 = vmatprep.subr.bf16.mxu0 0
      %5349 = vmatpush1.bf16.msra.mxu0 0
      %5350 = vmatprep.subr.bf16.mxu0 0
      %5351 = vmatpush1.bf16.msra.mxu0 0
      %5352 = vmatprep.mubr.bf16.mxu0 %v5306
      %5353 = vmatmul.mubr.bf16.gmra.mrb[0].mxu0 %v5052
      %v5354 = vpop.f32.mrb[0].mxu0
      %v5355 = vadd.f32 0.0, %v5354
      %v5356 = vpop.f32.mrb[0].mxu0
      %v5357 = vadd.f32 0.0, %v5356
      %v5358 = vpop.f32.mrb[0].mxu0
      %v5359 = vpop.f32.mrb[0].mxu0
      %5360 = vdwg.mxu0
      %5361 = vmatprep.subr.bf16.mxu0 %v5208
      %5362 = vmatpush1.bf16.msra.mxu0 %v5207
      %5363 = vmatprep.subr.bf16.mxu0 %v5212
      %5364 = vmatpush1.bf16.msra.mxu0 %v5211
      %5365 = vmatprep.subr.bf16.mxu0 %v5216
      %5366 = vmatpush1.bf16.msra.mxu0 %v5215
      %5367 = vmatprep.subr.bf16.mxu0 %v5220
      %5368 = vmatpush1.bf16.msra.mxu0 %v5219
      %5369 = vmatprep.subr.bf16.mxu0 %v5224
      %5370 = vmatpush1.bf16.msra.mxu0 %v5223
      %5371 = vmatprep.subr.bf16.mxu0 %v5228
      %5372 = vmatpush1.bf16.msra.mxu0 %v5227
      %5373 = vmatprep.subr.bf16.mxu0 %v5232
      %5374 = vmatpush1.bf16.msra.mxu0 %v5231
      %5375 = vmatprep.subr.bf16.mxu0 %v5236
      %5376 = vmatpush1.bf16.msra.mxu0 %v5235
      %5377 = vmatprep.subr.bf16.mxu0 %v5240
      %5378 = vmatpush1.bf16.msra.mxu0 %v5239
      %5379 = vmatprep.subr.bf16.mxu0 %v5244
      %5380 = vmatpush1.bf16.msra.mxu0 %v5243
      %5381 = vmatprep.subr.bf16.mxu0 %v5248
      %5382 = vmatpush1.bf16.msra.mxu0 %v5247
      %5383 = vmatprep.subr.bf16.mxu0 %v5252
      %5384 = vmatpush1.bf16.msra.mxu0 %v5251
      %5385 = vmatprep.subr.bf16.mxu0 %v5318
      %5386 = vmatpush1.bf16.msra.mxu0 %v5315
      %5387 = vmatprep.subr.bf16.mxu0 0
      %5388 = vmatpush1.bf16.msra.mxu0 0
      %5389 = vmatprep.subr.bf16.mxu0 0
      %5390 = vmatpush1.bf16.msra.mxu0 0
      %5391 = vmatprep.subr.bf16.mxu0 0
      %5392 = vmatpush1.bf16.msra.mxu0 0
      %5393 = vmatprep.mubr.bf16.mxu0 %v5306
      %5394 = vmatmul.mubr.bf16.gmra.mrb[0].mxu0 %v5052
      %v5395 = vpop.f32.mrb[0].mxu0
      %v5396 = vadd.f32 0.0, %v5395
      %v5397 = vpop.f32.mrb[0].mxu0
      %v5398 = vadd.f32 0.0, %v5397
      %v5399 = vpop.f32.mrb[0].mxu0
      %v5400 = vpop.f32.mrb[0].mxu0
      %5401 = vdwg.mxu0
      %v5402 = vadd.f32 %v4952, %v5355
      %v5403 = vadd.f32 %v4954, %v5357
      %v5404 = vadd.f32 %v4993, %v5396
      %v5405 = vadd.f32 %v4995, %v5398
      %s5406 = scalar_lea.vmem %s5, 1200
      %v5407 = vld [vmem:[%s5406] sm:$0xff]
      %v5408 = vld [vmem:[%s5406 + $0x8] sm:$0xff]
      %v5409 = vld [vmem:[%s5406 + $0x10] sm:$0xff]
      %v5410 = vld [vmem:[%s5406 + $0x18] sm:$0xff]
      %v5411 = vld [vmem:[%s5406 + $0x20] sm:$0xff]
      %v5412 = vld [vmem:[%s5406 + $0x28] sm:$0xff]
      %v5413 = vld [vmem:[%s5406 + $0x30] sm:$0xff]
      %v5414 = vld [vmem:[%s5406 + $0x38] sm:$0xff]
      %v5415 = vld [vmem:[%s5406 + $0x40] sm:$0xff]
      %v5416 = vld [vmem:[%s5406 + $0x48] sm:$0xff]
      %v5417 = vld [vmem:[%s5406 + $0x50] sm:$0xff]
      %v5418 = vld [vmem:[%s5406 + $0x58] sm:$0xff]
      %v5419 = vld [vmem:[%s5406 + $0x60] sm:$0xff]
      %v5420 = vld [vmem:[%s5406 + $0x68] sm:$0xff]
      %v5421 = vld [vmem:[%s5406 + $0x70] sm:$0xff]
      %v5422 = vld [vmem:[%s5406 + $0x78] sm:$0xff]
      %v5423 = vld [vmem:[%s5406 + $0x80] sm:$0xff]
      %v5424 = vld [vmem:[%s5406 + $0x88] sm:$0xff]
      %v5425 = vld [vmem:[%s5406 + $0x90] sm:$0xff]
      %v5426 = vld [vmem:[%s5406 + $0x98] sm:$0xff]
      %v5427 = vld [vmem:[%s5406 + $0xa0] sm:$0xff]
      %v5428 = vld [vmem:[%s5406 + $0xa8] sm:$0xff]
      %v5429 = vld [vmem:[%s5406 + $0xb0] sm:$0xff]
      %v5430 = vld [vmem:[%s5406 + $0xb8] sm:$0xff]
      %v5431 = vld [vmem:[%s5406 + $0xc0] sm:$0xff]
      %v5432 = vld [vmem:[%s5406 + $0xc8] sm:$0xff]
      %v5433 = vld [vmem:[%s5406 + $0xd0] sm:$0xff]
      %v5434 = vld [vmem:[%s5406 + $0xd8] sm:$0xff]
      %v5435 = vld [vmem:[%s5406 + $0xe0] sm:$0xff]
      %v5436 = vld [vmem:[%s5406 + $0xe8] sm:$0xff]
      %v5437 = vld [vmem:[%s5406 + $0xf0] sm:$0xff]
      %v5438 = vld [vmem:[%s5406 + $0xf8] sm:$0xff]
      %v5439 = vld [vmem:[%s5406 + $0x100] sm:$0xff]
      %v5440 = vld [vmem:[%s5406 + $0x108] sm:$0xff]
      %v5441 = vld [vmem:[%s5406 + $0x110] sm:$0xff]
      %v5442 = vld [vmem:[%s5406 + $0x118] sm:$0xff]
      %v5443 = vld [vmem:[%s5406 + $0x120] sm:$0xff]
      %v5444 = vld [vmem:[%s5406 + $0x128] sm:$0xff]
      %v5445 = vld [vmem:[%s5406 + $0x130] sm:$0xff]
      %v5446 = vld [vmem:[%s5406 + $0x138] sm:$0xff]
      %v5447 = vld [vmem:[%s5406 + $0x140] sm:$0xff]
      %v5448 = vld [vmem:[%s5406 + $0x148] sm:$0xff]
      %v5449 = vld [vmem:[%s5406 + $0x150] sm:$0xff]
      %v5450 = vld [vmem:[%s5406 + $0x158] sm:$0xff]
      %v5451 = vld [vmem:[%s5406 + $0x160] sm:$0xff]
      %v5452 = vld [vmem:[%s5406 + $0x168] sm:$0xff]
      %v5453 = vld [vmem:[%s5406 + $0x170] sm:$0xff]
      %v5454 = vld [vmem:[%s5406 + $0x178] sm:$0xff]
      %v5455 = vld [vmem:[%s5406 + $0x180] sm:$0xff]
      %v5456 = vld [vmem:[%s5406 + $0x188] sm:$0xff]
      %v5457 = vrot.slane %v4298, 1
      %v5458 = vrot.slane %v4301, 1
      %v5510 = vunpack.c.l.b16 %v5407
      %v5511 = vunpack.c.h.b16 %v5407
      %v5512 = vunpack.c.l.b16 %v5408
      %v5513 = vunpack.c.h.b16 %v5408
      %v5514 = vunpack.c.l.b16 %v5409
      %v5515 = vunpack.c.h.b16 %v5409
      %v5516 = vunpack.c.l.b16 %v5410
      %v5517 = vunpack.c.h.b16 %v5410
      %v5518 = vunpack.c.l.b16 %v5411
      %v5519 = vunpack.c.h.b16 %v5411
      %v5520 = vunpack.c.l.b16 %v5412
      %v5521 = vunpack.c.h.b16 %v5412
      %v5522 = vunpack.c.l.b16 %v5413
      %v5523 = vunpack.c.h.b16 %v5413
      %v5524 = vunpack.c.l.b16 %v5414
      %v5525 = vunpack.c.h.b16 %v5414
      %v5526 = vunpack.c.l.b16 %v5415
      %v5527 = vunpack.c.h.b16 %v5415
      %v5528 = vunpack.c.l.b16 %v5416
      %v5529 = vunpack.c.h.b16 %v5416
      %v5530 = vunpack.c.l.b16 %v5417
      %v5531 = vunpack.c.h.b16 %v5417
      %v5532 = vunpack.c.l.b16 %v5418
      %v5533 = vunpack.c.h.b16 %v5418
      %v5534 = vunpack.c.l.b16 %v5419
      %v5535 = vunpack.c.h.b16 %v5419
      %v5536 = vunpack.c.l.b16 %v5420
      %v5537 = vunpack.c.h.b16 %v5420
      %v5538 = vunpack.c.l.b16 %v5421
      %v5539 = vunpack.c.h.b16 %v5421
      %v5540 = vunpack.c.l.b16 %v5422
      %v5541 = vunpack.c.h.b16 %v5422
      %v5542 = vunpack.c.l.b16 %v5423
      %v5543 = vunpack.c.h.b16 %v5423
      %v5544 = vunpack.c.l.b16 %v5424
      %v5545 = vunpack.c.h.b16 %v5424
      %v5546 = vunpack.c.l.b16 %v5425
      %v5547 = vunpack.c.h.b16 %v5425
      %v5548 = vunpack.c.l.b16 %v5426
      %v5549 = vunpack.c.h.b16 %v5426
      %v5550 = vunpack.c.l.b16 %v5427
      %v5551 = vunpack.c.h.b16 %v5427
      %v5552 = vunpack.c.l.b16 %v5428
      %v5553 = vunpack.c.h.b16 %v5428
      %v5554 = vunpack.c.l.b16 %v5429
      %v5555 = vunpack.c.h.b16 %v5429
      %v5556 = vunpack.c.l.b16 %v5430
      %v5557 = vunpack.c.h.b16 %v5430
      %v5558 = vunpack.c.l.b16 %v5431
      %v5559 = vunpack.c.h.b16 %v5431
      %v5560 = vunpack.c.l.b16 %v5432
      %v5561 = vunpack.c.h.b16 %v5432
      %v5562 = vunpack.c.l.b16 %v5433
      %v5563 = vunpack.c.h.b16 %v5433
      %v5564 = vunpack.c.l.b16 %v5434
      %v5565 = vunpack.c.h.b16 %v5434
      %v5566 = vunpack.c.l.b16 %v5435
      %v5567 = vunpack.c.h.b16 %v5435
      %v5568 = vunpack.c.l.b16 %v5436
      %v5569 = vunpack.c.h.b16 %v5436
      %v5570 = vunpack.c.l.b16 %v5437
      %v5571 = vunpack.c.h.b16 %v5437
      %v5572 = vunpack.c.l.b16 %v5438
      %v5573 = vunpack.c.h.b16 %v5438
      %v5574 = vunpack.c.l.b16 %v5439
      %v5575 = vunpack.c.h.b16 %v5439
      %v5576 = vunpack.c.l.b16 %v5440
      %v5577 = vunpack.c.h.b16 %v5440
      %v5578 = vunpack.c.l.b16 %v5441
      %v5579 = vunpack.c.h.b16 %v5441
      %v5580 = vunpack.c.l.b16 %v5442
      %v5581 = vunpack.c.h.b16 %v5442
      %v5582 = vunpack.c.l.b16 %v5443
      %v5583 = vunpack.c.h.b16 %v5443
      %v5584 = vunpack.c.l.b16 %v5444
      %v5585 = vunpack.c.h.b16 %v5444
      %v5586 = vunpack.c.l.b16 %v5445
      %v5587 = vunpack.c.h.b16 %v5445
      %v5588 = vunpack.c.l.b16 %v5446
      %v5589 = vunpack.c.h.b16 %v5446
      %v5590 = vunpack.c.l.b16 %v5447
      %v5591 = vunpack.c.h.b16 %v5447
      %v5592 = vunpack.c.l.b16 %v5448
      %v5593 = vunpack.c.h.b16 %v5448
      %v5594 = vunpack.c.l.b16 %v5449
      %v5595 = vunpack.c.h.b16 %v5449
      %v5596 = vunpack.c.l.b16 %v5450
      %v5597 = vunpack.c.h.b16 %v5450
      %v5598 = vunpack.c.l.b16 %v5451
      %v5599 = vunpack.c.h.b16 %v5451
      %v5600 = vunpack.c.l.b16 %v5452
      %v5601 = vunpack.c.h.b16 %v5452
      %v5602 = vunpack.c.l.b16 %v5453
      %v5603 = vunpack.c.h.b16 %v5453
      %v5604 = vunpack.c.l.b16 %v5454
      %v5605 = vunpack.c.h.b16 %v5454
      %v5606 = vunpack.c.l.b16 %v5455
      %v5607 = vunpack.c.h.b16 %v5455
      %v5608 = vunpack.c.l.b16 %v5456
      %v5609 = vunpack.c.h.b16 %v5456
      %v5610 = vpack.c.b16 %v5514, %v5510
      %v5611 = vpack.c.b16 %v5515, %v5511
      %v5612 = vpack.c.b16 %v5516, %v5512
      %v5613 = vpack.c.b16 %v5517, %v5513
      %v5614 = vpack.c.b16 %v5522, %v5518
      %v5615 = vpack.c.b16 %v5523, %v5519
      %v5616 = vpack.c.b16 %v5524, %v5520
      %v5617 = vpack.c.b16 %v5525, %v5521
      %v5618 = vpack.c.b16 %v5530, %v5526
      %v5619 = vpack.c.b16 %v5531, %v5527
      %v5620 = vpack.c.b16 %v5532, %v5528
      %v5621 = vpack.c.b16 %v5533, %v5529
      %v5622 = vpack.c.b16 %v5538, %v5534
      %v5623 = vpack.c.b16 %v5539, %v5535
      %v5624 = vpack.c.b16 %v5540, %v5536
      %v5625 = vpack.c.b16 %v5541, %v5537
      %v5626 = vpack.c.b16 %v5546, %v5542
      %v5627 = vpack.c.b16 %v5547, %v5543
      %v5628 = vpack.c.b16 %v5548, %v5544
      %v5629 = vpack.c.b16 %v5549, %v5545
      %v5630 = vpack.c.b16 %v5554, %v5550
      %v5631 = vpack.c.b16 %v5555, %v5551
      %v5632 = vpack.c.b16 %v5556, %v5552
      %v5633 = vpack.c.b16 %v5557, %v5553
      %v5634 = vpack.c.b16 %v5562, %v5558
      %v5635 = vpack.c.b16 %v5563, %v5559
      %v5636 = vpack.c.b16 %v5564, %v5560
      %v5637 = vpack.c.b16 %v5565, %v5561
      %v5638 = vpack.c.b16 %v5570, %v5566
      %v5639 = vpack.c.b16 %v5571, %v5567
      %v5640 = vpack.c.b16 %v5572, %v5568
      %v5641 = vpack.c.b16 %v5573, %v5569
      %v5642 = vpack.c.b16 %v5578, %v5574
      %v5643 = vpack.c.b16 %v5579, %v5575
      %v5644 = vpack.c.b16 %v5580, %v5576
      %v5645 = vpack.c.b16 %v5581, %v5577
      %v5646 = vpack.c.b16 %v5586, %v5582
      %v5647 = vpack.c.b16 %v5587, %v5583
      %v5648 = vpack.c.b16 %v5588, %v5584
      %v5649 = vpack.c.b16 %v5589, %v5585
      %v5650 = vpack.c.b16 %v5594, %v5590
      %v5651 = vpack.c.b16 %v5595, %v5591
      %v5652 = vpack.c.b16 %v5596, %v5592
      %v5653 = vpack.c.b16 %v5597, %v5593
      %v5654 = vpack.c.b16 %v5602, %v5598
      %v5655 = vpack.c.b16 %v5603, %v5599
      %v5656 = vpack.c.b16 %v5604, %v5600
      %v5657 = vpack.c.b16 %v5605, %v5601
      %v5658 = vpack.c.b16 %v5606, %v5606
      %v5659 = vpack.c.b16 %v5607, %v5607
      %v5660 = vpack.c.b16 %v5608, %v5608
      %v5661 = vpack.c.b16 %v5609, %v5609
      %v5711 = vsel %vm4554, %v5458, 0
      %v5714 = vsel %vm4558, %v5658, 0
      %v5717 = vsel %vm4558, %v5659, 0
      %v5720 = vsel %vm4558, %v5660, 0
      %v5723 = vsel %vm4558, %v5661, 0
      %5725 = vmatprep.subr.bf16.mxu0 %v5611
      %5726 = vmatpush1.bf16.msra.mxu0 %v5610
      %5727 = vmatprep.subr.bf16.mxu0 %v5615
      %5728 = vmatpush1.bf16.msra.mxu0 %v5614
      %5729 = vmatprep.subr.bf16.mxu0 %v5619
      %5730 = vmatpush1.bf16.msra.mxu0 %v5618
      %5731 = vmatprep.subr.bf16.mxu0 %v5623
      %5732 = vmatpush1.bf16.msra.mxu0 %v5622
      %5733 = vmatprep.subr.bf16.mxu0 %v5627
      %5734 = vmatpush1.bf16.msra.mxu0 %v5626
      %5735 = vmatprep.subr.bf16.mxu0 %v5631
      %5736 = vmatpush1.bf16.msra.mxu0 %v5630
      %5737 = vmatprep.subr.bf16.mxu0 %v5635
      %5738 = vmatpush1.bf16.msra.mxu0 %v5634
      %5739 = vmatprep.subr.bf16.mxu0 %v5639
      %5740 = vmatpush1.bf16.msra.mxu0 %v5638
      %5741 = vmatprep.subr.bf16.mxu0 %v5643
      %5742 = vmatpush1.bf16.msra.mxu0 %v5642
      %5743 = vmatprep.subr.bf16.mxu0 %v5647
      %5744 = vmatpush1.bf16.msra.mxu0 %v5646
      %5745 = vmatprep.subr.bf16.mxu0 %v5651
      %5746 = vmatpush1.bf16.msra.mxu0 %v5650
      %5747 = vmatprep.subr.bf16.mxu0 %v5655
      %5748 = vmatpush1.bf16.msra.mxu0 %v5654
      %5749 = vmatprep.subr.bf16.mxu0 %v5717
      %5750 = vmatpush1.bf16.msra.mxu0 %v5714
      %5751 = vmatprep.subr.bf16.mxu0 0
      %5752 = vmatpush1.bf16.msra.mxu0 0
      %5753 = vmatprep.subr.bf16.mxu0 0
      %5754 = vmatpush1.bf16.msra.mxu0 0
      %5755 = vmatprep.subr.bf16.mxu0 0
      %5756 = vmatpush1.bf16.msra.mxu0 0
      %5757 = vmatprep.mubr.bf16.mxu0 %v5711
      %5758 = vmatmul.mubr.bf16.gmra.mrb[0].mxu0 %v5457
      %v5759 = vpop.f32.mrb[0].mxu0
      %v5760 = vadd.f32 0.0, %v5759
      %v5761 = vpop.f32.mrb[0].mxu0
      %v5762 = vadd.f32 0.0, %v5761
      %v5763 = vpop.f32.mrb[0].mxu0
      %v5764 = vpop.f32.mrb[0].mxu0
      %5765 = vdwg.mxu0
      %5766 = vmatprep.subr.bf16.mxu0 %v5613
      %5767 = vmatpush1.bf16.msra.mxu0 %v5612
      %5768 = vmatprep.subr.bf16.mxu0 %v5617
      %5769 = vmatpush1.bf16.msra.mxu0 %v5616
      %5770 = vmatprep.subr.bf16.mxu0 %v5621
      %5771 = vmatpush1.bf16.msra.mxu0 %v5620
      %5772 = vmatprep.subr.bf16.mxu0 %v5625
      %5773 = vmatpush1.bf16.msra.mxu0 %v5624
      %5774 = vmatprep.subr.bf16.mxu0 %v5629
      %5775 = vmatpush1.bf16.msra.mxu0 %v5628
      %5776 = vmatprep.subr.bf16.mxu0 %v5633
      %5777 = vmatpush1.bf16.msra.mxu0 %v5632
      %5778 = vmatprep.subr.bf16.mxu0 %v5637
      %5779 = vmatpush1.bf16.msra.mxu0 %v5636
      %5780 = vmatprep.subr.bf16.mxu0 %v5641
      %5781 = vmatpush1.bf16.msra.mxu0 %v5640
      %5782 = vmatprep.subr.bf16.mxu0 %v5645
      %5783 = vmatpush1.bf16.msra.mxu0 %v5644
      %5784 = vmatprep.subr.bf16.mxu0 %v5649
      %5785 = vmatpush1.bf16.msra.mxu0 %v5648
      %5786 = vmatprep.subr.bf16.mxu0 %v5653
      %5787 = vmatpush1.bf16.msra.mxu0 %v5652
      %5788 = vmatprep.subr.bf16.mxu0 %v5657
      %5789 = vmatpush1.bf16.msra.mxu0 %v5656
      %5790 = vmatprep.subr.bf16.mxu0 %v5723
      %5791 = vmatpush1.bf16.msra.mxu0 %v5720
      %5792 = vmatprep.subr.bf16.mxu0 0
      %5793 = vmatpush1.bf16.msra.mxu0 0
      %5794 = vmatprep.subr.bf16.mxu0 0
      %5795 = vmatpush1.bf16.msra.mxu0 0
      %5796 = vmatprep.subr.bf16.mxu0 0
      %5797 = vmatpush1.bf16.msra.mxu0 0
      %5798 = vmatprep.mubr.bf16.mxu0 %v5711
      %5799 = vmatmul.mubr.bf16.gmra.mrb[0].mxu0 %v5457
      %v5800 = vpop.f32.mrb[0].mxu0
      %v5801 = vadd.f32 0.0, %v5800
      %v5802 = vpop.f32.mrb[0].mxu0
      %v5803 = vadd.f32 0.0, %v5802
      %v5804 = vpop.f32.mrb[0].mxu0
      %v5805 = vpop.f32.mrb[0].mxu0
      %5806 = vdwg.mxu0
      %v5807 = vadd.f32 %v5402, %v5760
      %v5808 = vadd.f32 %v5403, %v5762
      %v5809 = vadd.f32 %v5404, %v5801
      %v5810 = vadd.f32 %v5405, %v5803
      %v5811 = vld [vmem:[%s6] sm:$0xf]
      %v5813 = vlaneseq
      %v5814 = vshrl.u32 %v5813, 7
      %v5815 = vsub.s32 0, %v5814
      %v5816 = vrot.slane %v5811, %v5815
      %v5817 = vlaneseq
      %v5818 = vshrl.u32 %v5817, 7
      %v5819 = vsub.s32 1, %v5818
      %v5820 = vrot.slane %v5811, %v5819
      %v5821 = vlaneseq
      %v5822 = vshrl.u32 %v5821, 7
      %v5823 = vsub.s32 2, %v5822
      %v5824 = vrot.slane %v5811, %v5823
      %v5825 = vlaneseq
      %v5826 = vshrl.u32 %v5825, 7
      %v5827 = vsub.s32 3, %v5826
      %v5828 = vrot.slane %v5811, %v5827
      %v5833 = vadd.f32 %v5807, %v5816
      %v5834 = vadd.f32 %v5808, %v5820
      %v5835 = vadd.f32 %v5809, %v5824
      %v5836 = vadd.f32 %v5810, %v5828
      %v5837 = vmax.f32 %v5833, 0.0
      %v5838 = vmax.f32 %v5834, 0.0
      %v5839 = vmax.f32 %v5835, 0.0
      %v5840 = vmax.f32 %v5836, 0.0
      %v5845 = vcombine.low %v5837, %v5838
      %v5846 = vcombine.low %v5839, %v5840
      %v5848 = vunpack.c.l.s4 1966171168
      %v5849 = vunpack.c.0.s8 %v5848
      %v5850 = vlaneseq
      %v5851 = vshrl.u32 %v5850, 7
      %v5852 = vsub.s32 %v5849, %v5851
      %v5853 = vrot.slane %v5845, %v5852
      %v5855 = vunpack.c.l.s4 1966171168
      %v5856 = vunpack.c.0.s8 %v5855
      %v5857 = vlaneseq
      %v5858 = vshrl.u32 %v5857, 7
      %v5859 = vsub.s32 %v5856, %v5858
      %v5860 = vrot.slane %v5846, %v5859
      %v5861 = vcombine.low %v5853, %v5860
      %v5863 = vunpack.c.l.s4 1966171168
      %v5864 = vunpack.c.0.s8 %v5863
      %v5865 = vlaneseq
      %v5866 = vshrl.u32 %v5865, 7
      %v5867 = vsub.s32 %v5864, %v5866
      %v5868 = vrot.slane %v5861, %v5867
      %v5870 = vlaneseq
      %vm5871 = vcmp.ge.s32.totalorder %v5870, 0
      %vm5872 = vcmp.lt.s32.totalorder %v5870, 500
      %vm5873 = vmand %vm5871, %vm5872
      %5874 = vst.msk [vmem:[%s330] sm:$0xf] %vm5873, %v5868
      %p5875 = scmp.lt.s32.totalorder %s20, 1
      %s5876 = scalar_select %p5875, %s20, 1
      %s5877 = smul.addr %s5876, 4
      %s5878 = scalar_lea.vmem %s9, %s5877
      // Predicated region
      $region57: #{vision_forward.1} parent=55 // pred_check
        %p5879 = pneg %p232
      $region58: #{vision_forward.1} parent=55 // pred_check_branch
        %5881 = sbr.rel (%p5879) target = $region60
      $region59: #{vision_forward.1} parent=55 // pred_region
        _
      $region60: #{vision_forward.1} parent=55 // pred_fallthru
        _
    $region56: #{vision_forward.1} parent=5 // pred_fallthru
      _
    %p5882 = scmp.le.s32.totalorder 2, %s15
    // Predicated region
    $region61: #{vision_forward.1} parent=5 // pred_check
      %p5883 = pneg %p5882
    $region62: #{vision_forward.1} parent=5 // pred_check_branch
      %5885 = sbr.rel (%p5883) target = $region64
    $region63: #{vision_forward.1} parent=5 // pred_region
      %s5886 = ssub.s32 %s15, 2
      // Predicated region
      $region65: #{vision_forward.1} parent=63 // pred_check
        %p5887 = pneg %p238
      $region66: #{vision_forward.1} parent=63 // pred_check_branch
        %5889 = sbr.rel (%p5887) target = $region68
      $region67: #{vision_forward.1} parent=63 // pred_region
        %p5890 = scmp.lt.s32.totalorder %s21, 1
        %s5891 = scalar_select %p5890, %s21, 1
        %s5892 = smul.addr %s5891, 4
        %s5893 = scalar_lea.vmem %s9, %s5892
      $region68: #{vision_forward.1} parent=63 // pred_fallthru
        _
    $region64: #{vision_forward.1} parent=5 // pred_fallthru
      _
  $region6: #{vision_forward.1} parent=0 // loop_footer
    %s19 = sadd.s32 1, %s15
  $region7: #{vision_forward.1} parent=0 // loop_footer_branch
    %14 = sbr.rel target = $region3
  $region8: #{vision_forward.1} parent=0 // loop_exit
    _

</llo_original>
